<compile_context>
chip_gen: v7x
topology: tpu7x:2x2x1
jax: 0.10.0
libtpu: 0.0.40
codegen_flags: <defaults>
</compile_context>

<pallas_src>
import functools

import jax
import jax.numpy as jnp
from jax.experimental import pallas as pl
from jax.experimental.pallas import tpu as pltpu


def _round_up(x, m):
    return ((x + m - 1) // m) * m


# ----------------------------------------------------------------------------
# Fused MBConv Pallas kernel (one grid step = one batch image)
# ----------------------------------------------------------------------------
def _mbconv_kernel(*refs, k, stride, pad, has_exp, has_skip):
    s2 = stride * stride
    x_refs = refs[:s2]                        # stride-phase padded inputs
    m_refs = refs[s2:2 * s2]                  # per-phase halo masks (1=valid)
    (exp_w_ref, exp_s_ref, exp_b_ref,
     dw_w_ref, dw_s_ref, dw_b_ref,
     se_w1_ref, se_b1_ref, se_w2_ref, se_b2_ref,
     proj_w_ref, proj_s_ref, proj_b_ref,
     o_ref) = refs[2 * s2:2 * s2 + 14]
    e_scr = refs[2 * s2 + 14:]                # s2 VMEM scratches (hq, wq, c_exp)

    _, hq, wq, c_in = x_refs[0].shape
    c_exp = e_scr[0].shape[-1]
    _, hout, wout, c_out = o_ref.shape

    # ---- expansion 1x1 conv + BN + Swish, per stride phase, into VMEM -------
    for ph in range(s2):
        xph = x_refs[ph][0].astype(jnp.float32)               # (hq, wq, c_in)
        if has_exp:
            e = jnp.dot(xph.reshape(hq * wq, c_in), exp_w_ref[...],
                        preferred_element_type=jnp.float32)
            e = e * exp_s_ref[...] + exp_b_ref[...]
            e = e * jax.nn.sigmoid(e)                          # Swish (f32)
            e = e.reshape(hq, wq, c_exp)
        else:
            e = xph
        # Zero the conv halo / alignment padding (BN bias + Swish would
        # otherwise make the zero padding non-zero).
        e_scr[ph][...] = e * m_refs[ph][...]

    # ---- depthwise conv (stride folded via phases) + BN + Swish -------------
    dw = dw_w_ref[...]                                         # (k, k, c_exp)
    acc = jnp.zeros((hout, wout, c_exp), jnp.float32)
    for i in range(k):
        for j in range(k):
            ph = (i % stride) * stride + (j % stride)
            xs = e_scr[ph][pl.ds(i // stride, hout),
                           pl.ds(j // stride, wout), :]
            acc = acc + xs * dw[i, j]
    y = acc * dw_s_ref[...] + dw_b_ref[...]
    y = y * jax.nn.sigmoid(y)                                  # (hout, wout, c_exp)

    y2 = y.reshape(hout * wout, c_exp)

    # ---- Squeeze-and-Excitation: pool, FC, Swish, FC, Sigmoid, gate ---------
    avg = jnp.sum(y2, axis=0, keepdims=True) * (1.0 / float(hout * wout))
    se = jnp.dot(avg, se_w1_ref[...], preferred_element_type=jnp.float32)
    se = se + se_b1_ref[...]
    se = se * jax.nn.sigmoid(se)
    se = jnp.dot(se, se_w2_ref[...], preferred_element_type=jnp.float32)
    se = se + se_b2_ref[...]
    gate = jax.nn.sigmoid(se)                                  # (1, c_exp)
    y2 = y2 * gate

    # ---- 1x1 projection + BN (+ residual) -----------------------------------
    p = jnp.dot(y2, proj_w_ref[...], preferred_element_type=jnp.float32)
    p = p * proj_s_ref[...] + proj_b_ref[...]                  # (hout*wout, c_out)
    if has_skip:
        # stride == 1 and c_in == c_out here; residual = interior of the
        # (single-phase) padded input.
        res = x_refs[0][0, pl.ds(pad, hout), pl.ds(pad, wout), :]
        p = p + res.astype(jnp.float32).reshape(hout * wout, c_out)
    o_ref[0] = p.reshape(hout, wout, c_out).astype(o_ref.dtype)


# ----------------------------------------------------------------------------
# Wrapper: one pallas_call per MBConv block
# ----------------------------------------------------------------------------
def mbconv_forward(x_nhwc, p, *, kernel, stride, has_exp, has_skip):
    n, h, w, c_in = x_nhwc.shape
    pad = (kernel - 1) // 2
    hout = (h + 2 * pad - kernel) // stride + 1
    wout = (w + 2 * pad - kernel) // stride + 1
    c_exp = p["dw_w"].shape[-1]
    c_se = p["se_w1"].shape[1]
    c_out = p["proj_w"].shape[1]
    # In-kernel (H,W)->(H*W) reshapes need the minor merged dim 8-aligned.
    assert wout % 8 == 0, "output width must be a multiple of 8"

    hp, wp = h + 2 * pad, w + 2 * pad
    hp_al = _round_up(hp, stride)            # equal-sized row phases
    wp_al = _round_up(wp, 8 * stride)        # phase width is a multiple of 8
    hq, wq = hp_al // stride, wp_al // stride
    s2 = stride * stride

    # Pad only the small (c_in-channel) input; the expanded tensor stays in VMEM.
    xp = jnp.pad(x_nhwc, ((0, 0), (pad, pad + hp_al - hp),
                          (pad, pad + wp_al - wp), (0, 0)))

    rows = jnp.arange(hp_al)
    cols = jnp.arange(wp_al)
    valid = ((rows[:, None] >= pad) & (rows[:, None] < pad + h) &
             (cols[None, :] >= pad) & (cols[None, :] < pad + w))
    mask = valid.astype(jnp.float32)                           # (hp_al, wp_al)

    x_phases, m_phases = [], []
    for a in range(stride):
        for b in range(stride):
            x_phases.append(xp[:, a::stride, b::stride, :])    # (n, hq, wq, c_in)
            m_phases.append(mask[a::stride, b::stride][:, :, None])

    if has_exp:
        exp_w = p["exp_w"]
        exp_s = p["exp_scale"].reshape(1, c_exp)
        exp_b = p["exp_bias"].reshape(1, c_exp)
    else:
        # Unused inside the kernel when has_exp=False; dummies keep the
        # argument list uniform.
        exp_w = jnp.zeros((c_in, c_exp), x_nhwc.dtype)
        exp_s = jnp.zeros((1, c_exp), jnp.float32)
        exp_b = jnp.zeros((1, c_exp), jnp.float32)

    args = (x_phases + m_phases + [
        exp_w, exp_s, exp_b,
        p["dw_w"], p["dw_scale"].reshape(1, c_exp), p["dw_bias"].reshape(1, c_exp),
        p["se_w1"], p["se_b1"].reshape(1, c_se),
        p["se_w2"], p["se_b2"].reshape(1, c_exp),
        p["proj_w"], p["proj_scale"].reshape(1, c_out),
        p["proj_bias"].reshape(1, c_out),
    ])

    in_specs = (
        [pl.BlockSpec((1, hq, wq, c_in), lambda b: (b, 0, 0, 0))
         for _ in range(s2)] +
        [pl.BlockSpec((hq, wq, 1), lambda b: (0, 0, 0)) for _ in range(s2)] +
        [pl.BlockSpec((c_in, c_exp), lambda b: (0, 0)),
         pl.BlockSpec((1, c_exp), lambda b: (0, 0)),
         pl.BlockSpec((1, c_exp), lambda b: (0, 0)),
         pl.BlockSpec((kernel, kernel, c_exp), lambda b: (0, 0, 0)),
         pl.BlockSpec((1, c_exp), lambda b: (0, 0)),
         pl.BlockSpec((1, c_exp), lambda b: (0, 0)),
         pl.BlockSpec((c_exp, c_se), lambda b: (0, 0)),
         pl.BlockSpec((1, c_se), lambda b: (0, 0)),
         pl.BlockSpec((c_se, c_exp), lambda b: (0, 0)),
         pl.BlockSpec((1, c_exp), lambda b: (0, 0)),
         pl.BlockSpec((c_exp, c_out), lambda b: (0, 0)),
         pl.BlockSpec((1, c_out), lambda b: (0, 0)),
         pl.BlockSpec((1, c_out), lambda b: (0, 0))])

    kernel_fn = functools.partial(_mbconv_kernel, k=kernel, stride=stride,
                                  pad=pad, has_exp=has_exp, has_skip=has_skip)

    return pl.pallas_call(
        kernel_fn,
        out_shape=jax.ShapeDtypeStruct((n, hout, wout, c_out), x_nhwc.dtype),
        grid=(n,),
        in_specs=in_specs,
        out_specs=pl.BlockSpec((1, hout, wout, c_out), lambda b: (b, 0, 0, 0)),
        scratch_shapes=[pltpu.VMEM((hq, wq, c_exp), jnp.float32)
                        for _ in range(s2)],
        compiler_params=pltpu.CompilerParams(
            dimension_semantics=("parallel",)),
    )(*args)


def effstage_forward(x_nchw, blocks):
    x = jnp.transpose(x_nchw, (0, 2, 3, 1))   # NCHW -> NHWC
    for p, kernel, stride, has_exp, has_skip in blocks:
        x = mbconv_forward(x, p, kernel=kernel, stride=stride,
                           has_exp=has_exp, has_skip=has_skip)
    return jnp.transpose(x, (0, 3, 1, 2))     # NHWC -> NCHW


# ----------------------------------------------------------------------------
# Deterministic parameter init (synthetic, BN folded to inference affine)
# ----------------------------------------------------------------------------
def _bn_affine(key, c, eps=1e-5):
    k1, k2, k3, k4 = jax.random.split(key, 4)
    gamma = jax.random.uniform(k1, (c,), minval=0.5, maxval=1.5)
    beta = 0.1 * jax.random.normal(k2, (c,))
    mean = 0.1 * jax.random.normal(k3, (c,))
    var = jax.random.uniform(k4, (c,), minval=0.5, maxval=1.5)
    scale = gamma / jnp.sqrt(var + eps)
    bias = beta - mean * scale
    return scale.astype(jnp.float32), bias.astype(jnp.float32)


def init_mbconv_params(key, w_in, exp_r, kernel, se_r, w_out):
    w_exp = int(w_in * exp_r)
    w_se = int(w_in * se_r)
    has_exp = w_exp != w_in
    ks = jax.random.split(key, 10)
    p = {}
    if has_exp:
        p["exp_w"] = 0.1 * jax.random.normal(ks[0], (w_in, w_exp), jnp.float32)
        p["exp_scale"], p["exp_bias"] = _bn_affine(ks[1], w_exp)
    p["dw_w"] = 0.1 * jax.random.normal(ks[2], (kernel, kernel, w_exp), jnp.float32)
    p["dw_scale"], p["dw_bias"] = _bn_affine(ks[3], w_exp)
    p["se_w1"] = 0.1 * jax.random.normal(ks[4], (w_exp, w_se), jnp.float32)
    p["se_b1"] = 0.1 * jax.random.normal(ks[5], (w_se,), jnp.float32)
    p["se_w2"] = 0.1 * jax.random.normal(ks[6], (w_se, w_exp), jnp.float32)
    p["se_b2"] = 0.1 * jax.random.normal(ks[7], (w_exp,), jnp.float32)
    p["proj_w"] = 0.1 * jax.random.normal(ks[8], (w_exp, w_out), jnp.float32)
    p["proj_scale"], p["proj_bias"] = _bn_affine(ks[9], w_out)
    return p, has_exp


# ----------------------------------------------------------------------------
# Pure-JAX reference (f32 / HIGHEST precision ground truth)
# ----------------------------------------------------------------------------
_REF_PREC = jax.lax.Precision.HIGHEST


def _ref_mbconv(x, p, kernel, stride, has_exp, has_skip):
    f = x
    if has_exp:
        f = jnp.einsum("nhwc,cd->nhwd", f, p["exp_w"], precision=_REF_PREC)
        f = f * p["exp_scale"] + p["exp_bias"]
        f = f * jax.nn.sigmoid(f)
    pad = (kernel - 1) // 2
    c = f.shape[-1]
    rhs = p["dw_w"].reshape(kernel, kernel, 1, c)
    f = jax.lax.conv_general_dilated(
        f, rhs, (stride, stride), ((pad, pad), (pad, pad)),
        dimension_numbers=("NHWC", "HWIO", "NHWC"),
        feature_group_count=c, precision=_REF_PREC)
    f = f * p["dw_scale"] + p["dw_bias"]
    f = f * jax.nn.sigmoid(f)
    avg = jnp.mean(f, axis=(1, 2), keepdims=True)
    s = jnp.einsum("nijc,cd->nijd", avg, p["se_w1"], precision=_REF_PREC) + p["se_b1"]
    s = s * jax.nn.sigmoid(s)
    s = jnp.einsum("nijd,dc->nijc", s, p["se_w2"], precision=_REF_PREC) + p["se_b2"]
    s = jax.nn.sigmoid(s)
    f = f * s
    f = jnp.einsum("nhwc,cd->nhwd", f, p["proj_w"], precision=_REF_PREC)
    f = f * p["proj_scale"] + p["proj_bias"]
    if has_skip:
        f = x + f
    return f


def effstage_ref(x_nchw, blocks):
    x = jnp.transpose(x_nchw, (0, 2, 3, 1))
    for p, kernel, stride, has_exp, has_skip in blocks:
        x = _ref_mbconv(x, p, kernel, stride, has_exp, has_skip)
    return jnp.transpose(x, (0, 3, 1, 2))


# ----------------------------------------------------------------------------
if __name__ == "__main__":
    key = jax.random.PRNGKey(0)
    kx, kp = jax.random.split(key)

    # EffStage(w_in=4, exp_r=4, kernel=3, stride=2, se_r=0.5, w_out=8, d=2)
    N, C_IN, H, W = 2, 4, 16, 16
    EXP_R, KERNEL, STRIDE, SE_R, W_OUT, D = 4.0, 3, 2, 0.5, 8, 2

    x = jax.random.normal(kx, (N, C_IN, H, W), jnp.float32)

    blocks = []
    for i in range(D):
        b_stride = STRIDE if i == 0 else 1
        b_w_in = C_IN if i == 0 else W_OUT
        kp, sub = jax.random.split(kp)
        params, has_exp = init_mbconv_params(sub, b_w_in, EXP_R, KERNEL, SE_R, W_OUT)
        has_skip = (b_stride == 1) and (b_w_in == W_OUT)
        blocks.append((params, KERNEL, b_stride, has_exp, has_skip))

    out = effstage_forward(x, blocks)
    out = jax.block_until_ready(out)

    ref = effstage_ref(x, blocks)
    assert out.shape == ref.shape, (out.shape, ref.shape)
    max_err = float(jnp.max(jnp.abs(out - ref)))
    # Kernel matmuls use the MXU default precision (bf16 multiplies, f32
    # accumulation) per the perf review; the reference is full-f32, so allow a
    # slightly larger tolerance than exact-f32 comparison would need.
    assert jnp.allclose(out, ref, atol=5e-3, rtol=5e-3), max_err

    print("KERNEL_OK")
</pallas_src>

<mosaic_0001>
module attributes {stable_mosaic.version = 11 : i64} {
  func.func @_mbconv_kernel(%arg0: i32, %arg1: memref<1x9x16x4xf32, #tpu.memory_space<vmem>>, %arg2: memref<1x9x16x4xf32, #tpu.memory_space<vmem>>, %arg3: memref<1x9x16x4xf32, #tpu.memory_space<vmem>>, %arg4: memref<1x9x16x4xf32, #tpu.memory_space<vmem>>, %arg5: memref<9x16x1xf32, #tpu.memory_space<vmem>>, %arg6: memref<9x16x1xf32, #tpu.memory_space<vmem>>, %arg7: memref<9x16x1xf32, #tpu.memory_space<vmem>>, %arg8: memref<9x16x1xf32, #tpu.memory_space<vmem>>, %arg9: memref<4x16xf32, #tpu.memory_space<vmem>>, %arg10: memref<1x16xf32, #tpu.memory_space<vmem>>, %arg11: memref<1x16xf32, #tpu.memory_space<vmem>>, %arg12: memref<3x3x16xf32, #tpu.memory_space<vmem>>, %arg13: memref<1x16xf32, #tpu.memory_space<vmem>>, %arg14: memref<1x16xf32, #tpu.memory_space<vmem>>, %arg15: memref<16x2xf32, #tpu.memory_space<vmem>>, %arg16: memref<1x2xf32, #tpu.memory_space<vmem>>, %arg17: memref<2x16xf32, #tpu.memory_space<vmem>>, %arg18: memref<1x16xf32, #tpu.memory_space<vmem>>, %arg19: memref<16x8xf32, #tpu.memory_space<vmem>>, %arg20: memref<1x8xf32, #tpu.memory_space<vmem>>, %arg21: memref<1x8xf32, #tpu.memory_space<vmem>>, %arg22: memref<1x8x8x8xf32, #tpu.memory_space<vmem>>, %arg23: memref<9x16x16xf32, #tpu.memory_space<vmem>>, %arg24: memref<9x16x16xf32, #tpu.memory_space<vmem>>, %arg25: memref<9x16x16xf32, #tpu.memory_space<vmem>>, %arg26: memref<9x16x16xf32, #tpu.memory_space<vmem>>) attributes {dimension_semantics = [#tpu.dimension_semantics<parallel>], iteration_bounds = array<i64: 2>, scalar_prefetch = 0 : i64, scratch_operands = 4 : i64, tpu.core_type = #tpu.core_type<tc>, window_params = [{transform_indices = @transform_0, window_bounds = array<i64: 1, 9, 16, 4>}, {transform_indices = @transform_1, window_bounds = array<i64: 1, 9, 16, 4>}, {transform_indices = @transform_2, window_bounds = array<i64: 1, 9, 16, 4>}, {transform_indices = @transform_3, window_bounds = array<i64: 1, 9, 16, 4>}, {pipeline_mode = #tpu.pipeline_mode<synchronous>, transform_indices = @transform_4, window_bounds = array<i64: 9, 16, 1>}, {pipeline_mode = #tpu.pipeline_mode<synchronous>, transform_indices = @transform_5, window_bounds = array<i64: 9, 16, 1>}, {pipeline_mode = #tpu.pipeline_mode<synchronous>, transform_indices = @transform_6, window_bounds = array<i64: 9, 16, 1>}, {pipeline_mode = #tpu.pipeline_mode<synchronous>, transform_indices = @transform_7, window_bounds = array<i64: 9, 16, 1>}, {pipeline_mode = #tpu.pipeline_mode<synchronous>, transform_indices = @transform_8, window_bounds = array<i64: 4, 16>}, {pipeline_mode = #tpu.pipeline_mode<synchronous>, transform_indices = @transform_9, window_bounds = array<i64: 1, 16>}, {pipeline_mode = #tpu.pipeline_mode<synchronous>, transform_indices = @transform_10, window_bounds = array<i64: 1, 16>}, {pipeline_mode = #tpu.pipeline_mode<synchronous>, transform_indices = @transform_11, window_bounds = array<i64: 3, 3, 16>}, {pipeline_mode = #tpu.pipeline_mode<synchronous>, transform_indices = @transform_12, window_bounds = array<i64: 1, 16>}, {pipeline_mode = #tpu.pipeline_mode<synchronous>, transform_indices = @transform_13, window_bounds = array<i64: 1, 16>}, {pipeline_mode = #tpu.pipeline_mode<synchronous>, transform_indices = @transform_14, window_bounds = array<i64: 16, 2>}, {pipeline_mode = #tpu.pipeline_mode<synchronous>, transform_indices = @transform_15, window_bounds = array<i64: 1, 2>}, {pipeline_mode = #tpu.pipeline_mode<synchronous>, transform_indices = @transform_16, window_bounds = array<i64: 2, 16>}, {pipeline_mode = #tpu.pipeline_mode<synchronous>, transform_indices = @transform_17, window_bounds = array<i64: 1, 16>}, {pipeline_mode = #tpu.pipeline_mode<synchronous>, transform_indices = @transform_18, window_bounds = array<i64: 16, 8>}, {pipeline_mode = #tpu.pipeline_mode<synchronous>, transform_indices = @transform_19, window_bounds = array<i64: 1, 8>}, {pipeline_mode = #tpu.pipeline_mode<synchronous>, transform_indices = @transform_20, window_bounds = array<i64: 1, 8>}, {transform_indices = @transform_21, window_bounds = array<i64: 1, 8, 8, 8>}]} {
    %c0 = arith.constant 0 : index
    %c0_0 = arith.constant 0 : index
    %c0_1 = arith.constant 0 : index
    %c0_2 = arith.constant 0 : index
    %0 = vector.load %arg1[%c0, %c0_0, %c0_1, %c0_2] : memref<1x9x16x4xf32, #tpu.memory_space<vmem>>, vector<1x9x16x4xf32>
    %1 = vector.shape_cast %0 : vector<1x9x16x4xf32> to vector<9x16x4xf32>
    %2 = vector.shape_cast %1 : vector<9x16x4xf32> to vector<144x4xf32>
    %c0_3 = arith.constant 0 : index
    %c0_4 = arith.constant 0 : index
    %3 = vector.load %arg9[%c0_3, %c0_4] : memref<4x16xf32, #tpu.memory_space<vmem>>, vector<4x16xf32>
    %cst = arith.constant dense<0.000000e+00> : vector<144x16xf32>
    %4 = tpu.matmul %2, %3, %cst {dimension_numbers = #tpu.dot_dimension_numbers<[1], [0], [0], [1], [0, 0, 1, 1], [], []>} : vector<144x4xf32>, vector<4x16xf32>, vector<144x16xf32> -> vector<144x16xf32>
    %c0_5 = arith.constant 0 : index
    %c0_6 = arith.constant 0 : index
    %5 = vector.load %arg10[%c0_5, %c0_6] : memref<1x16xf32, #tpu.memory_space<vmem>>, vector<1x16xf32>
    %6 = vector.broadcast %5 : vector<1x16xf32> to vector<144x16xf32>
    %7 = arith.mulf %4, %6 : vector<144x16xf32>
    %c0_7 = arith.constant 0 : index
    %c0_8 = arith.constant 0 : index
    %8 = vector.load %arg11[%c0_7, %c0_8] : memref<1x16xf32, #tpu.memory_space<vmem>>, vector<1x16xf32>
    %9 = vector.broadcast %8 : vector<1x16xf32> to vector<144x16xf32>
    %10 = arith.addf %7, %9 : vector<144x16xf32>
    %11 = arith.negf %10 : vector<144x16xf32>
    %12 = math.exp %11 : vector<144x16xf32>
    %cst_9 = arith.constant 1.000000e+00 : f32
    %13 = vector.broadcast %cst_9 : f32 to vector<144x16xf32>
    %14 = arith.addf %13, %12 : vector<144x16xf32>
    %15 = arith.divf %13, %14 : vector<144x16xf32>
    %16 = arith.mulf %10, %15 : vector<144x16xf32>
    %17 = vector.shape_cast %16 : vector<144x16xf32> to vector<9x16x16xf32>
    %c0_10 = arith.constant 0 : index
    %c0_11 = arith.constant 0 : index
    %c0_12 = arith.constant 0 : index
    %18 = vector.load %arg5[%c0_10, %c0_11, %c0_12] : memref<9x16x1xf32, #tpu.memory_space<vmem>>, vector<9x16x1xf32>
    %19 = vector.broadcast %18 : vector<9x16x1xf32> to vector<9x16x16xf32>
    %20 = arith.mulf %17, %19 : vector<9x16x16xf32>
    %c0_13 = arith.constant 0 : index
    %c0_14 = arith.constant 0 : index
    %c0_15 = arith.constant 0 : index
    %21 = vector.load %arg23[%c0_13, %c0_14, %c0_15] : memref<9x16x16xf32, #tpu.memory_space<vmem>>, vector<9x16x16xf32>
    tpu.vector_store %arg23[%c0_13, %c0_14, %c0_15], %20 {strides = array<i32>} : memref<9x16x16xf32, #tpu.memory_space<vmem>>, vector<9x16x16xf32>,
    %c0_16 = arith.constant 0 : index
    %c0_17 = arith.constant 0 : index
    %c0_18 = arith.constant 0 : index
    %c0_19 = arith.constant 0 : index
    %22 = vector.load %arg2[%c0_16, %c0_17, %c0_18, %c0_19] : memref<1x9x16x4xf32, #tpu.memory_space<vmem>>, vector<1x9x16x4xf32>
    %23 = vector.shape_cast %22 : vector<1x9x16x4xf32> to vector<9x16x4xf32>
    %24 = vector.shape_cast %23 : vector<9x16x4xf32> to vector<144x4xf32>
    %c0_20 = arith.constant 0 : index
    %c0_21 = arith.constant 0 : index
    %25 = vector.load %arg9[%c0_20, %c0_21] : memref<4x16xf32, #tpu.memory_space<vmem>>, vector<4x16xf32>
    %cst_22 = arith.constant dense<0.000000e+00> : vector<144x16xf32>
    %26 = tpu.matmul %24, %25, %cst_22 {dimension_numbers = #tpu.dot_dimension_numbers<[1], [0], [0], [1], [0, 0, 1, 1], [], []>} : vector<144x4xf32>, vector<4x16xf32>, vector<144x16xf32> -> vector<144x16xf32>
    %c0_23 = arith.constant 0 : index
    %c0_24 = arith.constant 0 : index
    %27 = vector.load %arg10[%c0_23, %c0_24] : memref<1x16xf32, #tpu.memory_space<vmem>>, vector<1x16xf32>
    %28 = vector.broadcast %27 : vector<1x16xf32> to vector<144x16xf32>
    %29 = arith.mulf %26, %28 : vector<144x16xf32>
    %c0_25 = arith.constant 0 : index
    %c0_26 = arith.constant 0 : index
    %30 = vector.load %arg11[%c0_25, %c0_26] : memref<1x16xf32, #tpu.memory_space<vmem>>, vector<1x16xf32>
    %31 = vector.broadcast %30 : vector<1x16xf32> to vector<144x16xf32>
    %32 = arith.addf %29, %31 : vector<144x16xf32>
    %33 = arith.negf %32 : vector<144x16xf32>
    %34 = math.exp %33 : vector<144x16xf32>
    %cst_27 = arith.constant 1.000000e+00 : f32
    %35 = vector.broadcast %cst_27 : f32 to vector<144x16xf32>
    %36 = arith.addf %35, %34 : vector<144x16xf32>
    %37 = arith.divf %35, %36 : vector<144x16xf32>
    %38 = arith.mulf %32, %37 : vector<144x16xf32>
    %39 = vector.shape_cast %38 : vector<144x16xf32> to vector<9x16x16xf32>
    %c0_28 = arith.constant 0 : index
    %c0_29 = arith.constant 0 : index
    %c0_30 = arith.constant 0 : index
    %40 = vector.load %arg6[%c0_28, %c0_29, %c0_30] : memref<9x16x1xf32, #tpu.memory_space<vmem>>, vector<9x16x1xf32>
    %41 = vector.broadcast %40 : vector<9x16x1xf32> to vector<9x16x16xf32>
    %42 = arith.mulf %39, %41 : vector<9x16x16xf32>
    %c0_31 = arith.constant 0 : index
    %c0_32 = arith.constant 0 : index
    %c0_33 = arith.constant 0 : index
    %43 = vector.load %arg24[%c0_31, %c0_32, %c0_33] : memref<9x16x16xf32, #tpu.memory_space<vmem>>, vector<9x16x16xf32>
    tpu.vector_store %arg24[%c0_31, %c0_32, %c0_33], %42 {strides = array<i32>} : memref<9x16x16xf32, #tpu.memory_space<vmem>>, vector<9x16x16xf32>,
    %c0_34 = arith.constant 0 : index
    %c0_35 = arith.constant 0 : index
    %c0_36 = arith.constant 0 : index
    %c0_37 = arith.constant 0 : index
    %44 = vector.load %arg3[%c0_34, %c0_35, %c0_36, %c0_37] : memref<1x9x16x4xf32, #tpu.memory_space<vmem>>, vector<1x9x16x4xf32>
    %45 = vector.shape_cast %44 : vector<1x9x16x4xf32> to vector<9x16x4xf32>
    %46 = vector.shape_cast %45 : vector<9x16x4xf32> to vector<144x4xf32>
    %c0_38 = arith.constant 0 : index
    %c0_39 = arith.constant 0 : index
    %47 = vector.load %arg9[%c0_38, %c0_39] : memref<4x16xf32, #tpu.memory_space<vmem>>, vector<4x16xf32>
    %cst_40 = arith.constant dense<0.000000e+00> : vector<144x16xf32>
    %48 = tpu.matmul %46, %47, %cst_40 {dimension_numbers = #tpu.dot_dimension_numbers<[1], [0], [0], [1], [0, 0, 1, 1], [], []>} : vector<144x4xf32>, vector<4x16xf32>, vector<144x16xf32> -> vector<144x16xf32>
    %c0_41 = arith.constant 0 : index
    %c0_42 = arith.constant 0 : index
    %49 = vector.load %arg10[%c0_41, %c0_42] : memref<1x16xf32, #tpu.memory_space<vmem>>, vector<1x16xf32>
    %50 = vector.broadcast %49 : vector<1x16xf32> to vector<144x16xf32>
    %51 = arith.mulf %48, %50 : vector<144x16xf32>
    %c0_43 = arith.constant 0 : index
    %c0_44 = arith.constant 0 : index
    %52 = vector.load %arg11[%c0_43, %c0_44] : memref<1x16xf32, #tpu.memory_space<vmem>>, vector<1x16xf32>
    %53 = vector.broadcast %52 : vector<1x16xf32> to vector<144x16xf32>
    %54 = arith.addf %51, %53 : vector<144x16xf32>
    %55 = arith.negf %54 : vector<144x16xf32>
    %56 = math.exp %55 : vector<144x16xf32>
    %cst_45 = arith.constant 1.000000e+00 : f32
    %57 = vector.broadcast %cst_45 : f32 to vector<144x16xf32>
    %58 = arith.addf %57, %56 : vector<144x16xf32>
    %59 = arith.divf %57, %58 : vector<144x16xf32>
    %60 = arith.mulf %54, %59 : vector<144x16xf32>
    %61 = vector.shape_cast %60 : vector<144x16xf32> to vector<9x16x16xf32>
    %c0_46 = arith.constant 0 : index
    %c0_47 = arith.constant 0 : index
    %c0_48 = arith.constant 0 : index
    %62 = vector.load %arg7[%c0_46, %c0_47, %c0_48] : memref<9x16x1xf32, #tpu.memory_space<vmem>>, vector<9x16x1xf32>
    %63 = vector.broadcast %62 : vector<9x16x1xf32> to vector<9x16x16xf32>
    %64 = arith.mulf %61, %63 : vector<9x16x16xf32>
    %c0_49 = arith.constant 0 : index
    %c0_50 = arith.constant 0 : index
    %c0_51 = arith.constant 0 : index
    %65 = vector.load %arg25[%c0_49, %c0_50, %c0_51] : memref<9x16x16xf32, #tpu.memory_space<vmem>>, vector<9x16x16xf32>
    tpu.vector_store %arg25[%c0_49, %c0_50, %c0_51], %64 {strides = array<i32>} : memref<9x16x16xf32, #tpu.memory_space<vmem>>, vector<9x16x16xf32>,
    %c0_52 = arith.constant 0 : index
    %c0_53 = arith.constant 0 : index
    %c0_54 = arith.constant 0 : index
    %c0_55 = arith.constant 0 : index
    %66 = vector.load %arg4[%c0_52, %c0_53, %c0_54, %c0_55] : memref<1x9x16x4xf32, #tpu.memory_space<vmem>>, vector<1x9x16x4xf32>
    %67 = vector.shape_cast %66 : vector<1x9x16x4xf32> to vector<9x16x4xf32>
    %68 = vector.shape_cast %67 : vector<9x16x4xf32> to vector<144x4xf32>
    %c0_56 = arith.constant 0 : index
    %c0_57 = arith.constant 0 : index
    %69 = vector.load %arg9[%c0_56, %c0_57] : memref<4x16xf32, #tpu.memory_space<vmem>>, vector<4x16xf32>
    %cst_58 = arith.constant dense<0.000000e+00> : vector<144x16xf32>
    %70 = tpu.matmul %68, %69, %cst_58 {dimension_numbers = #tpu.dot_dimension_numbers<[1], [0], [0], [1], [0, 0, 1, 1], [], []>} : vector<144x4xf32>, vector<4x16xf32>, vector<144x16xf32> -> vector<144x16xf32>
    %c0_59 = arith.constant 0 : index
    %c0_60 = arith.constant 0 : index
    %71 = vector.load %arg10[%c0_59, %c0_60] : memref<1x16xf32, #tpu.memory_space<vmem>>, vector<1x16xf32>
    %72 = vector.broadcast %71 : vector<1x16xf32> to vector<144x16xf32>
    %73 = arith.mulf %70, %72 : vector<144x16xf32>
    %c0_61 = arith.constant 0 : index
    %c0_62 = arith.constant 0 : index
    %74 = vector.load %arg11[%c0_61, %c0_62] : memref<1x16xf32, #tpu.memory_space<vmem>>, vector<1x16xf32>
    %75 = vector.broadcast %74 : vector<1x16xf32> to vector<144x16xf32>
    %76 = arith.addf %73, %75 : vector<144x16xf32>
    %77 = arith.negf %76 : vector<144x16xf32>
    %78 = math.exp %77 : vector<144x16xf32>
    %cst_63 = arith.constant 1.000000e+00 : f32
    %79 = vector.broadcast %cst_63 : f32 to vector<144x16xf32>
    %80 = arith.addf %79, %78 : vector<144x16xf32>
    %81 = arith.divf %79, %80 : vector<144x16xf32>
    %82 = arith.mulf %76, %81 : vector<144x16xf32>
    %83 = vector.shape_cast %82 : vector<144x16xf32> to vector<9x16x16xf32>
    %c0_64 = arith.constant 0 : index
    %c0_65 = arith.constant 0 : index
    %c0_66 = arith.constant 0 : index
    %84 = vector.load %arg8[%c0_64, %c0_65, %c0_66] : memref<9x16x1xf32, #tpu.memory_space<vmem>>, vector<9x16x1xf32>
    %85 = vector.broadcast %84 : vector<9x16x1xf32> to vector<9x16x16xf32>
    %86 = arith.mulf %83, %85 : vector<9x16x16xf32>
    %c0_67 = arith.constant 0 : index
    %c0_68 = arith.constant 0 : index
    %c0_69 = arith.constant 0 : index
    %87 = vector.load %arg26[%c0_67, %c0_68, %c0_69] : memref<9x16x16xf32, #tpu.memory_space<vmem>>, vector<9x16x16xf32>
    tpu.vector_store %arg26[%c0_67, %c0_68, %c0_69], %86 {strides = array<i32>} : memref<9x16x16xf32, #tpu.memory_space<vmem>>, vector<9x16x16xf32>,
    %c0_70 = arith.constant 0 : index
    %c0_71 = arith.constant 0 : index
    %c0_72 = arith.constant 0 : index
    %88 = vector.load %arg12[%c0_70, %c0_71, %c0_72] : memref<3x3x16xf32, #tpu.memory_space<vmem>>, vector<3x3x16xf32>
    %cst_73 = arith.constant 0.000000e+00 : f32
    %89 = vector.broadcast %cst_73 : f32 to vector<8x8x16xf32>
    %c0_74 = arith.constant 0 : index
    %c0_75 = arith.constant 0 : index
    %c0_76 = arith.constant 0 : index
    %90 = vector.load %arg23[%c0_74, %c0_75, %c0_76] : memref<9x16x16xf32, #tpu.memory_space<vmem>>, vector<8x8x16xf32>
    %91 = vector.extract_strided_slice %88 {offsets = [0, 0, 0], sizes = [1, 1, 16], strides = [1, 1, 1]} : vector<3x3x16xf32> to vector<1x1x16xf32>
    %92 = vector.shape_cast %91 : vector<1x1x16xf32> to vector<16xf32>
    %93 = vector.shape_cast %92 : vector<16xf32> to vector<1x1x16xf32>
    %94 = vector.broadcast %93 : vector<1x1x16xf32> to vector<8x8x16xf32>
    %95 = arith.mulf %90, %94 : vector<8x8x16xf32>
    %96 = arith.addf %89, %95 : vector<8x8x16xf32>
    %c0_77 = arith.constant 0 : index
    %c0_78 = arith.constant 0 : index
    %c0_79 = arith.constant 0 : index
    %97 = vector.load %arg24[%c0_77, %c0_78, %c0_79] : memref<9x16x16xf32, #tpu.memory_space<vmem>>, vector<8x8x16xf32>
    %98 = vector.extract_strided_slice %88 {offsets = [0, 1, 0], sizes = [1, 1, 16], strides = [1, 1, 1]} : vector<3x3x16xf32> to vector<1x1x16xf32>
    %99 = vector.shape_cast %98 : vector<1x1x16xf32> to vector<16xf32>
    %100 = vector.shape_cast %99 : vector<16xf32> to vector<1x1x16xf32>
    %101 = vector.broadcast %100 : vector<1x1x16xf32> to vector<8x8x16xf32>
    %102 = arith.mulf %97, %101 : vector<8x8x16xf32>
    %103 = arith.addf %96, %102 : vector<8x8x16xf32>
    %c0_80 = arith.constant 0 : index
    %c1 = arith.constant 1 : index
    %c0_81 = arith.constant 0 : index
    %104 = vector.load %arg23[%c0_80, %c1, %c0_81] : memref<9x16x16xf32, #tpu.memory_space<vmem>>, vector<8x8x16xf32>
    %105 = vector.extract_strided_slice %88 {offsets = [0, 2, 0], sizes = [1, 1, 16], strides = [1, 1, 1]} : vector<3x3x16xf32> to vector<1x1x16xf32>
    %106 = vector.shape_cast %105 : vector<1x1x16xf32> to vector<16xf32>
    %107 = vector.shape_cast %106 : vector<16xf32> to vector<1x1x16xf32>
    %108 = vector.broadcast %107 : vector<1x1x16xf32> to vector<8x8x16xf32>
    %109 = arith.mulf %104, %108 : vector<8x8x16xf32>
    %110 = arith.addf %103, %109 : vector<8x8x16xf32>
    %c0_82 = arith.constant 0 : index
    %c0_83 = arith.constant 0 : index
    %c0_84 = arith.constant 0 : index
    %111 = vector.load %arg25[%c0_82, %c0_83, %c0_84] : memref<9x16x16xf32, #tpu.memory_space<vmem>>, vector<8x8x16xf32>
    %112 = vector.extract_strided_slice %88 {offsets = [1, 0, 0], sizes = [1, 1, 16], strides = [1, 1, 1]} : vector<3x3x16xf32> to vector<1x1x16xf32>
    %113 = vector.shape_cast %112 : vector<1x1x16xf32> to vector<16xf32>
    %114 = vector.shape_cast %113 : vector<16xf32> to vector<1x1x16xf32>
    %115 = vector.broadcast %114 : vector<1x1x16xf32> to vector<8x8x16xf32>
    %116 = arith.mulf %111, %115 : vector<8x8x16xf32>
    %117 = arith.addf %110, %116 : vector<8x8x16xf32>
    %c0_85 = arith.constant 0 : index
    %c0_86 = arith.constant 0 : index
    %c0_87 = arith.constant 0 : index
    %118 = vector.load %arg26[%c0_85, %c0_86, %c0_87] : memref<9x16x16xf32, #tpu.memory_space<vmem>>, vector<8x8x16xf32>
    %119 = vector.extract_strided_slice %88 {offsets = [1, 1, 0], sizes = [1, 1, 16], strides = [1, 1, 1]} : vector<3x3x16xf32> to vector<1x1x16xf32>
    %120 = vector.shape_cast %119 : vector<1x1x16xf32> to vector<16xf32>
    %121 = vector.shape_cast %120 : vector<16xf32> to vector<1x1x16xf32>
    %122 = vector.broadcast %121 : vector<1x1x16xf32> to vector<8x8x16xf32>
    %123 = arith.mulf %118, %122 : vector<8x8x16xf32>
    %124 = arith.addf %117, %123 : vector<8x8x16xf32>
    %c0_88 = arith.constant 0 : index
    %c1_89 = arith.constant 1 : index
    %c0_90 = arith.constant 0 : index
    %125 = vector.load %arg25[%c0_88, %c1_89, %c0_90] : memref<9x16x16xf32, #tpu.memory_space<vmem>>, vector<8x8x16xf32>
    %126 = vector.extract_strided_slice %88 {offsets = [1, 2, 0], sizes = [1, 1, 16], strides = [1, 1, 1]} : vector<3x3x16xf32> to vector<1x1x16xf32>
    %127 = vector.shape_cast %126 : vector<1x1x16xf32> to vector<16xf32>
    %128 = vector.shape_cast %127 : vector<16xf32> to vector<1x1x16xf32>
    %129 = vector.broadcast %128 : vector<1x1x16xf32> to vector<8x8x16xf32>
    %130 = arith.mulf %125, %129 : vector<8x8x16xf32>
    %131 = arith.addf %124, %130 : vector<8x8x16xf32>
    %c1_91 = arith.constant 1 : index
    %c0_92 = arith.constant 0 : index
    %c0_93 = arith.constant 0 : index
    %132 = vector.load %arg23[%c1_91, %c0_92, %c0_93] : memref<9x16x16xf32, #tpu.memory_space<vmem>>, vector<8x8x16xf32>
    %133 = vector.extract_strided_slice %88 {offsets = [2, 0, 0], sizes = [1, 1, 16], strides = [1, 1, 1]} : vector<3x3x16xf32> to vector<1x1x16xf32>
    %134 = vector.shape_cast %133 : vector<1x1x16xf32> to vector<16xf32>
    %135 = vector.shape_cast %134 : vector<16xf32> to vector<1x1x16xf32>
    %136 = vector.broadcast %135 : vector<1x1x16xf32> to vector<8x8x16xf32>
    %137 = arith.mulf %132, %136 : vector<8x8x16xf32>
    %138 = arith.addf %131, %137 : vector<8x8x16xf32>
    %c1_94 = arith.constant 1 : index
    %c0_95 = arith.constant 0 : index
    %c0_96 = arith.constant 0 : index
    %139 = vector.load %arg24[%c1_94, %c0_95, %c0_96] : memref<9x16x16xf32, #tpu.memory_space<vmem>>, vector<8x8x16xf32>
    %140 = vector.extract_strided_slice %88 {offsets = [2, 1, 0], sizes = [1, 1, 16], strides = [1, 1, 1]} : vector<3x3x16xf32> to vector<1x1x16xf32>
    %141 = vector.shape_cast %140 : vector<1x1x16xf32> to vector<16xf32>
    %142 = vector.shape_cast %141 : vector<16xf32> to vector<1x1x16xf32>
    %143 = vector.broadcast %142 : vector<1x1x16xf32> to vector<8x8x16xf32>
    %144 = arith.mulf %139, %143 : vector<8x8x16xf32>
    %145 = arith.addf %138, %144 : vector<8x8x16xf32>
    %c1_97 = arith.constant 1 : index
    %c1_98 = arith.constant 1 : index
    %c0_99 = arith.constant 0 : index
    %146 = vector.load %arg23[%c1_97, %c1_98, %c0_99] : memref<9x16x16xf32, #tpu.memory_space<vmem>>, vector<8x8x16xf32>
    %147 = vector.extract_strided_slice %88 {offsets = [2, 2, 0], sizes = [1, 1, 16], strides = [1, 1, 1]} : vector<3x3x16xf32> to vector<1x1x16xf32>
    %148 = vector.shape_cast %147 : vector<1x1x16xf32> to vector<16xf32>
    %149 = vector.shape_cast %148 : vector<16xf32> to vector<1x1x16xf32>
    %150 = vector.broadcast %149 : vector<1x1x16xf32> to vector<8x8x16xf32>
    %151 = arith.mulf %146, %150 : vector<8x8x16xf32>
    %152 = arith.addf %145, %151 : vector<8x8x16xf32>
    %c0_100 = arith.constant 0 : index
    %c0_101 = arith.constant 0 : index
    %153 = vector.load %arg13[%c0_100, %c0_101] : memref<1x16xf32, #tpu.memory_space<vmem>>, vector<1x16xf32>
    %154 = vector.shape_cast %153 : vector<1x16xf32> to vector<1x1x16xf32>
    %155 = vector.broadcast %154 : vector<1x1x16xf32> to vector<8x8x16xf32>
    %156 = arith.mulf %152, %155 : vector<8x8x16xf32>
    %c0_102 = arith.constant 0 : index
    %c0_103 = arith.constant 0 : index
    %157 = vector.load %arg14[%c0_102, %c0_103] : memref<1x16xf32, #tpu.memory_space<vmem>>, vector<1x16xf32>
    %158 = vector.shape_cast %157 : vector<1x16xf32> to vector<1x1x16xf32>
    %159 = vector.broadcast %158 : vector<1x1x16xf32> to vector<8x8x16xf32>
    %160 = arith.addf %156, %159 : vector<8x8x16xf32>
    %161 = arith.negf %160 : vector<8x8x16xf32>
    %162 = math.exp %161 : vector<8x8x16xf32>
    %cst_104 = arith.constant 1.000000e+00 : f32
    %163 = vector.broadcast %cst_104 : f32 to vector<8x8x16xf32>
    %164 = arith.addf %163, %162 : vector<8x8x16xf32>
    %165 = arith.divf %163, %164 : vector<8x8x16xf32>
    %166 = arith.mulf %160, %165 : vector<8x8x16xf32>
    %167 = vector.shape_cast %166 : vector<8x8x16xf32> to vector<64x16xf32>
    %cst_105 = arith.constant dense<0.000000e+00> : vector<16xf32>
    %168 = vector.multi_reduction <add>, %167, %cst_105 [0] : vector<64x16xf32> to vector<16xf32>
    %169 = vector.shape_cast %168 : vector<16xf32> to vector<1x16xf32>
    %cst_106 = arith.constant 1.562500e-02 : f32
    %170 = vector.broadcast %cst_106 : f32 to vector<1x16xf32>
    %171 = arith.mulf %169, %170 : vector<1x16xf32>
    %c0_107 = arith.constant 0 : index
    %c0_108 = arith.constant 0 : index
    %172 = vector.load %arg15[%c0_107, %c0_108] : memref<16x2xf32, #tpu.memory_space<vmem>>, vector<16x2xf32>
    %cst_109 = arith.constant dense<0.000000e+00> : vector<1x2xf32>
    %173 = tpu.matmul %171, %172, %cst_109 {dimension_numbers = #tpu.dot_dimension_numbers<[1], [0], [0], [1], [0, 0, 1, 1], [], []>} : vector<1x16xf32>, vector<16x2xf32>, vector<1x2xf32> -> vector<1x2xf32>
    %c0_110 = arith.constant 0 : index
    %c0_111 = arith.constant 0 : index
    %174 = vector.load %arg16[%c0_110, %c0_111] : memref<1x2xf32, #tpu.memory_space<vmem>>, vector<1x2xf32>
    %175 = arith.addf %173, %174 : vector<1x2xf32>
    %176 = arith.negf %175 : vector<1x2xf32>
    %177 = math.exp %176 : vector<1x2xf32>
    %cst_112 = arith.constant 1.000000e+00 : f32
    %178 = vector.broadcast %cst_112 : f32 to vector<1x2xf32>
    %179 = arith.addf %178, %177 : vector<1x2xf32>
    %180 = arith.divf %178, %179 : vector<1x2xf32>
    %181 = arith.mulf %175, %180 : vector<1x2xf32>
    %c0_113 = arith.constant 0 : index
    %c0_114 = arith.constant 0 : index
    %182 = vector.load %arg17[%c0_113, %c0_114] : memref<2x16xf32, #tpu.memory_space<vmem>>, vector<2x16xf32>
    %cst_115 = arith.constant dense<0.000000e+00> : vector<1x16xf32>
    %183 = tpu.matmul %181, %182, %cst_115 {dimension_numbers = #tpu.dot_dimension_numbers<[1], [0], [0], [1], [0, 0, 1, 1], [], []>} : vector<1x2xf32>, vector<2x16xf32>, vector<1x16xf32> -> vector<1x16xf32>
    %c0_116 = arith.constant 0 : index
    %c0_117 = arith.constant 0 : index
    %184 = vector.load %arg18[%c0_116, %c0_117] : memref<1x16xf32, #tpu.memory_space<vmem>>, vector<1x16xf32>
    %185 = arith.addf %183, %184 : vector<1x16xf32>
    %186 = arith.negf %185 : vector<1x16xf32>
    %187 = math.exp %186 : vector<1x16xf32>
    %cst_118 = arith.constant 1.000000e+00 : f32
    %188 = vector.broadcast %cst_118 : f32 to vector<1x16xf32>
    %189 = arith.addf %188, %187 : vector<1x16xf32>
    %190 = arith.divf %188, %189 : vector<1x16xf32>
    %191 = vector.broadcast %190 : vector<1x16xf32> to vector<64x16xf32>
    %192 = arith.mulf %167, %191 : vector<64x16xf32>
    %c0_119 = arith.constant 0 : index
    %c0_120 = arith.constant 0 : index
    %193 = vector.load %arg19[%c0_119, %c0_120] : memref<16x8xf32, #tpu.memory_space<vmem>>, vector<16x8xf32>
    %cst_121 = arith.constant dense<0.000000e+00> : vector<64x8xf32>
    %194 = tpu.matmul %192, %193, %cst_121 {dimension_numbers = #tpu.dot_dimension_numbers<[1], [0], [0], [1], [0, 0, 1, 1], [], []>} : vector<64x16xf32>, vector<16x8xf32>, vector<64x8xf32> -> vector<64x8xf32>
    %c0_122 = arith.constant 0 : index
    %c0_123 = arith.constant 0 : index
    %195 = vector.load %arg20[%c0_122, %c0_123] : memref<1x8xf32, #tpu.memory_space<vmem>>, vector<1x8xf32>
    %196 = vector.broadcast %195 : vector<1x8xf32> to vector<64x8xf32>
    %197 = arith.mulf %194, %196 : vector<64x8xf32>
    %c0_124 = arith.constant 0 : index
    %c0_125 = arith.constant 0 : index
    %198 = vector.load %arg21[%c0_124, %c0_125] : memref<1x8xf32, #tpu.memory_space<vmem>>, vector<1x8xf32>
    %199 = vector.broadcast %198 : vector<1x8xf32> to vector<64x8xf32>
    %200 = arith.addf %197, %199 : vector<64x8xf32>
    %201 = vector.shape_cast %200 : vector<64x8xf32> to vector<8x8x8xf32>
    %c0_126 = arith.constant 0 : index
    %c0_127 = arith.constant 0 : index
    %c0_128 = arith.constant 0 : index
    %c0_129 = arith.constant 0 : index
    %202 = vector.load %arg22[%c0_126, %c0_127, %c0_128, %c0_129] : memref<1x8x8x8xf32, #tpu.memory_space<vmem>>, vector<1x8x8x8xf32>
    %203 = vector.shape_cast %202 : vector<1x8x8x8xf32> to vector<8x8x8xf32>
    %204 = vector.shape_cast %201 : vector<8x8x8xf32> to vector<1x8x8x8xf32>
    tpu.vector_store %arg22[%c0_126, %c0_127, %c0_128, %c0_129], %204 {strides = array<i32>} : memref<1x8x8x8xf32, #tpu.memory_space<vmem>>, vector<1x8x8x8xf32>,
    return
  }
  func.func @transform_0(%arg0: i32) -> (i32, i32, i32, i32) {
    %c0_i32 = arith.constant 0 : i32
    %c0_i32_0 = arith.constant 0 : i32
    %c0_i32_1 = arith.constant 0 : i32
    %c0_i32_2 = arith.constant 0 : i32
    return %arg0, %c0_i32, %c0_i32_0, %c0_i32_1 : i32, i32, i32, i32
  }
  func.func @transform_1(%arg0: i32) -> (i32, i32, i32, i32) {
    %c0_i32 = arith.constant 0 : i32
    %c0_i32_0 = arith.constant 0 : i32
    %c0_i32_1 = arith.constant 0 : i32
    %c0_i32_2 = arith.constant 0 : i32
    return %arg0, %c0_i32, %c0_i32_0, %c0_i32_1 : i32, i32, i32, i32
  }
  func.func @transform_2(%arg0: i32) -> (i32, i32, i32, i32) {
    %c0_i32 = arith.constant 0 : i32
    %c0_i32_0 = arith.constant 0 : i32
    %c0_i32_1 = arith.constant 0 : i32
    %c0_i32_2 = arith.constant 0 : i32
    return %arg0, %c0_i32, %c0_i32_0, %c0_i32_1 : i32, i32, i32, i32
  }
  func.func @transform_3(%arg0: i32) -> (i32, i32, i32, i32) {
    %c0_i32 = arith.constant 0 : i32
    %c0_i32_0 = arith.constant 0 : i32
    %c0_i32_1 = arith.constant 0 : i32
    %c0_i32_2 = arith.constant 0 : i32
    return %arg0, %c0_i32, %c0_i32_0, %c0_i32_1 : i32, i32, i32, i32
  }
  func.func @transform_4(%arg0: i32) -> (i32, i32, i32) {
    %c0_i32 = arith.constant 0 : i32
    %c0_i32_0 = arith.constant 0 : i32
    %c0_i32_1 = arith.constant 0 : i32
    %c0_i32_2 = arith.constant 0 : i32
    return %c0_i32, %c0_i32_0, %c0_i32_1 : i32, i32, i32
  }
  func.func @transform_5(%arg0: i32) -> (i32, i32, i32) {
    %c0_i32 = arith.constant 0 : i32
    %c0_i32_0 = arith.constant 0 : i32
    %c0_i32_1 = arith.constant 0 : i32
    %c0_i32_2 = arith.constant 0 : i32
    return %c0_i32, %c0_i32_0, %c0_i32_1 : i32, i32, i32
  }
  func.func @transform_6(%arg0: i32) -> (i32, i32, i32) {
    %c0_i32 = arith.constant 0 : i32
    %c0_i32_0 = arith.constant 0 : i32
    %c0_i32_1 = arith.constant 0 : i32
    %c0_i32_2 = arith.constant 0 : i32
    return %c0_i32, %c0_i32_0, %c0_i32_1 : i32, i32, i32
  }
  func.func @transform_7(%arg0: i32) -> (i32, i32, i32) {
    %c0_i32 = arith.constant 0 : i32
    %c0_i32_0 = arith.constant 0 : i32
    %c0_i32_1 = arith.constant 0 : i32
    %c0_i32_2 = arith.constant 0 : i32
    return %c0_i32, %c0_i32_0, %c0_i32_1 : i32, i32, i32
  }
  func.func @transform_8(%arg0: i32) -> (i32, i32) {
    %c0_i32 = arith.constant 0 : i32
    %c0_i32_0 = arith.constant 0 : i32
    %c0_i32_1 = arith.constant 0 : i32
    return %c0_i32, %c0_i32_0 : i32, i32
  }
  func.func @transform_9(%arg0: i32) -> (i32, i32) {
    %c0_i32 = arith.constant 0 : i32
    %c0_i32_0 = arith.constant 0 : i32
    %c0_i32_1 = arith.constant 0 : i32
    return %c0_i32, %c0_i32_0 : i32, i32
  }
  func.func @transform_10(%arg0: i32) -> (i32, i32) {
    %c0_i32 = arith.constant 0 : i32
    %c0_i32_0 = arith.constant 0 : i32
    %c0_i32_1 = arith.constant 0 : i32
    return %c0_i32, %c0_i32_0 : i32, i32
  }
  func.func @transform_11(%arg0: i32) -> (i32, i32, i32) {
    %c0_i32 = arith.constant 0 : i32
    %c0_i32_0 = arith.constant 0 : i32
    %c0_i32_1 = arith.constant 0 : i32
    %c0_i32_2 = arith.constant 0 : i32
    return %c0_i32, %c0_i32_0, %c0_i32_1 : i32, i32, i32
  }
  func.func @transform_12(%arg0: i32) -> (i32, i32) {
    %c0_i32 = arith.constant 0 : i32
    %c0_i32_0 = arith.constant 0 : i32
    %c0_i32_1 = arith.constant 0 : i32
    return %c0_i32, %c0_i32_0 : i32, i32
  }
  func.func @transform_13(%arg0: i32) -> (i32, i32) {
    %c0_i32 = arith.constant 0 : i32
    %c0_i32_0 = arith.constant 0 : i32
    %c0_i32_1 = arith.constant 0 : i32
    return %c0_i32, %c0_i32_0 : i32, i32
  }
  func.func @transform_14(%arg0: i32) -> (i32, i32) {
    %c0_i32 = arith.constant 0 : i32
    %c0_i32_0 = arith.constant 0 : i32
    %c0_i32_1 = arith.constant 0 : i32
    return %c0_i32, %c0_i32_0 : i32, i32
  }
  func.func @transform_15(%arg0: i32) -> (i32, i32) {
    %c0_i32 = arith.constant 0 : i32
    %c0_i32_0 = arith.constant 0 : i32
    %c0_i32_1 = arith.constant 0 : i32
    return %c0_i32, %c0_i32_0 : i32, i32
  }
  func.func @transform_16(%arg0: i32) -> (i32, i32) {
    %c0_i32 = arith.constant 0 : i32
    %c0_i32_0 = arith.constant 0 : i32
    %c0_i32_1 = arith.constant 0 : i32
    return %c0_i32, %c0_i32_0 : i32, i32
  }
  func.func @transform_17(%arg0: i32) -> (i32, i32) {
    %c0_i32 = arith.constant 0 : i32
    %c0_i32_0 = arith.constant 0 : i32
    %c0_i32_1 = arith.constant 0 : i32
    return %c0_i32, %c0_i32_0 : i32, i32
  }
  func.func @transform_18(%arg0: i32) -> (i32, i32) {
    %c0_i32 = arith.constant 0 : i32
    %c0_i32_0 = arith.constant 0 : i32
    %c0_i32_1 = arith.constant 0 : i32
    return %c0_i32, %c0_i32_0 : i32, i32
  }
  func.func @transform_19(%arg0: i32) -> (i32, i32) {
    %c0_i32 = arith.constant 0 : i32
    %c0_i32_0 = arith.constant 0 : i32
    %c0_i32_1 = arith.constant 0 : i32
    return %c0_i32, %c0_i32_0 : i32, i32
  }
  func.func @transform_20(%arg0: i32) -> (i32, i32) {
    %c0_i32 = arith.constant 0 : i32
    %c0_i32_0 = arith.constant 0 : i32
    %c0_i32_1 = arith.constant 0 : i32
    return %c0_i32, %c0_i32_0 : i32, i32
  }
  func.func @transform_21(%arg0: i32) -> (i32, i32, i32, i32) {
    %c0_i32 = arith.constant 0 : i32
    %c0_i32_0 = arith.constant 0 : i32
    %c0_i32_1 = arith.constant 0 : i32
    %c0_i32_2 = arith.constant 0 : i32
    return %arg0, %c0_i32, %c0_i32_0, %c0_i32_1 : i32, i32, i32, i32
  }
}

</mosaic_0001>

<llo_original>
// kernel: tpu_custom_call.1
$region0: #{tpu_custom_call.1}
  #allocation0 [shape = 'u32[]', space=smem, size = 0x4, offset = 0x4, fixed_abs, tag = 'smem constant byte address 0x4 - core index']
  #allocation1 [shape = 'u32[144,128]{1,0:T(1,128)}', space=vmem, size = 0x12000, scoped, tag = 'internal scratch']
  #allocation2 [shape = 'f32[9,16,16]{2,1,0:T(8,128)}', space=vmem, size = 0x12000, scoped, tag = 'scratch operand']
  #allocation3 [shape = 'f32[9,16,16]{2,1,0:T(8,128)}', space=vmem, size = 0x12000, scoped, tag = 'scratch operand']
  #allocation4 [shape = 'f32[9,16,16]{2,1,0:T(8,128)}', space=vmem, size = 0x12000, scoped, tag = 'scratch operand']
  #allocation5 [shape = 'f32[9,16,16]{2,1,0:T(8,128)}', space=vmem, size = 0x12000, scoped, tag = 'scratch operand']
  %s0 = inlined_call_operand.vmem [shape: f32[2,9,16,4], index: 0, kind: input, shape index: {}]
  %s1 = inlined_call_operand.vmem [shape: f32[2,9,16,4], index: 1, kind: input, shape index: {}]
  %s2 = inlined_call_operand.vmem [shape: f32[2,9,16,4], index: 2, kind: input, shape index: {}]
  %s3 = inlined_call_operand.vmem [shape: f32[2,9,16,4], index: 3, kind: input, shape index: {}]
  %s4 = inlined_call_operand.vmem [shape: f32[9,16,1], index: 4, kind: input, shape index: {}]
  %s5 = inlined_call_operand.vmem [shape: f32[9,16,1], index: 5, kind: input, shape index: {}]
  %s6 = inlined_call_operand.vmem [shape: f32[9,16,1], index: 6, kind: input, shape index: {}]
  %s7 = inlined_call_operand.vmem [shape: f32[9,16,1], index: 7, kind: input, shape index: {}]
  %s8 = inlined_call_operand.vmem [shape: f32[4,16], index: 8, kind: input, shape index: {}]
  %s9 = inlined_call_operand.vmem [shape: f32[1,16], index: 9, kind: input, shape index: {}]
  %s10 = inlined_call_operand.vmem [shape: f32[1,16], index: 10, kind: input, shape index: {}]
  %s11 = inlined_call_operand.vmem [shape: f32[3,3,16], index: 11, kind: input, shape index: {}]
  %s12 = inlined_call_operand.vmem [shape: f32[1,16], index: 12, kind: input, shape index: {}]
  %s13 = inlined_call_operand.vmem [shape: f32[1,16], index: 13, kind: input, shape index: {}]
  %s14 = inlined_call_operand.vmem [shape: f32[16,2], index: 14, kind: input, shape index: {}]
  %s15 = inlined_call_operand.vmem [shape: f32[1,2], index: 15, kind: input, shape index: {}]
  %s16 = inlined_call_operand.vmem [shape: f32[2,16], index: 16, kind: input, shape index: {}]
  %s17 = inlined_call_operand.vmem [shape: f32[1,16], index: 17, kind: input, shape index: {}]
  %s18 = inlined_call_operand.vmem [shape: f32[16,8], index: 18, kind: input, shape index: {}]
  %s19 = inlined_call_operand.vmem [shape: f32[1,8], index: 19, kind: input, shape index: {}]
  %s20 = inlined_call_operand.vmem [shape: f32[1,8], index: 20, kind: input, shape index: {}]
  %s21 = inlined_call_operand.hbm [shape: f32[2,8,8,8], index: 21, kind: output, shape index: {}]
  %s22 = sld [smem:[#allocation0]]
  $region117: #{tpu_custom_call.1} parent=0
    _
  %s24 = ssub.s32 1, %s22
  %s25 = scalar_select 0, %s24, %s22
  $region1: #{tpu_custom_call.1} parent=0
    #allocation6 [shape = 'u8[65536]{0}', space=vmem, size = 0x10000, scoped, tag = 'output window, operand 0']
    #allocation7 [shape = 's32[2]{0}', space=sflag, size = 0x8, scoped, tag = 'scoped memory for tpu_custom_call.1']
    %26 = vsyncpa [#allocation7], 0
    %s27 = scalar_lea.sflag [#allocation7], 1
    %28 = vsyncpa %s27, 0
    loop: start=0, step=1, limit=4
    $region2: #{tpu_custom_call.1} parent=1 // loop_pre_header
      _
    $region3: #{tpu_custom_call.1} parent=1 // loop_header
      %s30 = sphi 0, %s34
      %p31 = scmp.ge.s32.totalorder %s30, 4
      %s40 = sphi 0, %s42
      %s43 = sphi 0, %s40
      %s44 = sphi 0, %s43
      %s60 = sphi 0, %s44
      %s66 = sphi 0, %s68
      %s69 = sphi 0, %s66
      %s70 = sphi 0, %s69
      %s86 = sphi 0, %s70
      %s92 = sphi 0, %s94
      %s95 = sphi 0, %s92
      %s96 = sphi 0, %s95
      %s112 = sphi 0, %s96
      %s118 = sphi 0, %s120
      %s121 = sphi 0, %s118
      %s122 = sphi 0, %s121
      %s138 = sphi 0, %s122
      %s142 = sphi 0, %s142
      %s144 = sphi 0, %s142
      %s145 = sphi 0, %s144
      %s159 = sphi 0, %s145
      %s163 = sphi 0, %s163
      %s165 = sphi 0, %s163
      %s166 = sphi 0, %s165
      %s180 = sphi 0, %s166
      %s184 = sphi 0, %s184
      %s186 = sphi 0, %s184
      %s187 = sphi 0, %s186
      %s201 = sphi 0, %s187
      %s205 = sphi 0, %s205
      %s207 = sphi 0, %s205
      %s208 = sphi 0, %s207
      %s222 = sphi 0, %s208
      %s226 = sphi 0, %s226
      %s228 = sphi 0, %s226
      %s229 = sphi 0, %s228
      %s243 = sphi 0, %s229
      %s247 = sphi 0, %s247
      %s249 = sphi 0, %s247
      %s250 = sphi 0, %s249
      %s264 = sphi 0, %s250
      %s268 = sphi 0, %s268
      %s270 = sphi 0, %s268
      %s271 = sphi 0, %s270
      %s285 = sphi 0, %s271
      %s289 = sphi 0, %s289
      %s291 = sphi 0, %s289
      %s292 = sphi 0, %s291
      %s306 = sphi 0, %s292
      %s310 = sphi 0, %s310
      %s312 = sphi 0, %s310
      %s313 = sphi 0, %s312
      %s327 = sphi 0, %s313
      %s331 = sphi 0, %s331
      %s333 = sphi 0, %s331
      %s334 = sphi 0, %s333
      %s348 = sphi 0, %s334
      %s352 = sphi 0, %s352
      %s354 = sphi 0, %s352
      %s355 = sphi 0, %s354
      %s369 = sphi 0, %s355
      %s373 = sphi 0, %s373
      %s375 = sphi 0, %s373
      %s376 = sphi 0, %s375
      %s390 = sphi 0, %s376
      %s394 = sphi 0, %s394
      %s396 = sphi 0, %s394
      %s397 = sphi 0, %s396
      %s411 = sphi 0, %s397
      %s415 = sphi 0, %s415
      %s417 = sphi 0, %s415
      %s418 = sphi 0, %s417
      %s432 = sphi 0, %s418
      %s436 = sphi 0, %s436
      %s438 = sphi 0, %s436
      %s439 = sphi 0, %s438
      %s453 = sphi 0, %s439
      %s457 = sphi 0, %s457
      %s459 = sphi 0, %s457
      %s460 = sphi 0, %s459
      %s474 = sphi 0, %s460
      %s478 = sphi 0, %s478
      %s480 = sphi 0, %s478
      %s481 = sphi 0, %s480
      %s495 = sphi 0, %s481
      %s501 = sphi 0, %s503
      %s504 = sphi 0, %s501
      %s505 = sphi 0, %s504
      %s521 = sphi 0, %s505
    $region4: #{tpu_custom_call.1} parent=1 // loop_header_branch
      %33 = sbr.rel (%p31) target = $region8
    $region5: #{tpu_custom_call.1} parent=1 // loop_body
      %s35 = ssub.s32 %s30, 1
      %s36 = ssub.s32 %s30, 2
      %s37 = sadd.s32 %s30, 1
      %s38 = ssub.s32 %s30, %s37
      %p39 = scmp.eq.s32.totalorder %s38, 0
      %s41 = sadd.s32 %s40, 1
      %s42 = scalar_select %p39, %s40, %s41
      %p45 = pneg %p39
      %p46 = scmp.eq.s32.totalorder %s30, 1
      %p47 = por %p45, %p46
      %p48 = scmp.ne.s32.totalorder %s40, %s43
      %p49 = scmp.eq.s32.totalorder %s30, 0
      %p50 = por %p48, %p49
      %p51 = scmp.ne.s32.totalorder %s40, %s43
      %p52 = scmp.eq.s32.totalorder %s35, 1
      %p53 = por %p51, %p52
      %p54 = scmp.ne.s32.totalorder %s43, %s44
      %p55 = scmp.eq.s32.totalorder %s35, 0
      %p56 = por %p54, %p55
      %p57 = scmp.ne.s32.totalorder %s43, %s44
      %p58 = scmp.eq.s32.totalorder %s36, 1
      %p59 = por %p57, %p58
      %p61 = scmp.ne.s32.totalorder %s44, %s60
      %p62 = scmp.eq.s32.totalorder %s36, 0
      %p63 = por %p61, %p62
      %s64 = ssub.s32 %s30, %s37
      %p65 = scmp.eq.s32.totalorder %s64, 0
      %s67 = sadd.s32 %s66, 1
      %s68 = scalar_select %p65, %s66, %s67
      %p71 = pneg %p65
      %p72 = scmp.eq.s32.totalorder %s30, 1
      %p73 = por %p71, %p72
      %p74 = scmp.ne.s32.totalorder %s66, %s69
      %p75 = scmp.eq.s32.totalorder %s30, 0
      %p76 = por %p74, %p75
      %p77 = scmp.ne.s32.totalorder %s66, %s69
      %p78 = scmp.eq.s32.totalorder %s35, 1
      %p79 = por %p77, %p78
      %p80 = scmp.ne.s32.totalorder %s69, %s70
      %p81 = scmp.eq.s32.totalorder %s35, 0
      %p82 = por %p80, %p81
      %p83 = scmp.ne.s32.totalorder %s69, %s70
      %p84 = scmp.eq.s32.totalorder %s36, 1
      %p85 = por %p83, %p84
      %p87 = scmp.ne.s32.totalorder %s70, %s86
      %p88 = scmp.eq.s32.totalorder %s36, 0
      %p89 = por %p87, %p88
      %s90 = ssub.s32 %s30, %s37
      %p91 = scmp.eq.s32.totalorder %s90, 0
      %s93 = sadd.s32 %s92, 1
      %s94 = scalar_select %p91, %s92, %s93
      %p97 = pneg %p91
      %p98 = scmp.eq.s32.totalorder %s30, 1
      %p99 = por %p97, %p98
      %p100 = scmp.ne.s32.totalorder %s92, %s95
      %p101 = scmp.eq.s32.totalorder %s30, 0
      %p102 = por %p100, %p101
      %p103 = scmp.ne.s32.totalorder %s92, %s95
      %p104 = scmp.eq.s32.totalorder %s35, 1
      %p105 = por %p103, %p104
      %p106 = scmp.ne.s32.totalorder %s95, %s96
      %p107 = scmp.eq.s32.totalorder %s35, 0
      %p108 = por %p106, %p107
      %p109 = scmp.ne.s32.totalorder %s95, %s96
      %p110 = scmp.eq.s32.totalorder %s36, 1
      %p111 = por %p109, %p110
      %p113 = scmp.ne.s32.totalorder %s96, %s112
      %p114 = scmp.eq.s32.totalorder %s36, 0
      %p115 = por %p113, %p114
      %s116 = ssub.s32 %s30, %s37
      %p117 = scmp.eq.s32.totalorder %s116, 0
      %s119 = sadd.s32 %s118, 1
      %s120 = scalar_select %p117, %s118, %s119
      %p123 = pneg %p117
      %p124 = scmp.eq.s32.totalorder %s30, 1
      %p125 = por %p123, %p124
      %p126 = scmp.ne.s32.totalorder %s118, %s121
      %p127 = scmp.eq.s32.totalorder %s30, 0
      %p128 = por %p126, %p127
      %p129 = scmp.ne.s32.totalorder %s118, %s121
      %p130 = scmp.eq.s32.totalorder %s35, 1
      %p131 = por %p129, %p130
      %p132 = scmp.ne.s32.totalorder %s121, %s122
      %p133 = scmp.eq.s32.totalorder %s35, 0
      %p134 = por %p132, %p133
      %p135 = scmp.ne.s32.totalorder %s121, %s122
      %p136 = scmp.eq.s32.totalorder %s36, 1
      %p137 = por %p135, %p136
      %p139 = scmp.ne.s32.totalorder %s122, %s138
      %p140 = scmp.eq.s32.totalorder %s36, 0
      %p141 = por %p139, %p140
      %s143 = sadd.s32 %s142, 1
      %p146 = scmp.eq.s32.totalorder %s30, 1
      %p147 = scmp.ne.s32.totalorder %s142, %s144
      %p148 = scmp.eq.s32.totalorder %s30, 0
      %p149 = por %p147, %p148
      %p150 = scmp.ne.s32.totalorder %s142, %s144
      %p151 = scmp.eq.s32.totalorder %s35, 1
      %p152 = por %p150, %p151
      %p153 = scmp.ne.s32.totalorder %s144, %s145
      %p154 = scmp.eq.s32.totalorder %s35, 0
      %p155 = por %p153, %p154
      %p156 = scmp.ne.s32.totalorder %s144, %s145
      %p157 = scmp.eq.s32.totalorder %s36, 1
      %p158 = por %p156, %p157
      %p160 = scmp.ne.s32.totalorder %s145, %s159
      %p161 = scmp.eq.s32.totalorder %s36, 0
      %p162 = por %p160, %p161
      %s164 = sadd.s32 %s163, 1
      %p167 = scmp.eq.s32.totalorder %s30, 1
      %p168 = scmp.ne.s32.totalorder %s163, %s165
      %p169 = scmp.eq.s32.totalorder %s30, 0
      %p170 = por %p168, %p169
      %p171 = scmp.ne.s32.totalorder %s163, %s165
      %p172 = scmp.eq.s32.totalorder %s35, 1
      %p173 = por %p171, %p172
      %p174 = scmp.ne.s32.totalorder %s165, %s166
      %p175 = scmp.eq.s32.totalorder %s35, 0
      %p176 = por %p174, %p175
      %p177 = scmp.ne.s32.totalorder %s165, %s166
      %p178 = scmp.eq.s32.totalorder %s36, 1
      %p179 = por %p177, %p178
      %p181 = scmp.ne.s32.totalorder %s166, %s180
      %p182 = scmp.eq.s32.totalorder %s36, 0
      %p183 = por %p181, %p182
      %s185 = sadd.s32 %s184, 1
      %p188 = scmp.eq.s32.totalorder %s30, 1
      %p189 = scmp.ne.s32.totalorder %s184, %s186
      %p190 = scmp.eq.s32.totalorder %s30, 0
      %p191 = por %p189, %p190
      %p192 = scmp.ne.s32.totalorder %s184, %s186
      %p193 = scmp.eq.s32.totalorder %s35, 1
      %p194 = por %p192, %p193
      %p195 = scmp.ne.s32.totalorder %s186, %s187
      %p196 = scmp.eq.s32.totalorder %s35, 0
      %p197 = por %p195, %p196
      %p198 = scmp.ne.s32.totalorder %s186, %s187
      %p199 = scmp.eq.s32.totalorder %s36, 1
      %p200 = por %p198, %p199
      %p202 = scmp.ne.s32.totalorder %s187, %s201
      %p203 = scmp.eq.s32.totalorder %s36, 0
      %p204 = por %p202, %p203
      %s206 = sadd.s32 %s205, 1
      %p209 = scmp.eq.s32.totalorder %s30, 1
      %p210 = scmp.ne.s32.totalorder %s205, %s207
      %p211 = scmp.eq.s32.totalorder %s30, 0
      %p212 = por %p210, %p211
      %p213 = scmp.ne.s32.totalorder %s205, %s207
      %p214 = scmp.eq.s32.totalorder %s35, 1
      %p215 = por %p213, %p214
      %p216 = scmp.ne.s32.totalorder %s207, %s208
      %p217 = scmp.eq.s32.totalorder %s35, 0
      %p218 = por %p216, %p217
      %p219 = scmp.ne.s32.totalorder %s207, %s208
      %p220 = scmp.eq.s32.totalorder %s36, 1
      %p221 = por %p219, %p220
      %p223 = scmp.ne.s32.totalorder %s208, %s222
      %p224 = scmp.eq.s32.totalorder %s36, 0
      %p225 = por %p223, %p224
      %s227 = sadd.s32 %s226, 1
      %p230 = scmp.eq.s32.totalorder %s30, 1
      %p231 = scmp.ne.s32.totalorder %s226, %s228
      %p232 = scmp.eq.s32.totalorder %s30, 0
      %p233 = por %p231, %p232
      %p234 = scmp.ne.s32.totalorder %s226, %s228
      %p235 = scmp.eq.s32.totalorder %s35, 1
      %p236 = por %p234, %p235
      %p237 = scmp.ne.s32.totalorder %s228, %s229
      %p238 = scmp.eq.s32.totalorder %s35, 0
      %p239 = por %p237, %p238
      %p240 = scmp.ne.s32.totalorder %s228, %s229
      %p241 = scmp.eq.s32.totalorder %s36, 1
      %p242 = por %p240, %p241
      %p244 = scmp.ne.s32.totalorder %s229, %s243
      %p245 = scmp.eq.s32.totalorder %s36, 0
      %p246 = por %p244, %p245
      %s248 = sadd.s32 %s247, 1
      %p251 = scmp.eq.s32.totalorder %s30, 1
      %p252 = scmp.ne.s32.totalorder %s247, %s249
      %p253 = scmp.eq.s32.totalorder %s30, 0
      %p254 = por %p252, %p253
      %p255 = scmp.ne.s32.totalorder %s247, %s249
      %p256 = scmp.eq.s32.totalorder %s35, 1
      %p257 = por %p255, %p256
      %p258 = scmp.ne.s32.totalorder %s249, %s250
      %p259 = scmp.eq.s32.totalorder %s35, 0
      %p260 = por %p258, %p259
      %p261 = scmp.ne.s32.totalorder %s249, %s250
      %p262 = scmp.eq.s32.totalorder %s36, 1
      %p263 = por %p261, %p262
      %p265 = scmp.ne.s32.totalorder %s250, %s264
      %p266 = scmp.eq.s32.totalorder %s36, 0
      %p267 = por %p265, %p266
      %s269 = sadd.s32 %s268, 1
      %p272 = scmp.eq.s32.totalorder %s30, 1
      %p273 = scmp.ne.s32.totalorder %s268, %s270
      %p274 = scmp.eq.s32.totalorder %s30, 0
      %p275 = por %p273, %p274
      %p276 = scmp.ne.s32.totalorder %s268, %s270
      %p277 = scmp.eq.s32.totalorder %s35, 1
      %p278 = por %p276, %p277
      %p279 = scmp.ne.s32.totalorder %s270, %s271
      %p280 = scmp.eq.s32.totalorder %s35, 0
      %p281 = por %p279, %p280
      %p282 = scmp.ne.s32.totalorder %s270, %s271
      %p283 = scmp.eq.s32.totalorder %s36, 1
      %p284 = por %p282, %p283
      %p286 = scmp.ne.s32.totalorder %s271, %s285
      %p287 = scmp.eq.s32.totalorder %s36, 0
      %p288 = por %p286, %p287
      %s290 = sadd.s32 %s289, 1
      %p293 = scmp.eq.s32.totalorder %s30, 1
      %p294 = scmp.ne.s32.totalorder %s289, %s291
      %p295 = scmp.eq.s32.totalorder %s30, 0
      %p296 = por %p294, %p295
      %p297 = scmp.ne.s32.totalorder %s289, %s291
      %p298 = scmp.eq.s32.totalorder %s35, 1
      %p299 = por %p297, %p298
      %p300 = scmp.ne.s32.totalorder %s291, %s292
      %p301 = scmp.eq.s32.totalorder %s35, 0
      %p302 = por %p300, %p301
      %p303 = scmp.ne.s32.totalorder %s291, %s292
      %p304 = scmp.eq.s32.totalorder %s36, 1
      %p305 = por %p303, %p304
      %p307 = scmp.ne.s32.totalorder %s292, %s306
      %p308 = scmp.eq.s32.totalorder %s36, 0
      %p309 = por %p307, %p308
      %s311 = sadd.s32 %s310, 1
      %p314 = scmp.eq.s32.totalorder %s30, 1
      %p315 = scmp.ne.s32.totalorder %s310, %s312
      %p316 = scmp.eq.s32.totalorder %s30, 0
      %p317 = por %p315, %p316
      %p318 = scmp.ne.s32.totalorder %s310, %s312
      %p319 = scmp.eq.s32.totalorder %s35, 1
      %p320 = por %p318, %p319
      %p321 = scmp.ne.s32.totalorder %s312, %s313
      %p322 = scmp.eq.s32.totalorder %s35, 0
      %p323 = por %p321, %p322
      %p324 = scmp.ne.s32.totalorder %s312, %s313
      %p325 = scmp.eq.s32.totalorder %s36, 1
      %p326 = por %p324, %p325
      %p328 = scmp.ne.s32.totalorder %s313, %s327
      %p329 = scmp.eq.s32.totalorder %s36, 0
      %p330 = por %p328, %p329
      %s332 = sadd.s32 %s331, 1
      %p335 = scmp.eq.s32.totalorder %s30, 1
      %p336 = scmp.ne.s32.totalorder %s331, %s333
      %p337 = scmp.eq.s32.totalorder %s30, 0
      %p338 = por %p336, %p337
      %p339 = scmp.ne.s32.totalorder %s331, %s333
      %p340 = scmp.eq.s32.totalorder %s35, 1
      %p341 = por %p339, %p340
      %p342 = scmp.ne.s32.totalorder %s333, %s334
      %p343 = scmp.eq.s32.totalorder %s35, 0
      %p344 = por %p342, %p343
      %p345 = scmp.ne.s32.totalorder %s333, %s334
      %p346 = scmp.eq.s32.totalorder %s36, 1
      %p347 = por %p345, %p346
      %p349 = scmp.ne.s32.totalorder %s334, %s348
      %p350 = scmp.eq.s32.totalorder %s36, 0
      %p351 = por %p349, %p350
      %s353 = sadd.s32 %s352, 1
      %p356 = scmp.eq.s32.totalorder %s30, 1
      %p357 = scmp.ne.s32.totalorder %s352, %s354
      %p358 = scmp.eq.s32.totalorder %s30, 0
      %p359 = por %p357, %p358
      %p360 = scmp.ne.s32.totalorder %s352, %s354
      %p361 = scmp.eq.s32.totalorder %s35, 1
      %p362 = por %p360, %p361
      %p363 = scmp.ne.s32.totalorder %s354, %s355
      %p364 = scmp.eq.s32.totalorder %s35, 0
      %p365 = por %p363, %p364
      %p366 = scmp.ne.s32.totalorder %s354, %s355
      %p367 = scmp.eq.s32.totalorder %s36, 1
      %p368 = por %p366, %p367
      %p370 = scmp.ne.s32.totalorder %s355, %s369
      %p371 = scmp.eq.s32.totalorder %s36, 0
      %p372 = por %p370, %p371
      %s374 = sadd.s32 %s373, 1
      %p377 = scmp.eq.s32.totalorder %s30, 1
      %p378 = scmp.ne.s32.totalorder %s373, %s375
      %p379 = scmp.eq.s32.totalorder %s30, 0
      %p380 = por %p378, %p379
      %p381 = scmp.ne.s32.totalorder %s373, %s375
      %p382 = scmp.eq.s32.totalorder %s35, 1
      %p383 = por %p381, %p382
      %p384 = scmp.ne.s32.totalorder %s375, %s376
      %p385 = scmp.eq.s32.totalorder %s35, 0
      %p386 = por %p384, %p385
      %p387 = scmp.ne.s32.totalorder %s375, %s376
      %p388 = scmp.eq.s32.totalorder %s36, 1
      %p389 = por %p387, %p388
      %p391 = scmp.ne.s32.totalorder %s376, %s390
      %p392 = scmp.eq.s32.totalorder %s36, 0
      %p393 = por %p391, %p392
      %s395 = sadd.s32 %s394, 1
      %p398 = scmp.eq.s32.totalorder %s30, 1
      %p399 = scmp.ne.s32.totalorder %s394, %s396
      %p400 = scmp.eq.s32.totalorder %s30, 0
      %p401 = por %p399, %p400
      %p402 = scmp.ne.s32.totalorder %s394, %s396
      %p403 = scmp.eq.s32.totalorder %s35, 1
      %p404 = por %p402, %p403
      %p405 = scmp.ne.s32.totalorder %s396, %s397
      %p406 = scmp.eq.s32.totalorder %s35, 0
      %p407 = por %p405, %p406
      %p408 = scmp.ne.s32.totalorder %s396, %s397
      %p409 = scmp.eq.s32.totalorder %s36, 1
      %p410 = por %p408, %p409
      %p412 = scmp.ne.s32.totalorder %s397, %s411
      %p413 = scmp.eq.s32.totalorder %s36, 0
      %p414 = por %p412, %p413
      %s416 = sadd.s32 %s415, 1
      %p419 = scmp.eq.s32.totalorder %s30, 1
      %p420 = scmp.ne.s32.totalorder %s415, %s417
      %p421 = scmp.eq.s32.totalorder %s30, 0
      %p422 = por %p420, %p421
      %p423 = scmp.ne.s32.totalorder %s415, %s417
      %p424 = scmp.eq.s32.totalorder %s35, 1
      %p425 = por %p423, %p424
      %p426 = scmp.ne.s32.totalorder %s417, %s418
      %p427 = scmp.eq.s32.totalorder %s35, 0
      %p428 = por %p426, %p427
      %p429 = scmp.ne.s32.totalorder %s417, %s418
      %p430 = scmp.eq.s32.totalorder %s36, 1
      %p431 = por %p429, %p430
      %p433 = scmp.ne.s32.totalorder %s418, %s432
      %p434 = scmp.eq.s32.totalorder %s36, 0
      %p435 = por %p433, %p434
      %s437 = sadd.s32 %s436, 1
      %p440 = scmp.eq.s32.totalorder %s30, 1
      %p441 = scmp.ne.s32.totalorder %s436, %s438
      %p442 = scmp.eq.s32.totalorder %s30, 0
      %p443 = por %p441, %p442
      %p444 = scmp.ne.s32.totalorder %s436, %s438
      %p445 = scmp.eq.s32.totalorder %s35, 1
      %p446 = por %p444, %p445
      %p447 = scmp.ne.s32.totalorder %s438, %s439
      %p448 = scmp.eq.s32.totalorder %s35, 0
      %p449 = por %p447, %p448
      %p450 = scmp.ne.s32.totalorder %s438, %s439
      %p451 = scmp.eq.s32.totalorder %s36, 1
      %p452 = por %p450, %p451
      %p454 = scmp.ne.s32.totalorder %s439, %s453
      %p455 = scmp.eq.s32.totalorder %s36, 0
      %p456 = por %p454, %p455
      %s458 = sadd.s32 %s457, 1
      %p461 = scmp.eq.s32.totalorder %s30, 1
      %p462 = scmp.ne.s32.totalorder %s457, %s459
      %p463 = scmp.eq.s32.totalorder %s30, 0
      %p464 = por %p462, %p463
      %p465 = scmp.ne.s32.totalorder %s457, %s459
      %p466 = scmp.eq.s32.totalorder %s35, 1
      %p467 = por %p465, %p466
      %p468 = scmp.ne.s32.totalorder %s459, %s460
      %p469 = scmp.eq.s32.totalorder %s35, 0
      %p470 = por %p468, %p469
      %p471 = scmp.ne.s32.totalorder %s459, %s460
      %p472 = scmp.eq.s32.totalorder %s36, 1
      %p473 = por %p471, %p472
      %p475 = scmp.ne.s32.totalorder %s460, %s474
      %p476 = scmp.eq.s32.totalorder %s36, 0
      %p477 = por %p475, %p476
      %s479 = sadd.s32 %s478, 1
      %p482 = scmp.eq.s32.totalorder %s30, 1
      %p483 = scmp.ne.s32.totalorder %s478, %s480
      %p484 = scmp.eq.s32.totalorder %s30, 0
      %p485 = por %p483, %p484
      %p486 = scmp.ne.s32.totalorder %s478, %s480
      %p487 = scmp.eq.s32.totalorder %s35, 1
      %p488 = por %p486, %p487
      %p489 = scmp.ne.s32.totalorder %s480, %s481
      %p490 = scmp.eq.s32.totalorder %s35, 0
      %p491 = por %p489, %p490
      %p492 = scmp.ne.s32.totalorder %s480, %s481
      %p493 = scmp.eq.s32.totalorder %s36, 1
      %p494 = por %p492, %p493
      %p496 = scmp.ne.s32.totalorder %s481, %s495
      %p497 = scmp.eq.s32.totalorder %s36, 0
      %p498 = por %p496, %p497
      %s499 = ssub.s32 %s30, %s37
      %p500 = scmp.eq.s32.totalorder %s499, 0
      %s502 = sadd.s32 %s501, 1
      %s503 = scalar_select %p500, %s501, %s502
      %p506 = pneg %p500
      %p507 = scmp.eq.s32.totalorder %s30, 1
      %p508 = por %p506, %p507
      %p509 = scmp.ne.s32.totalorder %s501, %s504
      %p510 = scmp.eq.s32.totalorder %s30, 0
      %p511 = por %p509, %p510
      %p512 = scmp.ne.s32.totalorder %s501, %s504
      %p513 = scmp.eq.s32.totalorder %s35, 1
      %p514 = por %p512, %p513
      %p515 = scmp.ne.s32.totalorder %s504, %s505
      %p516 = scmp.eq.s32.totalorder %s35, 0
      %p517 = por %p515, %p516
      %p518 = scmp.ne.s32.totalorder %s504, %s505
      %p519 = scmp.eq.s32.totalorder %s36, 1
      %p520 = por %p518, %p519
      %p522 = scmp.ne.s32.totalorder %s505, %s521
      %p523 = scmp.eq.s32.totalorder %s36, 0
      %p524 = por %p522, %p523
      %p525 = scmp.le.s32.totalorder 1, %s30
      %p526 = scmp.lt.s32.totalorder %s30, 3
      %p527 = pnand %p525, %p526
      %p528 = pneg %p527
      // Predicated region
      $region9: #{tpu_custom_call.1} parent=5 // pred_check
        _
      $region10: #{tpu_custom_call.1} parent=5 // pred_check_branch
        %530 = sbr.rel (%p527) target = $region12
      $region11: #{tpu_custom_call.1} parent=5 // pred_region
        %s531 = ssub.s32 %s30, 1
        // Predicated region
        $region13: #{tpu_custom_call.1} parent=11 // pred_check
          %p532 = pneg %p155
        $region14: #{tpu_custom_call.1} parent=11 // pred_check_branch
          %534 = sbr.rel (%p532) target = $region16
        $region15: #{tpu_custom_call.1} parent=11 // pred_region
          _
        $region16: #{tpu_custom_call.1} parent=11 // pred_fallthru
          _
        // Predicated region
        $region17: #{tpu_custom_call.1} parent=11 // pred_check
          %p535 = pneg %p176
        $region18: #{tpu_custom_call.1} parent=11 // pred_check_branch
          %537 = sbr.rel (%p535) target = $region20
        $region19: #{tpu_custom_call.1} parent=11 // pred_region
          _
        $region20: #{tpu_custom_call.1} parent=11 // pred_fallthru
          _
        // Predicated region
        $region21: #{tpu_custom_call.1} parent=11 // pred_check
          %p538 = pneg %p197
        $region22: #{tpu_custom_call.1} parent=11 // pred_check_branch
          %540 = sbr.rel (%p538) target = $region24
        $region23: #{tpu_custom_call.1} parent=11 // pred_region
          _
        $region24: #{tpu_custom_call.1} parent=11 // pred_fallthru
          _
        // Predicated region
        $region25: #{tpu_custom_call.1} parent=11 // pred_check
          %p541 = pneg %p218
        $region26: #{tpu_custom_call.1} parent=11 // pred_check_branch
          %543 = sbr.rel (%p541) target = $region28
        $region27: #{tpu_custom_call.1} parent=11 // pred_region
          _
        $region28: #{tpu_custom_call.1} parent=11 // pred_fallthru
          _
        // Predicated region
        $region29: #{tpu_custom_call.1} parent=11 // pred_check
          %p544 = pneg %p239
        $region30: #{tpu_custom_call.1} parent=11 // pred_check_branch
          %546 = sbr.rel (%p544) target = $region32
        $region31: #{tpu_custom_call.1} parent=11 // pred_region
          _
        $region32: #{tpu_custom_call.1} parent=11 // pred_fallthru
          _
        // Predicated region
        $region33: #{tpu_custom_call.1} parent=11 // pred_check
          %p547 = pneg %p260
        $region34: #{tpu_custom_call.1} parent=11 // pred_check_branch
          %549 = sbr.rel (%p547) target = $region36
        $region35: #{tpu_custom_call.1} parent=11 // pred_region
          _
        $region36: #{tpu_custom_call.1} parent=11 // pred_fallthru
          _
        // Predicated region
        $region37: #{tpu_custom_call.1} parent=11 // pred_check
          %p550 = pneg %p281
        $region38: #{tpu_custom_call.1} parent=11 // pred_check_branch
          %552 = sbr.rel (%p550) target = $region40
        $region39: #{tpu_custom_call.1} parent=11 // pred_region
          _
        $region40: #{tpu_custom_call.1} parent=11 // pred_fallthru
          _
        // Predicated region
        $region41: #{tpu_custom_call.1} parent=11 // pred_check
          %p553 = pneg %p302
        $region42: #{tpu_custom_call.1} parent=11 // pred_check_branch
          %555 = sbr.rel (%p553) target = $region44
        $region43: #{tpu_custom_call.1} parent=11 // pred_region
          _
        $region44: #{tpu_custom_call.1} parent=11 // pred_fallthru
          _
        // Predicated region
        $region45: #{tpu_custom_call.1} parent=11 // pred_check
          %p556 = pneg %p323
        $region46: #{tpu_custom_call.1} parent=11 // pred_check_branch
          %558 = sbr.rel (%p556) target = $region48
        $region47: #{tpu_custom_call.1} parent=11 // pred_region
          _
        $region48: #{tpu_custom_call.1} parent=11 // pred_fallthru
          _
        // Predicated region
        $region49: #{tpu_custom_call.1} parent=11 // pred_check
          %p559 = pneg %p344
        $region50: #{tpu_custom_call.1} parent=11 // pred_check_branch
          %561 = sbr.rel (%p559) target = $region52
        $region51: #{tpu_custom_call.1} parent=11 // pred_region
          _
        $region52: #{tpu_custom_call.1} parent=11 // pred_fallthru
          _
        // Predicated region
        $region53: #{tpu_custom_call.1} parent=11 // pred_check
          %p562 = pneg %p365
        $region54: #{tpu_custom_call.1} parent=11 // pred_check_branch
          %564 = sbr.rel (%p562) target = $region56
        $region55: #{tpu_custom_call.1} parent=11 // pred_region
          _
        $region56: #{tpu_custom_call.1} parent=11 // pred_fallthru
          _
        // Predicated region
        $region57: #{tpu_custom_call.1} parent=11 // pred_check
          %p565 = pneg %p386
        $region58: #{tpu_custom_call.1} parent=11 // pred_check_branch
          %567 = sbr.rel (%p565) target = $region60
        $region59: #{tpu_custom_call.1} parent=11 // pred_region
          _
        $region60: #{tpu_custom_call.1} parent=11 // pred_fallthru
          _
        // Predicated region
        $region61: #{tpu_custom_call.1} parent=11 // pred_check
          %p568 = pneg %p407
        $region62: #{tpu_custom_call.1} parent=11 // pred_check_branch
          %570 = sbr.rel (%p568) target = $region64
        $region63: #{tpu_custom_call.1} parent=11 // pred_region
          _
        $region64: #{tpu_custom_call.1} parent=11 // pred_fallthru
          _
        // Predicated region
        $region65: #{tpu_custom_call.1} parent=11 // pred_check
          %p571 = pneg %p428
        $region66: #{tpu_custom_call.1} parent=11 // pred_check_branch
          %573 = sbr.rel (%p571) target = $region68
        $region67: #{tpu_custom_call.1} parent=11 // pred_region
          _
        $region68: #{tpu_custom_call.1} parent=11 // pred_fallthru
          _
        // Predicated region
        $region69: #{tpu_custom_call.1} parent=11 // pred_check
          %p574 = pneg %p449
        $region70: #{tpu_custom_call.1} parent=11 // pred_check_branch
          %576 = sbr.rel (%p574) target = $region72
        $region71: #{tpu_custom_call.1} parent=11 // pred_region
          _
        $region72: #{tpu_custom_call.1} parent=11 // pred_fallthru
          _
        // Predicated region
        $region73: #{tpu_custom_call.1} parent=11 // pred_check
          %p577 = pneg %p470
        $region74: #{tpu_custom_call.1} parent=11 // pred_check_branch
          %579 = sbr.rel (%p577) target = $region76
        $region75: #{tpu_custom_call.1} parent=11 // pred_region
          _
        $region76: #{tpu_custom_call.1} parent=11 // pred_fallthru
          _
        // Predicated region
        $region77: #{tpu_custom_call.1} parent=11 // pred_check
          %p580 = pneg %p491
        $region78: #{tpu_custom_call.1} parent=11 // pred_check_branch
          %582 = sbr.rel (%p580) target = $region80
        $region79: #{tpu_custom_call.1} parent=11 // pred_region
          _
        $region80: #{tpu_custom_call.1} parent=11 // pred_fallthru
          _
      $region12: #{tpu_custom_call.1} parent=5 // pred_fallthru
        _
      %p583 = scmp.lt.s32.totalorder %s30, 2
      // Predicated region
      $region81: #{tpu_custom_call.1} parent=5 // pred_check
        %p584 = pneg %p583
      $region82: #{tpu_custom_call.1} parent=5 // pred_check_branch
        %586 = sbr.rel (%p584) target = $region84
      $region83: #{tpu_custom_call.1} parent=5 // pred_region
        // Predicated region
        $region85: #{tpu_custom_call.1} parent=83 // pred_check
          %p587 = pneg %p50
        $region86: #{tpu_custom_call.1} parent=83 // pred_check_branch
          %589 = sbr.rel (%p587) target = $region88
        $region87: #{tpu_custom_call.1} parent=83 // pred_region
          %p590 = scmp.lt.s32.totalorder %s30, 1
          %s591 = scalar_select %p590, %s30, 1
          %s592 = smul.addr %s591, 18
          %s593 = smul.addr %s592, 8
          %s594 = scalar_lea.vmem %s0, %s593
        $region88: #{tpu_custom_call.1} parent=83 // pred_fallthru
          _
        // Predicated region
        $region89: #{tpu_custom_call.1} parent=83 // pred_check
          %p595 = pneg %p76
        $region90: #{tpu_custom_call.1} parent=83 // pred_check_branch
          %597 = sbr.rel (%p595) target = $region92
        $region91: #{tpu_custom_call.1} parent=83 // pred_region
          %p598 = scmp.lt.s32.totalorder %s30, 1
          %s599 = scalar_select %p598, %s30, 1
          %s600 = smul.addr %s599, 18
          %s601 = smul.addr %s600, 8
          %s602 = scalar_lea.vmem %s1, %s601
        $region92: #{tpu_custom_call.1} parent=83 // pred_fallthru
          _
        // Predicated region
        $region93: #{tpu_custom_call.1} parent=83 // pred_check
          %p603 = pneg %p102
        $region94: #{tpu_custom_call.1} parent=83 // pred_check_branch
          %605 = sbr.rel (%p603) target = $region96
        $region95: #{tpu_custom_call.1} parent=83 // pred_region
          %p606 = scmp.lt.s32.totalorder %s30, 1
          %s607 = scalar_select %p606, %s30, 1
          %s608 = smul.addr %s607, 18
          %s609 = smul.addr %s608, 8
          %s610 = scalar_lea.vmem %s2, %s609
        $region96: #{tpu_custom_call.1} parent=83 // pred_fallthru
          _
        // Predicated region
        $region97: #{tpu_custom_call.1} parent=83 // pred_check
          %p611 = pneg %p128
        $region98: #{tpu_custom_call.1} parent=83 // pred_check_branch
          %613 = sbr.rel (%p611) target = $region100
        $region99: #{tpu_custom_call.1} parent=83 // pred_region
          %p614 = scmp.lt.s32.totalorder %s30, 1
          %s615 = scalar_select %p614, %s30, 1
          %s616 = smul.addr %s615, 18
          %s617 = smul.addr %s616, 8
          %s618 = scalar_lea.vmem %s3, %s617
        $region100: #{tpu_custom_call.1} parent=83 // pred_fallthru
          _
      $region84: #{tpu_custom_call.1} parent=5 // pred_fallthru
        _
      %p619 = scmp.le.s32.totalorder 1, %s30
      %p620 = scmp.lt.s32.totalorder %s30, 3
      %p621 = pnand %p619, %p620
      %p622 = pneg %p621
      // Predicated region
      $region101: #{tpu_custom_call.1} parent=5 // pred_check
        _
      $region102: #{tpu_custom_call.1} parent=5 // pred_check_branch
        %624 = sbr.rel (%p621) target = $region104
      $region103: #{tpu_custom_call.1} parent=5 // pred_region
        %s625 = ssub.s32 %s30, 1
        %p626 = scmp.lt.s32.totalorder %s35, 1
        %s627 = scalar_select %p626, %s35, 1
        %s628 = smul.addr %s627, 18
        %s629 = smul.addr %s628, 8
        %s630 = scalar_lea.vmem %s0, %s629
        %p631 = pneg %p56
        %p632 = pneg %p53
        %p633 = scmp.lt.s32.totalorder %s35, 1
        %s634 = scalar_select %p633, %s35, 1
        %s635 = smul.addr %s634, 18
        %s636 = smul.addr %s635, 8
        %s637 = scalar_lea.vmem %s1, %s636
        %p638 = pneg %p82
        %p639 = pneg %p79
        %p640 = scmp.lt.s32.totalorder %s35, 1
        %s641 = scalar_select %p640, %s35, 1
        %s642 = smul.addr %s641, 18
        %s643 = smul.addr %s642, 8
        %s644 = scalar_lea.vmem %s2, %s643
        %p645 = pneg %p108
        %p646 = pneg %p105
        %p647 = scmp.lt.s32.totalorder %s35, 1
        %s648 = scalar_select %p647, %s35, 1
        %s649 = smul.addr %s648, 18
        %s650 = smul.addr %s649, 8
        %s651 = scalar_lea.vmem %s3, %s650
        %p652 = pneg %p134
        %p653 = pneg %p131
        %p654 = pneg %p155
        %p655 = pneg %p152
        %p656 = pneg %p176
        %p657 = pneg %p173
        %p658 = pneg %p197
        %p659 = pneg %p194
        %p660 = pneg %p218
        %p661 = pneg %p215
        %p662 = pneg %p239
        %p663 = pneg %p236
        %p664 = pneg %p260
        %p665 = pneg %p257
        %p666 = pneg %p281
        %p667 = pneg %p278
        %p668 = pneg %p302
        %p669 = pneg %p299
        %p670 = pneg %p323
        %p671 = pneg %p320
        %p672 = pneg %p344
        %p673 = pneg %p341
        %p674 = pneg %p365
        %p675 = pneg %p362
        %p676 = pneg %p386
        %p677 = pneg %p383
        %p678 = pneg %p407
        %p679 = pneg %p404
        %p680 = pneg %p428
        %p681 = pneg %p425
        %p682 = pneg %p449
        %p683 = pneg %p446
        %p684 = pneg %p470
        %p685 = pneg %p467
        %p686 = pneg %p491
        %p687 = pneg %p488
        %p688 = pneg %p517
        %p689 = pneg %p514
        %s690 = sand.u32 %s504, 1
        %s691 = scalar_lea.sflag [#allocation7], %s690
        %s692 = sand.u32 %s504, 1
        %s693 = smul.addr %s692, 64
        %s694 = scalar_lea.vmem [#allocation6], %s693
        %p695 = scmp.lt.s32.totalorder %s35, 1
        %s696 = scalar_select %p695, %s35, 1
        %s697 = smul.addr %s696, 18
        %s698 = smul.addr %s697, 8
        %s699 = scalar_lea.vmem %s0, %s698
        %p700 = scmp.lt.s32.totalorder %s35, 1
        %s701 = scalar_select %p700, %s35, 1
        %s702 = smul.addr %s701, 18
        %s703 = smul.addr %s702, 8
        %s704 = scalar_lea.vmem %s1, %s703
        %p705 = scmp.lt.s32.totalorder %s35, 1
        %s706 = scalar_select %p705, %s35, 1
        %s707 = smul.addr %s706, 18
        %s708 = smul.addr %s707, 8
        %s709 = scalar_lea.vmem %s2, %s708
        %p710 = scmp.lt.s32.totalorder %s35, 1
        %s711 = scalar_select %p710, %s35, 1
        %s712 = smul.addr %s711, 18
        %s713 = smul.addr %s712, 8
        %s714 = scalar_lea.vmem %s3, %s713
        %v715 = vld [vmem:[%s699] sm:$0xff]
        %v716 = vld [vmem:[%s699 + $0x8] sm:$0xff]
        %v717 = vld [vmem:[%s699 + $0x10] sm:$0xff]
        %v718 = vld [vmem:[%s699 + $0x18] sm:$0xff]
        %v719 = vld [vmem:[%s699 + $0x20] sm:$0xff]
        %v720 = vld [vmem:[%s699 + $0x28] sm:$0xff]
        %v721 = vld [vmem:[%s699 + $0x30] sm:$0xff]
        %v722 = vld [vmem:[%s699 + $0x38] sm:$0xff]
        %v723 = vld [vmem:[%s699 + $0x40] sm:$0xff]
        %v724 = vld [vmem:[%s699 + $0x48] sm:$0xff]
        %v725 = vld [vmem:[%s699 + $0x50] sm:$0xff]
        %v726 = vld [vmem:[%s699 + $0x58] sm:$0xff]
        %v727 = vld [vmem:[%s699 + $0x60] sm:$0xff]
        %v728 = vld [vmem:[%s699 + $0x68] sm:$0xff]
        %v729 = vld [vmem:[%s699 + $0x70] sm:$0xff]
        %v730 = vld [vmem:[%s699 + $0x78] sm:$0xff]
        %v731 = vld [vmem:[%s699 + $0x80] sm:$0xff]
        %v732 = vld [vmem:[%s699 + $0x88] sm:$0xff]
        %v733 = vld [vmem:[%s8] sm:$0xf]
        %vm734 = vcmask 31744
        %v736 = vsel %vm734, %v715, 0
        %v739 = vsel %vm734, %v716, 0
        %v742 = vsel %vm734, %v717, 0
        %v745 = vsel %vm734, %v718, 0
        %v748 = vsel %vm734, %v719, 0
        %v751 = vsel %vm734, %v720, 0
        %v754 = vsel %vm734, %v721, 0
        %v757 = vsel %vm734, %v722, 0
        %v760 = vsel %vm734, %v723, 0
        %v763 = vsel %vm734, %v724, 0
        %v766 = vsel %vm734, %v725, 0
        %v769 = vsel %vm734, %v726, 0
        %v772 = vsel %vm734, %v727, 0
        %v775 = vsel %vm734, %v728, 0
        %v778 = vsel %vm734, %v729, 0
        %v781 = vsel %vm734, %v730, 0
        %v784 = vsel %vm734, %v731, 0
        %v787 = vsel %vm734, %v732, 0
        %vm789 = vcmask 1043456
        %v791 = vsel %vm789, %v733, 0
        %793 = vmatprep.subr.mxu0 0.0
        %794 = vmatpush1.msra.mxu0 %v791
        %795 = vmatprep.subr.mxu0 0.0
        %796 = vmatpush1.msra.mxu0 0.0
        %797 = vmatprep.subr.mxu0 0.0
        %798 = vmatpush1.msra.mxu0 0.0
        %799 = vmatprep.subr.mxu0 0.0
        %800 = vmatpush1.msra.mxu0 0.0
        %801 = vmatprep.subr.mxu0 0.0
        %802 = vmatpush1.msra.mxu0 0.0
        %803 = vmatprep.subr.mxu0 0.0
        %804 = vmatpush1.msra.mxu0 0.0
        %805 = vmatprep.subr.mxu0 0.0
        %806 = vmatpush1.msra.mxu0 0.0
        %807 = vmatprep.subr.mxu0 0.0
        %808 = vmatpush1.msra.mxu0 0.0
        %809 = vmatprep.subr.mxu0 0.0
        %810 = vmatpush1.msra.mxu0 0.0
        %811 = vmatprep.subr.mxu0 0.0
        %812 = vmatpush1.msra.mxu0 0.0
        %813 = vmatprep.subr.mxu0 0.0
        %814 = vmatpush1.msra.mxu0 0.0
        %815 = vmatprep.subr.mxu0 0.0
        %816 = vmatpush1.msra.mxu0 0.0
        %817 = vmatprep.subr.mxu0 0.0
        %818 = vmatpush1.msra.mxu0 0.0
        %819 = vmatprep.subr.mxu0 0.0
        %820 = vmatpush1.msra.mxu0 0.0
        %821 = vmatprep.subr.mxu0 0.0
        %822 = vmatpush1.msra.mxu0 0.0
        %823 = vmatprep.subr.mxu0 0.0
        %824 = vmatpush1.msra.mxu0 0.0
        %825 = vmatprep.subr.mxu0 0.0
        %826 = vmatpush1.msra.mxu0 0.0
        %827 = vmatprep.subr.mxu0 0.0
        %828 = vmatpush1.msra.mxu0 0.0
        %829 = vmatprep.subr.mxu0 0.0
        %830 = vmatpush1.msra.mxu0 0.0
        %831 = vmatprep.subr.mxu0 0.0
        %832 = vmatpush1.msra.mxu0 0.0
        %833 = vmatprep.subr.mxu0 0.0
        %834 = vmatpush1.msra.mxu0 0.0
        %835 = vmatprep.subr.mxu0 0.0
        %836 = vmatpush1.msra.mxu0 0.0
        %837 = vmatprep.subr.mxu0 0.0
        %838 = vmatpush1.msra.mxu0 0.0
        %839 = vmatprep.subr.mxu0 0.0
        %840 = vmatpush1.msra.mxu0 0.0
        %841 = vmatprep.subr.mxu0 0.0
        %842 = vmatpush1.msra.mxu0 0.0
        %843 = vmatprep.subr.mxu0 0.0
        %844 = vmatpush1.msra.mxu0 0.0
        %845 = vmatprep.subr.mxu0 0.0
        %846 = vmatpush1.msra.mxu0 0.0
        %847 = vmatprep.subr.mxu0 0.0
        %848 = vmatpush1.msra.mxu0 0.0
        %849 = vmatprep.subr.mxu0 0.0
        %850 = vmatpush1.msra.mxu0 0.0
        %851 = vmatprep.subr.mxu0 0.0
        %852 = vmatpush1.msra.mxu0 0.0
        %853 = vmatprep.subr.mxu0 0.0
        %854 = vmatpush1.msra.mxu0 0.0
        %855 = vmatprep.subr.mxu0 0.0
        %856 = vmatpush1.msra.mxu0 0.0
        %857 = vmatprep.mubr.f32.mxu0 0.0
        %858 = vmatmul.mubr.f32.gmra.mrb[0].mxu0 %v736
        %v859 = vpop.f32.mrb[0].mxu0
        %v860 = vadd.f32 0.0, %v859
        %v861 = vpop.f32.mrb[0].mxu0
        %862 = vmatprep.mubr.f32.mxu0 0.0
        %863 = vmatmul.mubr.f32.gmra.mrb[0].mxu0 %v739
        %v864 = vpop.f32.mrb[0].mxu0
        %v865 = vadd.f32 0.0, %v864
        %v866 = vpop.f32.mrb[0].mxu0
        %867 = vmatprep.mubr.f32.mxu0 0.0
        %868 = vmatmul.mubr.f32.gmra.mrb[0].mxu0 %v742
        %v869 = vpop.f32.mrb[0].mxu0
        %v870 = vadd.f32 0.0, %v869
        %v871 = vpop.f32.mrb[0].mxu0
        %872 = vmatprep.mubr.f32.mxu0 0.0
        %873 = vmatmul.mubr.f32.gmra.mrb[0].mxu0 %v745
        %v874 = vpop.f32.mrb[0].mxu0
        %v875 = vadd.f32 0.0, %v874
        %v876 = vpop.f32.mrb[0].mxu0
        %877 = vmatprep.mubr.f32.mxu0 0.0
        %878 = vmatmul.mubr.f32.gmra.mrb[0].mxu0 %v748
        %v879 = vpop.f32.mrb[0].mxu0
        %v880 = vadd.f32 0.0, %v879
        %v881 = vpop.f32.mrb[0].mxu0
        %882 = vmatprep.mubr.f32.mxu0 0.0
        %883 = vmatmul.mubr.f32.gmra.mrb[0].mxu0 %v751
        %v884 = vpop.f32.mrb[0].mxu0
        %v885 = vadd.f32 0.0, %v884
        %v886 = vpop.f32.mrb[0].mxu0
        %887 = vmatprep.mubr.f32.mxu0 0.0
        %888 = vmatmul.mubr.f32.gmra.mrb[0].mxu0 %v754
        %v889 = vpop.f32.mrb[0].mxu0
        %v890 = vadd.f32 0.0, %v889
        %v891 = vpop.f32.mrb[0].mxu0
        %892 = vmatprep.mubr.f32.mxu0 0.0
        %893 = vmatmul.mubr.f32.gmra.mrb[0].mxu0 %v757
        %v894 = vpop.f32.mrb[0].mxu0
        %v895 = vadd.f32 0.0, %v894
        %v896 = vpop.f32.mrb[0].mxu0
        %897 = vmatprep.mubr.f32.mxu0 0.0
        %898 = vmatmul.mubr.f32.gmra.mrb[0].mxu0 %v760
        %v899 = vpop.f32.mrb[0].mxu0
        %v900 = vadd.f32 0.0, %v899
        %v901 = vpop.f32.mrb[0].mxu0
        %902 = vmatprep.mubr.f32.mxu0 0.0
        %903 = vmatmul.mubr.f32.gmra.mrb[0].mxu0 %v763
        %v904 = vpop.f32.mrb[0].mxu0
        %v905 = vadd.f32 0.0, %v904
        %v906 = vpop.f32.mrb[0].mxu0
        %907 = vmatprep.mubr.f32.mxu0 0.0
        %908 = vmatmul.mubr.f32.gmra.mrb[0].mxu0 %v766
        %v909 = vpop.f32.mrb[0].mxu0
        %v910 = vadd.f32 0.0, %v909
        %v911 = vpop.f32.mrb[0].mxu0
        %912 = vmatprep.mubr.f32.mxu0 0.0
        %913 = vmatmul.mubr.f32.gmra.mrb[0].mxu0 %v769
        %v914 = vpop.f32.mrb[0].mxu0
        %v915 = vadd.f32 0.0, %v914
        %v916 = vpop.f32.mrb[0].mxu0
        %917 = vmatprep.mubr.f32.mxu0 0.0
        %918 = vmatmul.mubr.f32.gmra.mrb[0].mxu0 %v772
        %v919 = vpop.f32.mrb[0].mxu0
        %v920 = vadd.f32 0.0, %v919
        %v921 = vpop.f32.mrb[0].mxu0
        %922 = vmatprep.mubr.f32.mxu0 0.0
        %923 = vmatmul.mubr.f32.gmra.mrb[0].mxu0 %v775
        %v924 = vpop.f32.mrb[0].mxu0
        %v925 = vadd.f32 0.0, %v924
        %v926 = vpop.f32.mrb[0].mxu0
        %927 = vmatprep.mubr.f32.mxu0 0.0
        %928 = vmatmul.mubr.f32.gmra.mrb[0].mxu0 %v778
        %v929 = vpop.f32.mrb[0].mxu0
        %v930 = vadd.f32 0.0, %v929
        %v931 = vpop.f32.mrb[0].mxu0
        %932 = vmatprep.mubr.f32.mxu0 0.0
        %933 = vmatmul.mubr.f32.gmra.mrb[0].mxu0 %v781
        %v934 = vpop.f32.mrb[0].mxu0
        %v935 = vadd.f32 0.0, %v934
        %v936 = vpop.f32.mrb[0].mxu0
        %937 = vmatprep.mubr.f32.mxu0 0.0
        %938 = vmatmul.mubr.f32.gmra.mrb[0].mxu0 %v784
        %v939 = vpop.f32.mrb[0].mxu0
        %v940 = vadd.f32 0.0, %v939
        %v941 = vpop.f32.mrb[0].mxu0
        %942 = vmatprep.mubr.f32.mxu0 0.0
        %943 = vmatmul.mubr.f32.gmra.mrb[0].mxu0 %v787
        %v944 = vpop.f32.mrb[0].mxu0
        %v945 = vadd.f32 0.0, %v944
        %v946 = vpop.f32.mrb[0].mxu0
        %947 = vdwg.mxu0
        %v948 = vld [vmem:[%s9] sm:$0x1]
        %v950 = vlaneseq
        %v951 = vshrl.u32 %v950, 7
        %v952 = vsub.s32 0, %v951
        %v953 = vrot.slane %v948, %v952
        %v955 = vmul.f32 %v860, %v953
        %v956 = vmul.f32 %v865, %v953
        %v957 = vmul.f32 %v870, %v953
        %v958 = vmul.f32 %v875, %v953
        %v959 = vmul.f32 %v880, %v953
        %v960 = vmul.f32 %v885, %v953
        %v961 = vmul.f32 %v890, %v953
        %v962 = vmul.f32 %v895, %v953
        %v963 = vmul.f32 %v900, %v953
        %v964 = vmul.f32 %v905, %v953
        %v965 = vmul.f32 %v910, %v953
        %v966 = vmul.f32 %v915, %v953
        %v967 = vmul.f32 %v920, %v953
        %v968 = vmul.f32 %v925, %v953
        %v969 = vmul.f32 %v930, %v953
        %v970 = vmul.f32 %v935, %v953
        %v971 = vmul.f32 %v940, %v953
        %v972 = vmul.f32 %v945, %v953
        %v973 = vld [vmem:[%s10] sm:$0x1]
        %v975 = vlaneseq
        %v976 = vshrl.u32 %v975, 7
        %v977 = vsub.s32 0, %v976
        %v978 = vrot.slane %v973, %v977
        %v980 = vadd.f32 %v955, %v978
        %v981 = vadd.f32 %v956, %v978
        %v982 = vadd.f32 %v957, %v978
        %v983 = vadd.f32 %v958, %v978
        %v984 = vadd.f32 %v959, %v978
        %v985 = vadd.f32 %v960, %v978
        %v986 = vadd.f32 %v961, %v978
        %v987 = vadd.f32 %v962, %v978
        %v988 = vadd.f32 %v963, %v978
        %v989 = vadd.f32 %v964, %v978
        %v990 = vadd.f32 %v965, %v978
        %v991 = vadd.f32 %v966, %v978
        %v992 = vadd.f32 %v967, %v978
        %v993 = vadd.f32 %v968, %v978
        %v994 = vadd.f32 %v969, %v978
        %v995 = vadd.f32 %v970, %v978
        %v996 = vadd.f32 %v971, %v978
        %v997 = vadd.f32 %v972, %v978
        %v998 = vxor.u32 %v980, 2147483648
        %v999 = vxor.u32 %v981, 2147483648
        %v1000 = vxor.u32 %v982, 2147483648
        %v1001 = vxor.u32 %v983, 2147483648
        %v1002 = vxor.u32 %v984, 2147483648
        %v1003 = vxor.u32 %v985, 2147483648
        %v1004 = vxor.u32 %v986, 2147483648
        %v1005 = vxor.u32 %v987, 2147483648
        %v1006 = vxor.u32 %v988, 2147483648
        %v1007 = vxor.u32 %v989, 2147483648
        %v1008 = vxor.u32 %v990, 2147483648
        %v1009 = vxor.u32 %v991, 2147483648
        %v1010 = vxor.u32 %v992, 2147483648
        %v1011 = vxor.u32 %v993, 2147483648
        %v1012 = vxor.u32 %v994, 2147483648
        %v1013 = vxor.u32 %v995, 2147483648
        %v1014 = vxor.u32 %v996, 2147483648
        %v1015 = vxor.u32 %v997, 2147483648
        %v1016 = vmul.f32 %v998, 1.442695
        %v1017 = vpow.pop %v1016
        %v1018 = vmul.f32 %v999, 1.442695
        %v1019 = vpow.pop %v1018
        %v1020 = vmul.f32 %v1000, 1.442695
        %v1021 = vpow.pop %v1020
        %v1022 = vmul.f32 %v1001, 1.442695
        %v1023 = vpow.pop %v1022
        %v1024 = vmul.f32 %v1002, 1.442695
        %v1025 = vpow.pop %v1024
        %v1026 = vmul.f32 %v1003, 1.442695
        %v1027 = vpow.pop %v1026
        %v1028 = vmul.f32 %v1004, 1.442695
        %v1029 = vpow.pop %v1028
        %v1030 = vmul.f32 %v1005, 1.442695
        %v1031 = vpow.pop %v1030
        %v1032 = vmul.f32 %v1006, 1.442695
        %v1033 = vpow.pop %v1032
        %v1034 = vmul.f32 %v1007, 1.442695
        %v1035 = vpow.pop %v1034
        %v1036 = vmul.f32 %v1008, 1.442695
        %v1037 = vpow.pop %v1036
        %v1038 = vmul.f32 %v1009, 1.442695
        %v1039 = vpow.pop %v1038
        %v1040 = vmul.f32 %v1010, 1.442695
        %v1041 = vpow.pop %v1040
        %v1042 = vmul.f32 %v1011, 1.442695
        %v1043 = vpow.pop %v1042
        %v1044 = vmul.f32 %v1012, 1.442695
        %v1045 = vpow.pop %v1044
        %v1046 = vmul.f32 %v1013, 1.442695
        %v1047 = vpow.pop %v1046
        %v1048 = vmul.f32 %v1014, 1.442695
        %v1049 = vpow.pop %v1048
        %v1050 = vmul.f32 %v1015, 1.442695
        %v1051 = vpow.pop %v1050
        %v1052 = vadd.f32 %v1017, 1.0
        %v1053 = vadd.f32 %v1019, 1.0
        %v1054 = vadd.f32 %v1021, 1.0
        %v1055 = vadd.f32 %v1023, 1.0
        %v1056 = vadd.f32 %v1025, 1.0
        %v1057 = vadd.f32 %v1027, 1.0
        %v1058 = vadd.f32 %v1029, 1.0
        %v1059 = vadd.f32 %v1031, 1.0
        %v1060 = vadd.f32 %v1033, 1.0
        %v1061 = vadd.f32 %v1035, 1.0
        %v1062 = vadd.f32 %v1037, 1.0
        %v1063 = vadd.f32 %v1039, 1.0
        %v1064 = vadd.f32 %v1041, 1.0
        %v1065 = vadd.f32 %v1043, 1.0
        %v1066 = vadd.f32 %v1045, 1.0
        %v1067 = vadd.f32 %v1047, 1.0
        %v1068 = vadd.f32 %v1049, 1.0
        %v1069 = vadd.f32 %v1051, 1.0
        %v1070 = vrcp.pop %v1052
        %v1071 = vmul.f32 1.0, %v1070
        %v1072 = vrcp.pop %v1053
        %v1073 = vmul.f32 1.0, %v1072
        %v1074 = vrcp.pop %v1054
        %v1075 = vmul.f32 1.0, %v1074
        %v1076 = vrcp.pop %v1055
        %v1077 = vmul.f32 1.0, %v1076
        %v1078 = vrcp.pop %v1056
        %v1079 = vmul.f32 1.0, %v1078
        %v1080 = vrcp.pop %v1057
        %v1081 = vmul.f32 1.0, %v1080
        %v1082 = vrcp.pop %v1058
        %v1083 = vmul.f32 1.0, %v1082
        %v1084 = vrcp.pop %v1059
        %v1085 = vmul.f32 1.0, %v1084
        %v1086 = vrcp.pop %v1060
        %v1087 = vmul.f32 1.0, %v1086
        %v1088 = vrcp.pop %v1061
        %v1089 = vmul.f32 1.0, %v1088
        %v1090 = vrcp.pop %v1062
        %v1091 = vmul.f32 1.0, %v1090
        %v1092 = vrcp.pop %v1063
        %v1093 = vmul.f32 1.0, %v1092
        %v1094 = vrcp.pop %v1064
        %v1095 = vmul.f32 1.0, %v1094
        %v1096 = vrcp.pop %v1065
        %v1097 = vmul.f32 1.0, %v1096
        %v1098 = vrcp.pop %v1066
        %v1099 = vmul.f32 1.0, %v1098
        %v1100 = vrcp.pop %v1067
        %v1101 = vmul.f32 1.0, %v1100
        %v1102 = vrcp.pop %v1068
        %v1103 = vmul.f32 1.0, %v1102
        %v1104 = vrcp.pop %v1069
        %v1105 = vmul.f32 1.0, %v1104
        %v1106 = vmul.f32 %v980, %v1071
        %v1107 = vmul.f32 %v981, %v1073
        %v1108 = vmul.f32 %v982, %v1075
        %v1109 = vmul.f32 %v983, %v1077
        %v1110 = vmul.f32 %v984, %v1079
        %v1111 = vmul.f32 %v985, %v1081
        %v1112 = vmul.f32 %v986, %v1083
        %v1113 = vmul.f32 %v987, %v1085
        %v1114 = vmul.f32 %v988, %v1087
        %v1115 = vmul.f32 %v989, %v1089
        %v1116 = vmul.f32 %v990, %v1091
        %v1117 = vmul.f32 %v991, %v1093
        %v1118 = vmul.f32 %v992, %v1095
        %v1119 = vmul.f32 %v993, %v1097
        %v1120 = vmul.f32 %v994, %v1099
        %v1121 = vmul.f32 %v995, %v1101
        %v1122 = vmul.f32 %v996, %v1103
        %v1123 = vmul.f32 %v997, %v1105
        %v1124 = vld [vmem:[%s4] sm:$0xff]
        %v1125 = vld [vmem:[%s4 + $0x8] sm:$0xff]
        %v1126 = vld [vmem:[%s4 + $0x10] sm:$0xff]
        %v1127 = vld [vmem:[%s4 + $0x18] sm:$0xff]
        %v1128 = vld [vmem:[%s4 + $0x20] sm:$0xff]
        %v1129 = vld [vmem:[%s4 + $0x28] sm:$0xff]
        %v1130 = vld [vmem:[%s4 + $0x30] sm:$0xff]
        %v1131 = vld [vmem:[%s4 + $0x38] sm:$0xff]
        %v1132 = vld [vmem:[%s4 + $0x40] sm:$0xff]
        %v1133 = vld [vmem:[%s4 + $0x48] sm:$0xff]
        %v1134 = vld [vmem:[%s4 + $0x50] sm:$0xff]
        %v1135 = vld [vmem:[%s4 + $0x58] sm:$0xff]
        %v1136 = vld [vmem:[%s4 + $0x60] sm:$0xff]
        %v1137 = vld [vmem:[%s4 + $0x68] sm:$0xff]
        %v1138 = vld [vmem:[%s4 + $0x70] sm:$0xff]
        %v1139 = vld [vmem:[%s4 + $0x78] sm:$0xff]
        %v1140 = vld [vmem:[%s4 + $0x80] sm:$0xff]
        %v1141 = vld [vmem:[%s4 + $0x88] sm:$0xff]
        %1143 = vset.pattern.permute.xlu0 0
        %1144 = vperm.xlu0 %1143, %v1124
        %v1145 = vpop.permute.xlu0 %1144
        %1148 = vset.pattern.permute.xlu0 0
        %1149 = vperm.xlu0 %1148, %v1125
        %v1150 = vpop.permute.xlu0 %1149
        %1153 = vset.pattern.permute.xlu0 0
        %1154 = vperm.xlu0 %1153, %v1126
        %v1155 = vpop.permute.xlu0 %1154
        %1158 = vset.pattern.permute.xlu0 0
        %1159 = vperm.xlu0 %1158, %v1127
        %v1160 = vpop.permute.xlu0 %1159
        %1163 = vset.pattern.permute.xlu0 0
        %1164 = vperm.xlu0 %1163, %v1128
        %v1165 = vpop.permute.xlu0 %1164
        %1168 = vset.pattern.permute.xlu0 0
        %1169 = vperm.xlu0 %1168, %v1129
        %v1170 = vpop.permute.xlu0 %1169
        %1173 = vset.pattern.permute.xlu0 0
        %1174 = vperm.xlu0 %1173, %v1130
        %v1175 = vpop.permute.xlu0 %1174
        %1178 = vset.pattern.permute.xlu0 0
        %1179 = vperm.xlu0 %1178, %v1131
        %v1180 = vpop.permute.xlu0 %1179
        %1183 = vset.pattern.permute.xlu0 0
        %1184 = vperm.xlu0 %1183, %v1132
        %v1185 = vpop.permute.xlu0 %1184
        %1188 = vset.pattern.permute.xlu0 0
        %1189 = vperm.xlu0 %1188, %v1133
        %v1190 = vpop.permute.xlu0 %1189
        %1193 = vset.pattern.permute.xlu0 0
        %1194 = vperm.xlu0 %1193, %v1134
        %v1195 = vpop.permute.xlu0 %1194
        %1198 = vset.pattern.permute.xlu0 0
        %1199 = vperm.xlu0 %1198, %v1135
        %v1200 = vpop.permute.xlu0 %1199
        %1203 = vset.pattern.permute.xlu0 0
        %1204 = vperm.xlu0 %1203, %v1136
        %v1205 = vpop.permute.xlu0 %1204
        %1208 = vset.pattern.permute.xlu0 0
        %1209 = vperm.xlu0 %1208, %v1137
        %v1210 = vpop.permute.xlu0 %1209
        %1213 = vset.pattern.permute.xlu0 0
        %1214 = vperm.xlu0 %1213, %v1138
        %v1215 = vpop.permute.xlu0 %1214
        %1218 = vset.pattern.permute.xlu0 0
        %1219 = vperm.xlu0 %1218, %v1139
        %v1220 = vpop.permute.xlu0 %1219
        %1223 = vset.pattern.permute.xlu0 0
        %1224 = vperm.xlu0 %1223, %v1140
        %v1225 = vpop.permute.xlu0 %1224
        %1228 = vset.pattern.permute.xlu0 0
        %1229 = vperm.xlu0 %1228, %v1141
        %v1230 = vpop.permute.xlu0 %1229
        %v1232 = vmul.f32 %v1106, %v1145
        %v1233 = vmul.f32 %v1107, %v1150
        %v1234 = vmul.f32 %v1108, %v1155
        %v1235 = vmul.f32 %v1109, %v1160
        %v1236 = vmul.f32 %v1110, %v1165
        %v1237 = vmul.f32 %v1111, %v1170
        %v1238 = vmul.f32 %v1112, %v1175
        %v1239 = vmul.f32 %v1113, %v1180
        %v1240 = vmul.f32 %v1114, %v1185
        %v1241 = vmul.f32 %v1115, %v1190
        %v1242 = vmul.f32 %v1116, %v1195
        %v1243 = vmul.f32 %v1117, %v1200
        %v1244 = vmul.f32 %v1118, %v1205
        %v1245 = vmul.f32 %v1119, %v1210
        %v1246 = vmul.f32 %v1120, %v1215
        %v1247 = vmul.f32 %v1121, %v1220
        %v1248 = vmul.f32 %v1122, %v1225
        %v1249 = vmul.f32 %v1123, %v1230
        %vm1250 = vcmask 130048
        %1251 = vst.msk [vmem:[#allocation2] sm:$0xff] %vm1250, %v1232
        %1252 = vst.msk [vmem:[#allocation2 + $0x8] sm:$0xff] %vm1250, %v1233
        %1253 = vst.msk [vmem:[#allocation2 + $0x10] sm:$0xff] %vm1250, %v1234
        %1254 = vst.msk [vmem:[#allocation2 + $0x18] sm:$0xff] %vm1250, %v1235
        %1255 = vst.msk [vmem:[#allocation2 + $0x20] sm:$0xff] %vm1250, %v1236
        %1256 = vst.msk [vmem:[#allocation2 + $0x28] sm:$0xff] %vm1250, %v1237
        %1257 = vst.msk [vmem:[#allocation2 + $0x30] sm:$0xff] %vm1250, %v1238
        %1258 = vst.msk [vmem:[#allocation2 + $0x38] sm:$0xff] %vm1250, %v1239
        %1259 = vst.msk [vmem:[#allocation2 + $0x40] sm:$0xff] %vm1250, %v1240
        %1260 = vst.msk [vmem:[#allocation2 + $0x48] sm:$0xff] %vm1250, %v1241
        %1261 = vst.msk [vmem:[#allocation2 + $0x50] sm:$0xff] %vm1250, %v1242
        %1262 = vst.msk [vmem:[#allocation2 + $0x58] sm:$0xff] %vm1250, %v1243
        %1263 = vst.msk [vmem:[#allocation2 + $0x60] sm:$0xff] %vm1250, %v1244
        %1264 = vst.msk [vmem:[#allocation2 + $0x68] sm:$0xff] %vm1250, %v1245
        %1265 = vst.msk [vmem:[#allocation2 + $0x70] sm:$0xff] %vm1250, %v1246
        %1266 = vst.msk [vmem:[#allocation2 + $0x78] sm:$0xff] %vm1250, %v1247
        %1267 = vst.msk [vmem:[#allocation2 + $0x80] sm:$0xff] %vm1250, %v1248
        %1268 = vst.msk [vmem:[#allocation2 + $0x88] sm:$0xff] %vm1250, %v1249
        %v1269 = vld [vmem:[%s704] sm:$0xff]
        %v1270 = vld [vmem:[%s704 + $0x8] sm:$0xff]
        %v1271 = vld [vmem:[%s704 + $0x10] sm:$0xff]
        %v1272 = vld [vmem:[%s704 + $0x18] sm:$0xff]
        %v1273 = vld [vmem:[%s704 + $0x20] sm:$0xff]
        %v1274 = vld [vmem:[%s704 + $0x28] sm:$0xff]
        %v1275 = vld [vmem:[%s704 + $0x30] sm:$0xff]
        %v1276 = vld [vmem:[%s704 + $0x38] sm:$0xff]
        %v1277 = vld [vmem:[%s704 + $0x40] sm:$0xff]
        %v1278 = vld [vmem:[%s704 + $0x48] sm:$0xff]
        %v1279 = vld [vmem:[%s704 + $0x50] sm:$0xff]
        %v1280 = vld [vmem:[%s704 + $0x58] sm:$0xff]
        %v1281 = vld [vmem:[%s704 + $0x60] sm:$0xff]
        %v1282 = vld [vmem:[%s704 + $0x68] sm:$0xff]
        %v1283 = vld [vmem:[%s704 + $0x70] sm:$0xff]
        %v1284 = vld [vmem:[%s704 + $0x78] sm:$0xff]
        %v1285 = vld [vmem:[%s704 + $0x80] sm:$0xff]
        %v1286 = vld [vmem:[%s704 + $0x88] sm:$0xff]
        %v1287 = vld [vmem:[%s8] sm:$0xf]
        %v1289 = vsel %vm734, %v1269, 0
        %v1292 = vsel %vm734, %v1270, 0
        %v1295 = vsel %vm734, %v1271, 0
        %v1298 = vsel %vm734, %v1272, 0
        %v1301 = vsel %vm734, %v1273, 0
        %v1304 = vsel %vm734, %v1274, 0
        %v1307 = vsel %vm734, %v1275, 0
        %v1310 = vsel %vm734, %v1276, 0
        %v1313 = vsel %vm734, %v1277, 0
        %v1316 = vsel %vm734, %v1278, 0
        %v1319 = vsel %vm734, %v1279, 0
        %v1322 = vsel %vm734, %v1280, 0
        %v1325 = vsel %vm734, %v1281, 0
        %v1328 = vsel %vm734, %v1282, 0
        %v1331 = vsel %vm734, %v1283, 0
        %v1334 = vsel %vm734, %v1284, 0
        %v1337 = vsel %vm734, %v1285, 0
        %v1340 = vsel %vm734, %v1286, 0
        %v1343 = vsel %vm789, %v1287, 0
        %1345 = vmatprep.subr.mxu0 0.0
        %1346 = vmatpush1.msra.mxu0 %v1343
        %1347 = vmatprep.subr.mxu0 0.0
        %1348 = vmatpush1.msra.mxu0 0.0
        %1349 = vmatprep.subr.mxu0 0.0
        %1350 = vmatpush1.msra.mxu0 0.0
        %1351 = vmatprep.subr.mxu0 0.0
        %1352 = vmatpush1.msra.mxu0 0.0
        %1353 = vmatprep.subr.mxu0 0.0
        %1354 = vmatpush1.msra.mxu0 0.0
        %1355 = vmatprep.subr.mxu0 0.0
        %1356 = vmatpush1.msra.mxu0 0.0
        %1357 = vmatprep.subr.mxu0 0.0
        %1358 = vmatpush1.msra.mxu0 0.0
        %1359 = vmatprep.subr.mxu0 0.0
        %1360 = vmatpush1.msra.mxu0 0.0
        %1361 = vmatprep.subr.mxu0 0.0
        %1362 = vmatpush1.msra.mxu0 0.0
        %1363 = vmatprep.subr.mxu0 0.0
        %1364 = vmatpush1.msra.mxu0 0.0
        %1365 = vmatprep.subr.mxu0 0.0
        %1366 = vmatpush1.msra.mxu0 0.0
        %1367 = vmatprep.subr.mxu0 0.0
        %1368 = vmatpush1.msra.mxu0 0.0
        %1369 = vmatprep.subr.mxu0 0.0
        %1370 = vmatpush1.msra.mxu0 0.0
        %1371 = vmatprep.subr.mxu0 0.0
        %1372 = vmatpush1.msra.mxu0 0.0
        %1373 = vmatprep.subr.mxu0 0.0
        %1374 = vmatpush1.msra.mxu0 0.0
        %1375 = vmatprep.subr.mxu0 0.0
        %1376 = vmatpush1.msra.mxu0 0.0
        %1377 = vmatprep.subr.mxu0 0.0
        %1378 = vmatpush1.msra.mxu0 0.0
        %1379 = vmatprep.subr.mxu0 0.0
        %1380 = vmatpush1.msra.mxu0 0.0
        %1381 = vmatprep.subr.mxu0 0.0
        %1382 = vmatpush1.msra.mxu0 0.0
        %1383 = vmatprep.subr.mxu0 0.0
        %1384 = vmatpush1.msra.mxu0 0.0
        %1385 = vmatprep.subr.mxu0 0.0
        %1386 = vmatpush1.msra.mxu0 0.0
        %1387 = vmatprep.subr.mxu0 0.0
        %1388 = vmatpush1.msra.mxu0 0.0
        %1389 = vmatprep.subr.mxu0 0.0
        %1390 = vmatpush1.msra.mxu0 0.0
        %1391 = vmatprep.subr.mxu0 0.0
        %1392 = vmatpush1.msra.mxu0 0.0
        %1393 = vmatprep.subr.mxu0 0.0
        %1394 = vmatpush1.msra.mxu0 0.0
        %1395 = vmatprep.subr.mxu0 0.0
        %1396 = vmatpush1.msra.mxu0 0.0
        %1397 = vmatprep.subr.mxu0 0.0
        %1398 = vmatpush1.msra.mxu0 0.0
        %1399 = vmatprep.subr.mxu0 0.0
        %1400 = vmatpush1.msra.mxu0 0.0
        %1401 = vmatprep.subr.mxu0 0.0
        %1402 = vmatpush1.msra.mxu0 0.0
        %1403 = vmatprep.subr.mxu0 0.0
        %1404 = vmatpush1.msra.mxu0 0.0
        %1405 = vmatprep.subr.mxu0 0.0
        %1406 = vmatpush1.msra.mxu0 0.0
        %1407 = vmatprep.subr.mxu0 0.0
        %1408 = vmatpush1.msra.mxu0 0.0
        %1409 = vmatprep.mubr.f32.mxu0 0.0
        %1410 = vmatmul.mubr.f32.gmra.mrb[0].mxu0 %v1289
        %v1411 = vpop.f32.mrb[0].mxu0
        %v1412 = vadd.f32 0.0, %v1411
        %v1413 = vpop.f32.mrb[0].mxu0
        %1414 = vmatprep.mubr.f32.mxu0 0.0
        %1415 = vmatmul.mubr.f32.gmra.mrb[0].mxu0 %v1292
        %v1416 = vpop.f32.mrb[0].mxu0
        %v1417 = vadd.f32 0.0, %v1416
        %v1418 = vpop.f32.mrb[0].mxu0
        %1419 = vmatprep.mubr.f32.mxu0 0.0
        %1420 = vmatmul.mubr.f32.gmra.mrb[0].mxu0 %v1295
        %v1421 = vpop.f32.mrb[0].mxu0
        %v1422 = vadd.f32 0.0, %v1421
        %v1423 = vpop.f32.mrb[0].mxu0
        %1424 = vmatprep.mubr.f32.mxu0 0.0
        %1425 = vmatmul.mubr.f32.gmra.mrb[0].mxu0 %v1298
        %v1426 = vpop.f32.mrb[0].mxu0
        %v1427 = vadd.f32 0.0, %v1426
        %v1428 = vpop.f32.mrb[0].mxu0
        %1429 = vmatprep.mubr.f32.mxu0 0.0
        %1430 = vmatmul.mubr.f32.gmra.mrb[0].mxu0 %v1301
        %v1431 = vpop.f32.mrb[0].mxu0
        %v1432 = vadd.f32 0.0, %v1431
        %v1433 = vpop.f32.mrb[0].mxu0
        %1434 = vmatprep.mubr.f32.mxu0 0.0
        %1435 = vmatmul.mubr.f32.gmra.mrb[0].mxu0 %v1304
        %v1436 = vpop.f32.mrb[0].mxu0
        %v1437 = vadd.f32 0.0, %v1436
        %v1438 = vpop.f32.mrb[0].mxu0
        %1439 = vmatprep.mubr.f32.mxu0 0.0
        %1440 = vmatmul.mubr.f32.gmra.mrb[0].mxu0 %v1307
        %v1441 = vpop.f32.mrb[0].mxu0
        %v1442 = vadd.f32 0.0, %v1441
        %v1443 = vpop.f32.mrb[0].mxu0
        %1444 = vmatprep.mubr.f32.mxu0 0.0
        %1445 = vmatmul.mubr.f32.gmra.mrb[0].mxu0 %v1310
        %v1446 = vpop.f32.mrb[0].mxu0
        %v1447 = vadd.f32 0.0, %v1446
        %v1448 = vpop.f32.mrb[0].mxu0
        %1449 = vmatprep.mubr.f32.mxu0 0.0
        %1450 = vmatmul.mubr.f32.gmra.mrb[0].mxu0 %v1313
        %v1451 = vpop.f32.mrb[0].mxu0
        %v1452 = vadd.f32 0.0, %v1451
        %v1453 = vpop.f32.mrb[0].mxu0
        %1454 = vmatprep.mubr.f32.mxu0 0.0
        %1455 = vmatmul.mubr.f32.gmra.mrb[0].mxu0 %v1316
        %v1456 = vpop.f32.mrb[0].mxu0
        %v1457 = vadd.f32 0.0, %v1456
        %v1458 = vpop.f32.mrb[0].mxu0
        %1459 = vmatprep.mubr.f32.mxu0 0.0
        %1460 = vmatmul.mubr.f32.gmra.mrb[0].mxu0 %v1319
        %v1461 = vpop.f32.mrb[0].mxu0
        %v1462 = vadd.f32 0.0, %v1461
        %v1463 = vpop.f32.mrb[0].mxu0
        %1464 = vmatprep.mubr.f32.mxu0 0.0
        %1465 = vmatmul.mubr.f32.gmra.mrb[0].mxu0 %v1322
        %v1466 = vpop.f32.mrb[0].mxu0
        %v1467 = vadd.f32 0.0, %v1466
        %v1468 = vpop.f32.mrb[0].mxu0
        %1469 = vmatprep.mubr.f32.mxu0 0.0
        %1470 = vmatmul.mubr.f32.gmra.mrb[0].mxu0 %v1325
        %v1471 = vpop.f32.mrb[0].mxu0
        %v1472 = vadd.f32 0.0, %v1471
        %v1473 = vpop.f32.mrb[0].mxu0
        %1474 = vmatprep.mubr.f32.mxu0 0.0
        %1475 = vmatmul.mubr.f32.gmra.mrb[0].mxu0 %v1328
        %v1476 = vpop.f32.mrb[0].mxu0
        %v1477 = vadd.f32 0.0, %v1476
        %v1478 = vpop.f32.mrb[0].mxu0
        %1479 = vmatprep.mubr.f32.mxu0 0.0
        %1480 = vmatmul.mubr.f32.gmra.mrb[0].mxu0 %v1331
        %v1481 = vpop.f32.mrb[0].mxu0
        %v1482 = vadd.f32 0.0, %v1481
        %v1483 = vpop.f32.mrb[0].mxu0
        %1484 = vmatprep.mubr.f32.mxu0 0.0
        %1485 = vmatmul.mubr.f32.gmra.mrb[0].mxu0 %v1334
        %v1486 = vpop.f32.mrb[0].mxu0
        %v1487 = vadd.f32 0.0, %v1486
        %v1488 = vpop.f32.mrb[0].mxu0
        %1489 = vmatprep.mubr.f32.mxu0 0.0
        %1490 = vmatmul.mubr.f32.gmra.mrb[0].mxu0 %v1337
        %v1491 = vpop.f32.mrb[0].mxu0
        %v1492 = vadd.f32 0.0, %v1491
        %v1493 = vpop.f32.mrb[0].mxu0
        %1494 = vmatprep.mubr.f32.mxu0 0.0
        %1495 = vmatmul.mubr.f32.gmra.mrb[0].mxu0 %v1340
        %v1496 = vpop.f32.mrb[0].mxu0
        %v1497 = vadd.f32 0.0, %v1496
        %v1498 = vpop.f32.mrb[0].mxu0
        %1499 = vdwg.mxu0
        %v1500 = vld [vmem:[%s9] sm:$0x1]
        %v1502 = vlaneseq
        %v1503 = vshrl.u32 %v1502, 7
        %v1504 = vsub.s32 0, %v1503
        %v1505 = vrot.slane %v1500, %v1504
        %v1507 = vmul.f32 %v1412, %v1505
        %v1508 = vmul.f32 %v1417, %v1505
        %v1509 = vmul.f32 %v1422, %v1505
        %v1510 = vmul.f32 %v1427, %v1505
        %v1511 = vmul.f32 %v1432, %v1505
        %v1512 = vmul.f32 %v1437, %v1505
        %v1513 = vmul.f32 %v1442, %v1505
        %v1514 = vmul.f32 %v1447, %v1505
        %v1515 = vmul.f32 %v1452, %v1505
        %v1516 = vmul.f32 %v1457, %v1505
        %v1517 = vmul.f32 %v1462, %v1505
        %v1518 = vmul.f32 %v1467, %v1505
        %v1519 = vmul.f32 %v1472, %v1505
        %v1520 = vmul.f32 %v1477, %v1505
        %v1521 = vmul.f32 %v1482, %v1505
        %v1522 = vmul.f32 %v1487, %v1505
        %v1523 = vmul.f32 %v1492, %v1505
        %v1524 = vmul.f32 %v1497, %v1505
        %v1525 = vld [vmem:[%s10] sm:$0x1]
        %v1527 = vlaneseq
        %v1528 = vshrl.u32 %v1527, 7
        %v1529 = vsub.s32 0, %v1528
        %v1530 = vrot.slane %v1525, %v1529
        %v1532 = vadd.f32 %v1507, %v1530
        %v1533 = vadd.f32 %v1508, %v1530
        %v1534 = vadd.f32 %v1509, %v1530
        %v1535 = vadd.f32 %v1510, %v1530
        %v1536 = vadd.f32 %v1511, %v1530
        %v1537 = vadd.f32 %v1512, %v1530
        %v1538 = vadd.f32 %v1513, %v1530
        %v1539 = vadd.f32 %v1514, %v1530
        %v1540 = vadd.f32 %v1515, %v1530
        %v1541 = vadd.f32 %v1516, %v1530
        %v1542 = vadd.f32 %v1517, %v1530
        %v1543 = vadd.f32 %v1518, %v1530
        %v1544 = vadd.f32 %v1519, %v1530
        %v1545 = vadd.f32 %v1520, %v1530
        %v1546 = vadd.f32 %v1521, %v1530
        %v1547 = vadd.f32 %v1522, %v1530
        %v1548 = vadd.f32 %v1523, %v1530
        %v1549 = vadd.f32 %v1524, %v1530
        %v1550 = vxor.u32 %v1532, 2147483648
        %v1551 = vxor.u32 %v1533, 2147483648
        %v1552 = vxor.u32 %v1534, 2147483648
        %v1553 = vxor.u32 %v1535, 2147483648
        %v1554 = vxor.u32 %v1536, 2147483648
        %v1555 = vxor.u32 %v1537, 2147483648
        %v1556 = vxor.u32 %v1538, 2147483648
        %v1557 = vxor.u32 %v1539, 2147483648
        %v1558 = vxor.u32 %v1540, 2147483648
        %v1559 = vxor.u32 %v1541, 2147483648
        %v1560 = vxor.u32 %v1542, 2147483648
        %v1561 = vxor.u32 %v1543, 2147483648
        %v1562 = vxor.u32 %v1544, 2147483648
        %v1563 = vxor.u32 %v1545, 2147483648
        %v1564 = vxor.u32 %v1546, 2147483648
        %v1565 = vxor.u32 %v1547, 2147483648
        %v1566 = vxor.u32 %v1548, 2147483648
        %v1567 = vxor.u32 %v1549, 2147483648
        %v1568 = vmul.f32 %v1550, 1.442695
        %v1569 = vpow.pop %v1568
        %v1570 = vmul.f32 %v1551, 1.442695
        %v1571 = vpow.pop %v1570
        %v1572 = vmul.f32 %v1552, 1.442695
        %v1573 = vpow.pop %v1572
        %v1574 = vmul.f32 %v1553, 1.442695
        %v1575 = vpow.pop %v1574
        %v1576 = vmul.f32 %v1554, 1.442695
        %v1577 = vpow.pop %v1576
        %v1578 = vmul.f32 %v1555, 1.442695
        %v1579 = vpow.pop %v1578
        %v1580 = vmul.f32 %v1556, 1.442695
        %v1581 = vpow.pop %v1580
        %v1582 = vmul.f32 %v1557, 1.442695
        %v1583 = vpow.pop %v1582
        %v1584 = vmul.f32 %v1558, 1.442695
        %v1585 = vpow.pop %v1584
        %v1586 = vmul.f32 %v1559, 1.442695
        %v1587 = vpow.pop %v1586
        %v1588 = vmul.f32 %v1560, 1.442695
        %v1589 = vpow.pop %v1588
        %v1590 = vmul.f32 %v1561, 1.442695
        %v1591 = vpow.pop %v1590
        %v1592 = vmul.f32 %v1562, 1.442695
        %v1593 = vpow.pop %v1592
        %v1594 = vmul.f32 %v1563, 1.442695
        %v1595 = vpow.pop %v1594
        %v1596 = vmul.f32 %v1564, 1.442695
        %v1597 = vpow.pop %v1596
        %v1598 = vmul.f32 %v1565, 1.442695
        %v1599 = vpow.pop %v1598
        %v1600 = vmul.f32 %v1566, 1.442695
        %v1601 = vpow.pop %v1600
        %v1602 = vmul.f32 %v1567, 1.442695
        %v1603 = vpow.pop %v1602
        %v1604 = vadd.f32 %v1569, 1.0
        %v1605 = vadd.f32 %v1571, 1.0
        %v1606 = vadd.f32 %v1573, 1.0
        %v1607 = vadd.f32 %v1575, 1.0
        %v1608 = vadd.f32 %v1577, 1.0
        %v1609 = vadd.f32 %v1579, 1.0
        %v1610 = vadd.f32 %v1581, 1.0
        %v1611 = vadd.f32 %v1583, 1.0
        %v1612 = vadd.f32 %v1585, 1.0
        %v1613 = vadd.f32 %v1587, 1.0
        %v1614 = vadd.f32 %v1589, 1.0
        %v1615 = vadd.f32 %v1591, 1.0
        %v1616 = vadd.f32 %v1593, 1.0
        %v1617 = vadd.f32 %v1595, 1.0
        %v1618 = vadd.f32 %v1597, 1.0
        %v1619 = vadd.f32 %v1599, 1.0
        %v1620 = vadd.f32 %v1601, 1.0
        %v1621 = vadd.f32 %v1603, 1.0
        %v1622 = vrcp.pop %v1604
        %v1623 = vmul.f32 1.0, %v1622
        %v1624 = vrcp.pop %v1605
        %v1625 = vmul.f32 1.0, %v1624
        %v1626 = vrcp.pop %v1606
        %v1627 = vmul.f32 1.0, %v1626
        %v1628 = vrcp.pop %v1607
        %v1629 = vmul.f32 1.0, %v1628
        %v1630 = vrcp.pop %v1608
        %v1631 = vmul.f32 1.0, %v1630
        %v1632 = vrcp.pop %v1609
        %v1633 = vmul.f32 1.0, %v1632
        %v1634 = vrcp.pop %v1610
        %v1635 = vmul.f32 1.0, %v1634
        %v1636 = vrcp.pop %v1611
        %v1637 = vmul.f32 1.0, %v1636
        %v1638 = vrcp.pop %v1612
        %v1639 = vmul.f32 1.0, %v1638
        %v1640 = vrcp.pop %v1613
        %v1641 = vmul.f32 1.0, %v1640
        %v1642 = vrcp.pop %v1614
        %v1643 = vmul.f32 1.0, %v1642
        %v1644 = vrcp.pop %v1615
        %v1645 = vmul.f32 1.0, %v1644
        %v1646 = vrcp.pop %v1616
        %v1647 = vmul.f32 1.0, %v1646
        %v1648 = vrcp.pop %v1617
        %v1649 = vmul.f32 1.0, %v1648
        %v1650 = vrcp.pop %v1618
        %v1651 = vmul.f32 1.0, %v1650
        %v1652 = vrcp.pop %v1619
        %v1653 = vmul.f32 1.0, %v1652
        %v1654 = vrcp.pop %v1620
        %v1655 = vmul.f32 1.0, %v1654
        %v1656 = vrcp.pop %v1621
        %v1657 = vmul.f32 1.0, %v1656
        %v1658 = vmul.f32 %v1532, %v1623
        %v1659 = vmul.f32 %v1533, %v1625
        %v1660 = vmul.f32 %v1534, %v1627
        %v1661 = vmul.f32 %v1535, %v1629
        %v1662 = vmul.f32 %v1536, %v1631
        %v1663 = vmul.f32 %v1537, %v1633
        %v1664 = vmul.f32 %v1538, %v1635
        %v1665 = vmul.f32 %v1539, %v1637
        %v1666 = vmul.f32 %v1540, %v1639
        %v1667 = vmul.f32 %v1541, %v1641
        %v1668 = vmul.f32 %v1542, %v1643
        %v1669 = vmul.f32 %v1543, %v1645
        %v1670 = vmul.f32 %v1544, %v1647
        %v1671 = vmul.f32 %v1545, %v1649
        %v1672 = vmul.f32 %v1546, %v1651
        %v1673 = vmul.f32 %v1547, %v1653
        %v1674 = vmul.f32 %v1548, %v1655
        %v1675 = vmul.f32 %v1549, %v1657
        %v1676 = vld [vmem:[%s5] sm:$0xff]
        %v1677 = vld [vmem:[%s5 + $0x8] sm:$0xff]
        %v1678 = vld [vmem:[%s5 + $0x10] sm:$0xff]
        %v1679 = vld [vmem:[%s5 + $0x18] sm:$0xff]
        %v1680 = vld [vmem:[%s5 + $0x20] sm:$0xff]
        %v1681 = vld [vmem:[%s5 + $0x28] sm:$0xff]
        %v1682 = vld [vmem:[%s5 + $0x30] sm:$0xff]
        %v1683 = vld [vmem:[%s5 + $0x38] sm:$0xff]
        %v1684 = vld [vmem:[%s5 + $0x40] sm:$0xff]
        %v1685 = vld [vmem:[%s5 + $0x48] sm:$0xff]
        %v1686 = vld [vmem:[%s5 + $0x50] sm:$0xff]
        %v1687 = vld [vmem:[%s5 + $0x58] sm:$0xff]
        %v1688 = vld [vmem:[%s5 + $0x60] sm:$0xff]
        %v1689 = vld [vmem:[%s5 + $0x68] sm:$0xff]
        %v1690 = vld [vmem:[%s5 + $0x70] sm:$0xff]
        %v1691 = vld [vmem:[%s5 + $0x78] sm:$0xff]
        %v1692 = vld [vmem:[%s5 + $0x80] sm:$0xff]
        %v1693 = vld [vmem:[%s5 + $0x88] sm:$0xff]
        %1695 = vset.pattern.permute.xlu0 0
        %1696 = vperm.xlu0 %1695, %v1676
        %v1697 = vpop.permute.xlu0 %1696
        %1700 = vset.pattern.permute.xlu0 0
        %1701 = vperm.xlu0 %1700, %v1677
        %v1702 = vpop.permute.xlu0 %1701
        %1705 = vset.pattern.permute.xlu0 0
        %1706 = vperm.xlu0 %1705, %v1678
        %v1707 = vpop.permute.xlu0 %1706
        %1710 = vset.pattern.permute.xlu0 0
        %1711 = vperm.xlu0 %1710, %v1679
        %v1712 = vpop.permute.xlu0 %1711
        %1715 = vset.pattern.permute.xlu0 0
        %1716 = vperm.xlu0 %1715, %v1680
        %v1717 = vpop.permute.xlu0 %1716
        %1720 = vset.pattern.permute.xlu0 0
        %1721 = vperm.xlu0 %1720, %v1681
        %v1722 = vpop.permute.xlu0 %1721
        %1725 = vset.pattern.permute.xlu0 0
        %1726 = vperm.xlu0 %1725, %v1682
        %v1727 = vpop.permute.xlu0 %1726
        %1730 = vset.pattern.permute.xlu0 0
        %1731 = vperm.xlu0 %1730, %v1683
        %v1732 = vpop.permute.xlu0 %1731
        %1735 = vset.pattern.permute.xlu0 0
        %1736 = vperm.xlu0 %1735, %v1684
        %v1737 = vpop.permute.xlu0 %1736
        %1740 = vset.pattern.permute.xlu0 0
        %1741 = vperm.xlu0 %1740, %v1685
        %v1742 = vpop.permute.xlu0 %1741
        %1745 = vset.pattern.permute.xlu0 0
        %1746 = vperm.xlu0 %1745, %v1686
        %v1747 = vpop.permute.xlu0 %1746
        %1750 = vset.pattern.permute.xlu0 0
        %1751 = vperm.xlu0 %1750, %v1687
        %v1752 = vpop.permute.xlu0 %1751
        %1755 = vset.pattern.permute.xlu0 0
        %1756 = vperm.xlu0 %1755, %v1688
        %v1757 = vpop.permute.xlu0 %1756
        %1760 = vset.pattern.permute.xlu0 0
        %1761 = vperm.xlu0 %1760, %v1689
        %v1762 = vpop.permute.xlu0 %1761
        %1765 = vset.pattern.permute.xlu0 0
        %1766 = vperm.xlu0 %1765, %v1690
        %v1767 = vpop.permute.xlu0 %1766
        %1770 = vset.pattern.permute.xlu0 0
        %1771 = vperm.xlu0 %1770, %v1691
        %v1772 = vpop.permute.xlu0 %1771
        %1775 = vset.pattern.permute.xlu0 0
        %1776 = vperm.xlu0 %1775, %v1692
        %v1777 = vpop.permute.xlu0 %1776
        %1780 = vset.pattern.permute.xlu0 0
        %1781 = vperm.xlu0 %1780, %v1693
        %v1782 = vpop.permute.xlu0 %1781
        %v1784 = vmul.f32 %v1658, %v1697
        %v1785 = vmul.f32 %v1659, %v1702
        %v1786 = vmul.f32 %v1660, %v1707
        %v1787 = vmul.f32 %v1661, %v1712
        %v1788 = vmul.f32 %v1662, %v1717
        %v1789 = vmul.f32 %v1663, %v1722
        %v1790 = vmul.f32 %v1664, %v1727
        %v1791 = vmul.f32 %v1665, %v1732
        %v1792 = vmul.f32 %v1666, %v1737
        %v1793 = vmul.f32 %v1667, %v1742
        %v1794 = vmul.f32 %v1668, %v1747
        %v1795 = vmul.f32 %v1669, %v1752
        %v1796 = vmul.f32 %v1670, %v1757
        %v1797 = vmul.f32 %v1671, %v1762
        %v1798 = vmul.f32 %v1672, %v1767
        %v1799 = vmul.f32 %v1673, %v1772
        %v1800 = vmul.f32 %v1674, %v1777
        %v1801 = vmul.f32 %v1675, %v1782
        %1802 = vst.msk [vmem:[#allocation3] sm:$0xff] %vm1250, %v1784
        %1803 = vst.msk [vmem:[#allocation3 + $0x8] sm:$0xff] %vm1250, %v1785
        %1804 = vst.msk [vmem:[#allocation3 + $0x10] sm:$0xff] %vm1250, %v1786
        %1805 = vst.msk [vmem:[#allocation3 + $0x18] sm:$0xff] %vm1250, %v1787
        %1806 = vst.msk [vmem:[#allocation3 + $0x20] sm:$0xff] %vm1250, %v1788
        %1807 = vst.msk [vmem:[#allocation3 + $0x28] sm:$0xff] %vm1250, %v1789
        %1808 = vst.msk [vmem:[#allocation3 + $0x30] sm:$0xff] %vm1250, %v1790
        %1809 = vst.msk [vmem:[#allocation3 + $0x38] sm:$0xff] %vm1250, %v1791
        %1810 = vst.msk [vmem:[#allocation3 + $0x40] sm:$0xff] %vm1250, %v1792
        %1811 = vst.msk [vmem:[#allocation3 + $0x48] sm:$0xff] %vm1250, %v1793
        %1812 = vst.msk [vmem:[#allocation3 + $0x50] sm:$0xff] %vm1250, %v1794
        %1813 = vst.msk [vmem:[#allocation3 + $0x58] sm:$0xff] %vm1250, %v1795
        %1814 = vst.msk [vmem:[#allocation3 + $0x60] sm:$0xff] %vm1250, %v1796
        %1815 = vst.msk [vmem:[#allocation3 + $0x68] sm:$0xff] %vm1250, %v1797
        %1816 = vst.msk [vmem:[#allocation3 + $0x70] sm:$0xff] %vm1250, %v1798
        %1817 = vst.msk [vmem:[#allocation3 + $0x78] sm:$0xff] %vm1250, %v1799
        %1818 = vst.msk [vmem:[#allocation3 + $0x80] sm:$0xff] %vm1250, %v1800
        %1819 = vst.msk [vmem:[#allocation3 + $0x88] sm:$0xff] %vm1250, %v1801
        %v1820 = vld [vmem:[%s709] sm:$0xff]
        %v1821 = vld [vmem:[%s709 + $0x8] sm:$0xff]
        %v1822 = vld [vmem:[%s709 + $0x10] sm:$0xff]
        %v1823 = vld [vmem:[%s709 + $0x18] sm:$0xff]
        %v1824 = vld [vmem:[%s709 + $0x20] sm:$0xff]
        %v1825 = vld [vmem:[%s709 + $0x28] sm:$0xff]
        %v1826 = vld [vmem:[%s709 + $0x30] sm:$0xff]
        %v1827 = vld [vmem:[%s709 + $0x38] sm:$0xff]
        %v1828 = vld [vmem:[%s709 + $0x40] sm:$0xff]
        %v1829 = vld [vmem:[%s709 + $0x48] sm:$0xff]
        %v1830 = vld [vmem:[%s709 + $0x50] sm:$0xff]
        %v1831 = vld [vmem:[%s709 + $0x58] sm:$0xff]
        %v1832 = vld [vmem:[%s709 + $0x60] sm:$0xff]
        %v1833 = vld [vmem:[%s709 + $0x68] sm:$0xff]
        %v1834 = vld [vmem:[%s709 + $0x70] sm:$0xff]
        %v1835 = vld [vmem:[%s709 + $0x78] sm:$0xff]
        %v1836 = vld [vmem:[%s709 + $0x80] sm:$0xff]
        %v1837 = vld [vmem:[%s709 + $0x88] sm:$0xff]
        %v1838 = vld [vmem:[%s8] sm:$0xf]
        %v1840 = vsel %vm734, %v1820, 0
        %v1843 = vsel %vm734, %v1821, 0
        %v1846 = vsel %vm734, %v1822, 0
        %v1849 = vsel %vm734, %v1823, 0
        %v1852 = vsel %vm734, %v1824, 0
        %v1855 = vsel %vm734, %v1825, 0
        %v1858 = vsel %vm734, %v1826, 0
        %v1861 = vsel %vm734, %v1827, 0
        %v1864 = vsel %vm734, %v1828, 0
        %v1867 = vsel %vm734, %v1829, 0
        %v1870 = vsel %vm734, %v1830, 0
        %v1873 = vsel %vm734, %v1831, 0
        %v1876 = vsel %vm734, %v1832, 0
        %v1879 = vsel %vm734, %v1833, 0
        %v1882 = vsel %vm734, %v1834, 0
        %v1885 = vsel %vm734, %v1835, 0
        %v1888 = vsel %vm734, %v1836, 0
        %v1891 = vsel %vm734, %v1837, 0
        %v1894 = vsel %vm789, %v1838, 0
        %1896 = vmatprep.subr.mxu0 0.0
        %1897 = vmatpush1.msra.mxu0 %v1894
        %1898 = vmatprep.subr.mxu0 0.0
        %1899 = vmatpush1.msra.mxu0 0.0
        %1900 = vmatprep.subr.mxu0 0.0
        %1901 = vmatpush1.msra.mxu0 0.0
        %1902 = vmatprep.subr.mxu0 0.0
        %1903 = vmatpush1.msra.mxu0 0.0
        %1904 = vmatprep.subr.mxu0 0.0
        %1905 = vmatpush1.msra.mxu0 0.0
        %1906 = vmatprep.subr.mxu0 0.0
        %1907 = vmatpush1.msra.mxu0 0.0
        %1908 = vmatprep.subr.mxu0 0.0
        %1909 = vmatpush1.msra.mxu0 0.0
        %1910 = vmatprep.subr.mxu0 0.0
        %1911 = vmatpush1.msra.mxu0 0.0
        %1912 = vmatprep.subr.mxu0 0.0
        %1913 = vmatpush1.msra.mxu0 0.0
        %1914 = vmatprep.subr.mxu0 0.0
        %1915 = vmatpush1.msra.mxu0 0.0
        %1916 = vmatprep.subr.mxu0 0.0
        %1917 = vmatpush1.msra.mxu0 0.0
        %1918 = vmatprep.subr.mxu0 0.0
        %1919 = vmatpush1.msra.mxu0 0.0
        %1920 = vmatprep.subr.mxu0 0.0
        %1921 = vmatpush1.msra.mxu0 0.0
        %1922 = vmatprep.subr.mxu0 0.0
        %1923 = vmatpush1.msra.mxu0 0.0
        %1924 = vmatprep.subr.mxu0 0.0
        %1925 = vmatpush1.msra.mxu0 0.0
        %1926 = vmatprep.subr.mxu0 0.0
        %1927 = vmatpush1.msra.mxu0 0.0
        %1928 = vmatprep.subr.mxu0 0.0
        %1929 = vmatpush1.msra.mxu0 0.0
        %1930 = vmatprep.subr.mxu0 0.0
        %1931 = vmatpush1.msra.mxu0 0.0
        %1932 = vmatprep.subr.mxu0 0.0
        %1933 = vmatpush1.msra.mxu0 0.0
        %1934 = vmatprep.subr.mxu0 0.0
        %1935 = vmatpush1.msra.mxu0 0.0
        %1936 = vmatprep.subr.mxu0 0.0
        %1937 = vmatpush1.msra.mxu0 0.0
        %1938 = vmatprep.subr.mxu0 0.0
        %1939 = vmatpush1.msra.mxu0 0.0
        %1940 = vmatprep.subr.mxu0 0.0
        %1941 = vmatpush1.msra.mxu0 0.0
        %1942 = vmatprep.subr.mxu0 0.0
        %1943 = vmatpush1.msra.mxu0 0.0
        %1944 = vmatprep.subr.mxu0 0.0
        %1945 = vmatpush1.msra.mxu0 0.0
        %1946 = vmatprep.subr.mxu0 0.0
        %1947 = vmatpush1.msra.mxu0 0.0
        %1948 = vmatprep.subr.mxu0 0.0
        %1949 = vmatpush1.msra.mxu0 0.0
        %1950 = vmatprep.subr.mxu0 0.0
        %1951 = vmatpush1.msra.mxu0 0.0
        %1952 = vmatprep.subr.mxu0 0.0
        %1953 = vmatpush1.msra.mxu0 0.0
        %1954 = vmatprep.subr.mxu0 0.0
        %1955 = vmatpush1.msra.mxu0 0.0
        %1956 = vmatprep.subr.mxu0 0.0
        %1957 = vmatpush1.msra.mxu0 0.0
        %1958 = vmatprep.subr.mxu0 0.0
        %1959 = vmatpush1.msra.mxu0 0.0
        %1960 = vmatprep.mubr.f32.mxu0 0.0
        %1961 = vmatmul.mubr.f32.gmra.mrb[0].mxu0 %v1840
        %v1962 = vpop.f32.mrb[0].mxu0
        %v1963 = vadd.f32 0.0, %v1962
        %v1964 = vpop.f32.mrb[0].mxu0
        %1965 = vmatprep.mubr.f32.mxu0 0.0
        %1966 = vmatmul.mubr.f32.gmra.mrb[0].mxu0 %v1843
        %v1967 = vpop.f32.mrb[0].mxu0
        %v1968 = vadd.f32 0.0, %v1967
        %v1969 = vpop.f32.mrb[0].mxu0
        %1970 = vmatprep.mubr.f32.mxu0 0.0
        %1971 = vmatmul.mubr.f32.gmra.mrb[0].mxu0 %v1846
        %v1972 = vpop.f32.mrb[0].mxu0
        %v1973 = vadd.f32 0.0, %v1972
        %v1974 = vpop.f32.mrb[0].mxu0
        %1975 = vmatprep.mubr.f32.mxu0 0.0
        %1976 = vmatmul.mubr.f32.gmra.mrb[0].mxu0 %v1849
        %v1977 = vpop.f32.mrb[0].mxu0
        %v1978 = vadd.f32 0.0, %v1977
        %v1979 = vpop.f32.mrb[0].mxu0
        %1980 = vmatprep.mubr.f32.mxu0 0.0
        %1981 = vmatmul.mubr.f32.gmra.mrb[0].mxu0 %v1852
        %v1982 = vpop.f32.mrb[0].mxu0
        %v1983 = vadd.f32 0.0, %v1982
        %v1984 = vpop.f32.mrb[0].mxu0
        %1985 = vmatprep.mubr.f32.mxu0 0.0
        %1986 = vmatmul.mubr.f32.gmra.mrb[0].mxu0 %v1855
        %v1987 = vpop.f32.mrb[0].mxu0
        %v1988 = vadd.f32 0.0, %v1987
        %v1989 = vpop.f32.mrb[0].mxu0
        %1990 = vmatprep.mubr.f32.mxu0 0.0
        %1991 = vmatmul.mubr.f32.gmra.mrb[0].mxu0 %v1858
        %v1992 = vpop.f32.mrb[0].mxu0
        %v1993 = vadd.f32 0.0, %v1992
        %v1994 = vpop.f32.mrb[0].mxu0
        %1995 = vmatprep.mubr.f32.mxu0 0.0
        %1996 = vmatmul.mubr.f32.gmra.mrb[0].mxu0 %v1861
        %v1997 = vpop.f32.mrb[0].mxu0
        %v1998 = vadd.f32 0.0, %v1997
        %v1999 = vpop.f32.mrb[0].mxu0
        %2000 = vmatprep.mubr.f32.mxu0 0.0
        %2001 = vmatmul.mubr.f32.gmra.mrb[0].mxu0 %v1864
        %v2002 = vpop.f32.mrb[0].mxu0
        %v2003 = vadd.f32 0.0, %v2002
        %v2004 = vpop.f32.mrb[0].mxu0
        %2005 = vmatprep.mubr.f32.mxu0 0.0
        %2006 = vmatmul.mubr.f32.gmra.mrb[0].mxu0 %v1867
        %v2007 = vpop.f32.mrb[0].mxu0
        %v2008 = vadd.f32 0.0, %v2007
        %v2009 = vpop.f32.mrb[0].mxu0
        %2010 = vmatprep.mubr.f32.mxu0 0.0
        %2011 = vmatmul.mubr.f32.gmra.mrb[0].mxu0 %v1870
        %v2012 = vpop.f32.mrb[0].mxu0
        %v2013 = vadd.f32 0.0, %v2012
        %v2014 = vpop.f32.mrb[0].mxu0
        %2015 = vmatprep.mubr.f32.mxu0 0.0
        %2016 = vmatmul.mubr.f32.gmra.mrb[0].mxu0 %v1873
        %v2017 = vpop.f32.mrb[0].mxu0
        %v2018 = vadd.f32 0.0, %v2017
        %v2019 = vpop.f32.mrb[0].mxu0
        %2020 = vmatprep.mubr.f32.mxu0 0.0
        %2021 = vmatmul.mubr.f32.gmra.mrb[0].mxu0 %v1876
        %v2022 = vpop.f32.mrb[0].mxu0
        %v2023 = vadd.f32 0.0, %v2022
        %v2024 = vpop.f32.mrb[0].mxu0
        %2025 = vmatprep.mubr.f32.mxu0 0.0
        %2026 = vmatmul.mubr.f32.gmra.mrb[0].mxu0 %v1879
        %v2027 = vpop.f32.mrb[0].mxu0
        %v2028 = vadd.f32 0.0, %v2027
        %v2029 = vpop.f32.mrb[0].mxu0
        %2030 = vmatprep.mubr.f32.mxu0 0.0
        %2031 = vmatmul.mubr.f32.gmra.mrb[0].mxu0 %v1882
        %v2032 = vpop.f32.mrb[0].mxu0
        %v2033 = vadd.f32 0.0, %v2032
        %v2034 = vpop.f32.mrb[0].mxu0
        %2035 = vmatprep.mubr.f32.mxu0 0.0
        %2036 = vmatmul.mubr.f32.gmra.mrb[0].mxu0 %v1885
        %v2037 = vpop.f32.mrb[0].mxu0
        %v2038 = vadd.f32 0.0, %v2037
        %v2039 = vpop.f32.mrb[0].mxu0
        %2040 = vmatprep.mubr.f32.mxu0 0.0
        %2041 = vmatmul.mubr.f32.gmra.mrb[0].mxu0 %v1888
        %v2042 = vpop.f32.mrb[0].mxu0
        %v2043 = vadd.f32 0.0, %v2042
        %v2044 = vpop.f32.mrb[0].mxu0
        %2045 = vmatprep.mubr.f32.mxu0 0.0
        %2046 = vmatmul.mubr.f32.gmra.mrb[0].mxu0 %v1891
        %v2047 = vpop.f32.mrb[0].mxu0
        %v2048 = vadd.f32 0.0, %v2047
        %v2049 = vpop.f32.mrb[0].mxu0
        %2050 = vdwg.mxu0
        %v2051 = vld [vmem:[%s9] sm:$0x1]
        %v2053 = vlaneseq
        %v2054 = vshrl.u32 %v2053, 7
        %v2055 = vsub.s32 0, %v2054
        %v2056 = vrot.slane %v2051, %v2055
        %v2058 = vmul.f32 %v1963, %v2056
        %v2059 = vmul.f32 %v1968, %v2056
        %v2060 = vmul.f32 %v1973, %v2056
        %v2061 = vmul.f32 %v1978, %v2056
        %v2062 = vmul.f32 %v1983, %v2056
        %v2063 = vmul.f32 %v1988, %v2056
        %v2064 = vmul.f32 %v1993, %v2056
        %v2065 = vmul.f32 %v1998, %v2056
        %v2066 = vmul.f32 %v2003, %v2056
        %v2067 = vmul.f32 %v2008, %v2056
        %v2068 = vmul.f32 %v2013, %v2056
        %v2069 = vmul.f32 %v2018, %v2056
        %v2070 = vmul.f32 %v2023, %v2056
        %v2071 = vmul.f32 %v2028, %v2056
        %v2072 = vmul.f32 %v2033, %v2056
        %v2073 = vmul.f32 %v2038, %v2056
        %v2074 = vmul.f32 %v2043, %v2056
        %v2075 = vmul.f32 %v2048, %v2056
        %v2076 = vld [vmem:[%s10] sm:$0x1]
        %v2078 = vlaneseq
        %v2079 = vshrl.u32 %v2078, 7
        %v2080 = vsub.s32 0, %v2079
        %v2081 = vrot.slane %v2076, %v2080
        %v2083 = vadd.f32 %v2058, %v2081
        %v2084 = vadd.f32 %v2059, %v2081
        %v2085 = vadd.f32 %v2060, %v2081
        %v2086 = vadd.f32 %v2061, %v2081
        %v2087 = vadd.f32 %v2062, %v2081
        %v2088 = vadd.f32 %v2063, %v2081
        %v2089 = vadd.f32 %v2064, %v2081
        %v2090 = vadd.f32 %v2065, %v2081
        %v2091 = vadd.f32 %v2066, %v2081
        %v2092 = vadd.f32 %v2067, %v2081
        %v2093 = vadd.f32 %v2068, %v2081
        %v2094 = vadd.f32 %v2069, %v2081
        %v2095 = vadd.f32 %v2070, %v2081
        %v2096 = vadd.f32 %v2071, %v2081
        %v2097 = vadd.f32 %v2072, %v2081
        %v2098 = vadd.f32 %v2073, %v2081
        %v2099 = vadd.f32 %v2074, %v2081
        %v2100 = vadd.f32 %v2075, %v2081
        %v2101 = vxor.u32 %v2083, 2147483648
        %v2102 = vxor.u32 %v2084, 2147483648
        %v2103 = vxor.u32 %v2085, 2147483648
        %v2104 = vxor.u32 %v2086, 2147483648
        %v2105 = vxor.u32 %v2087, 2147483648
        %v2106 = vxor.u32 %v2088, 2147483648
        %v2107 = vxor.u32 %v2089, 2147483648
        %v2108 = vxor.u32 %v2090, 2147483648
        %v2109 = vxor.u32 %v2091, 2147483648
        %v2110 = vxor.u32 %v2092, 2147483648
        %v2111 = vxor.u32 %v2093, 2147483648
        %v2112 = vxor.u32 %v2094, 2147483648
        %v2113 = vxor.u32 %v2095, 2147483648
        %v2114 = vxor.u32 %v2096, 2147483648
        %v2115 = vxor.u32 %v2097, 2147483648
        %v2116 = vxor.u32 %v2098, 2147483648
        %v2117 = vxor.u32 %v2099, 2147483648
        %v2118 = vxor.u32 %v2100, 2147483648
        %v2119 = vmul.f32 %v2101, 1.442695
        %v2120 = vpow.pop %v2119
        %v2121 = vmul.f32 %v2102, 1.442695
        %v2122 = vpow.pop %v2121
        %v2123 = vmul.f32 %v2103, 1.442695
        %v2124 = vpow.pop %v2123
        %v2125 = vmul.f32 %v2104, 1.442695
        %v2126 = vpow.pop %v2125
        %v2127 = vmul.f32 %v2105, 1.442695
        %v2128 = vpow.pop %v2127
        %v2129 = vmul.f32 %v2106, 1.442695
        %v2130 = vpow.pop %v2129
        %v2131 = vmul.f32 %v2107, 1.442695
        %v2132 = vpow.pop %v2131
        %v2133 = vmul.f32 %v2108, 1.442695
        %v2134 = vpow.pop %v2133
        %v2135 = vmul.f32 %v2109, 1.442695
        %v2136 = vpow.pop %v2135
        %v2137 = vmul.f32 %v2110, 1.442695
        %v2138 = vpow.pop %v2137
        %v2139 = vmul.f32 %v2111, 1.442695
        %v2140 = vpow.pop %v2139
        %v2141 = vmul.f32 %v2112, 1.442695
        %v2142 = vpow.pop %v2141
        %v2143 = vmul.f32 %v2113, 1.442695
        %v2144 = vpow.pop %v2143
        %v2145 = vmul.f32 %v2114, 1.442695
        %v2146 = vpow.pop %v2145
        %v2147 = vmul.f32 %v2115, 1.442695
        %v2148 = vpow.pop %v2147
        %v2149 = vmul.f32 %v2116, 1.442695
        %v2150 = vpow.pop %v2149
        %v2151 = vmul.f32 %v2117, 1.442695
        %v2152 = vpow.pop %v2151
        %v2153 = vmul.f32 %v2118, 1.442695
        %v2154 = vpow.pop %v2153
        %v2155 = vadd.f32 %v2120, 1.0
        %v2156 = vadd.f32 %v2122, 1.0
        %v2157 = vadd.f32 %v2124, 1.0
        %v2158 = vadd.f32 %v2126, 1.0
        %v2159 = vadd.f32 %v2128, 1.0
        %v2160 = vadd.f32 %v2130, 1.0
        %v2161 = vadd.f32 %v2132, 1.0
        %v2162 = vadd.f32 %v2134, 1.0
        %v2163 = vadd.f32 %v2136, 1.0
        %v2164 = vadd.f32 %v2138, 1.0
        %v2165 = vadd.f32 %v2140, 1.0
        %v2166 = vadd.f32 %v2142, 1.0
        %v2167 = vadd.f32 %v2144, 1.0
        %v2168 = vadd.f32 %v2146, 1.0
        %v2169 = vadd.f32 %v2148, 1.0
        %v2170 = vadd.f32 %v2150, 1.0
        %v2171 = vadd.f32 %v2152, 1.0
        %v2172 = vadd.f32 %v2154, 1.0
        %v2173 = vrcp.pop %v2155
        %v2174 = vmul.f32 1.0, %v2173
        %v2175 = vrcp.pop %v2156
        %v2176 = vmul.f32 1.0, %v2175
        %v2177 = vrcp.pop %v2157
        %v2178 = vmul.f32 1.0, %v2177
        %v2179 = vrcp.pop %v2158
        %v2180 = vmul.f32 1.0, %v2179
        %v2181 = vrcp.pop %v2159
        %v2182 = vmul.f32 1.0, %v2181
        %v2183 = vrcp.pop %v2160
        %v2184 = vmul.f32 1.0, %v2183
        %v2185 = vrcp.pop %v2161
        %v2186 = vmul.f32 1.0, %v2185
        %v2187 = vrcp.pop %v2162
        %v2188 = vmul.f32 1.0, %v2187
        %v2189 = vrcp.pop %v2163
        %v2190 = vmul.f32 1.0, %v2189
        %v2191 = vrcp.pop %v2164
        %v2192 = vmul.f32 1.0, %v2191
        %v2193 = vrcp.pop %v2165
        %v2194 = vmul.f32 1.0, %v2193
        %v2195 = vrcp.pop %v2166
        %v2196 = vmul.f32 1.0, %v2195
        %v2197 = vrcp.pop %v2167
        %v2198 = vmul.f32 1.0, %v2197
        %v2199 = vrcp.pop %v2168
        %v2200 = vmul.f32 1.0, %v2199
        %v2201 = vrcp.pop %v2169
        %v2202 = vmul.f32 1.0, %v2201
        %v2203 = vrcp.pop %v2170
        %v2204 = vmul.f32 1.0, %v2203
        %v2205 = vrcp.pop %v2171
        %v2206 = vmul.f32 1.0, %v2205
        %v2207 = vrcp.pop %v2172
        %v2208 = vmul.f32 1.0, %v2207
        %v2209 = vmul.f32 %v2083, %v2174
        %v2210 = vmul.f32 %v2084, %v2176
        %v2211 = vmul.f32 %v2085, %v2178
        %v2212 = vmul.f32 %v2086, %v2180
        %v2213 = vmul.f32 %v2087, %v2182
        %v2214 = vmul.f32 %v2088, %v2184
        %v2215 = vmul.f32 %v2089, %v2186
        %v2216 = vmul.f32 %v2090, %v2188
        %v2217 = vmul.f32 %v2091, %v2190
        %v2218 = vmul.f32 %v2092, %v2192
        %v2219 = vmul.f32 %v2093, %v2194
        %v2220 = vmul.f32 %v2094, %v2196
        %v2221 = vmul.f32 %v2095, %v2198
        %v2222 = vmul.f32 %v2096, %v2200
        %v2223 = vmul.f32 %v2097, %v2202
        %v2224 = vmul.f32 %v2098, %v2204
        %v2225 = vmul.f32 %v2099, %v2206
        %v2226 = vmul.f32 %v2100, %v2208
        %v2227 = vld [vmem:[%s6] sm:$0xff]
        %v2228 = vld [vmem:[%s6 + $0x8] sm:$0xff]
        %v2229 = vld [vmem:[%s6 + $0x10] sm:$0xff]
        %v2230 = vld [vmem:[%s6 + $0x18] sm:$0xff]
        %v2231 = vld [vmem:[%s6 + $0x20] sm:$0xff]
        %v2232 = vld [vmem:[%s6 + $0x28] sm:$0xff]
        %v2233 = vld [vmem:[%s6 + $0x30] sm:$0xff]
        %v2234 = vld [vmem:[%s6 + $0x38] sm:$0xff]
        %v2235 = vld [vmem:[%s6 + $0x40] sm:$0xff]
        %v2236 = vld [vmem:[%s6 + $0x48] sm:$0xff]
        %v2237 = vld [vmem:[%s6 + $0x50] sm:$0xff]
        %v2238 = vld [vmem:[%s6 + $0x58] sm:$0xff]
        %v2239 = vld [vmem:[%s6 + $0x60] sm:$0xff]
        %v2240 = vld [vmem:[%s6 + $0x68] sm:$0xff]
        %v2241 = vld [vmem:[%s6 + $0x70] sm:$0xff]
        %v2242 = vld [vmem:[%s6 + $0x78] sm:$0xff]
        %v2243 = vld [vmem:[%s6 + $0x80] sm:$0xff]
        %v2244 = vld [vmem:[%s6 + $0x88] sm:$0xff]
        %2246 = vset.pattern.permute.xlu0 0
        %2247 = vperm.xlu0 %2246, %v2227
        %v2248 = vpop.permute.xlu0 %2247
        %2251 = vset.pattern.permute.xlu0 0
        %2252 = vperm.xlu0 %2251, %v2228
        %v2253 = vpop.permute.xlu0 %2252
        %2256 = vset.pattern.permute.xlu0 0
        %2257 = vperm.xlu0 %2256, %v2229
        %v2258 = vpop.permute.xlu0 %2257
        %2261 = vset.pattern.permute.xlu0 0
        %2262 = vperm.xlu0 %2261, %v2230
        %v2263 = vpop.permute.xlu0 %2262
        %2266 = vset.pattern.permute.xlu0 0
        %2267 = vperm.xlu0 %2266, %v2231
        %v2268 = vpop.permute.xlu0 %2267
        %2271 = vset.pattern.permute.xlu0 0
        %2272 = vperm.xlu0 %2271, %v2232
        %v2273 = vpop.permute.xlu0 %2272
        %2276 = vset.pattern.permute.xlu0 0
        %2277 = vperm.xlu0 %2276, %v2233
        %v2278 = vpop.permute.xlu0 %2277
        %2281 = vset.pattern.permute.xlu0 0
        %2282 = vperm.xlu0 %2281, %v2234
        %v2283 = vpop.permute.xlu0 %2282
        %2286 = vset.pattern.permute.xlu0 0
        %2287 = vperm.xlu0 %2286, %v2235
        %v2288 = vpop.permute.xlu0 %2287
        %2291 = vset.pattern.permute.xlu0 0
        %2292 = vperm.xlu0 %2291, %v2236
        %v2293 = vpop.permute.xlu0 %2292
        %2296 = vset.pattern.permute.xlu0 0
        %2297 = vperm.xlu0 %2296, %v2237
        %v2298 = vpop.permute.xlu0 %2297
        %2301 = vset.pattern.permute.xlu0 0
        %2302 = vperm.xlu0 %2301, %v2238
        %v2303 = vpop.permute.xlu0 %2302
        %2306 = vset.pattern.permute.xlu0 0
        %2307 = vperm.xlu0 %2306, %v2239
        %v2308 = vpop.permute.xlu0 %2307
        %2311 = vset.pattern.permute.xlu0 0
        %2312 = vperm.xlu0 %2311, %v2240
        %v2313 = vpop.permute.xlu0 %2312
        %2316 = vset.pattern.permute.xlu0 0
        %2317 = vperm.xlu0 %2316, %v2241
        %v2318 = vpop.permute.xlu0 %2317
        %2321 = vset.pattern.permute.xlu0 0
        %2322 = vperm.xlu0 %2321, %v2242
        %v2323 = vpop.permute.xlu0 %2322
        %2326 = vset.pattern.permute.xlu0 0
        %2327 = vperm.xlu0 %2326, %v2243
        %v2328 = vpop.permute.xlu0 %2327
        %2331 = vset.pattern.permute.xlu0 0
        %2332 = vperm.xlu0 %2331, %v2244
        %v2333 = vpop.permute.xlu0 %2332
        %v2335 = vmul.f32 %v2209, %v2248
        %v2336 = vmul.f32 %v2210, %v2253
        %v2337 = vmul.f32 %v2211, %v2258
        %v2338 = vmul.f32 %v2212, %v2263
        %v2339 = vmul.f32 %v2213, %v2268
        %v2340 = vmul.f32 %v2214, %v2273
        %v2341 = vmul.f32 %v2215, %v2278
        %v2342 = vmul.f32 %v2216, %v2283
        %v2343 = vmul.f32 %v2217, %v2288
        %v2344 = vmul.f32 %v2218, %v2293
        %v2345 = vmul.f32 %v2219, %v2298
        %v2346 = vmul.f32 %v2220, %v2303
        %v2347 = vmul.f32 %v2221, %v2308
        %v2348 = vmul.f32 %v2222, %v2313
        %v2349 = vmul.f32 %v2223, %v2318
        %v2350 = vmul.f32 %v2224, %v2323
        %v2351 = vmul.f32 %v2225, %v2328
        %v2352 = vmul.f32 %v2226, %v2333
        %2353 = vst.msk [vmem:[#allocation4] sm:$0xff] %vm1250, %v2335
        %2354 = vst.msk [vmem:[#allocation4 + $0x8] sm:$0xff] %vm1250, %v2336
        %2355 = vst.msk [vmem:[#allocation4 + $0x10] sm:$0xff] %vm1250, %v2337
        %2356 = vst.msk [vmem:[#allocation4 + $0x18] sm:$0xff] %vm1250, %v2338
        %2357 = vst.msk [vmem:[#allocation4 + $0x20] sm:$0xff] %vm1250, %v2339
        %2358 = vst.msk [vmem:[#allocation4 + $0x28] sm:$0xff] %vm1250, %v2340
        %2359 = vst.msk [vmem:[#allocation4 + $0x30] sm:$0xff] %vm1250, %v2341
        %2360 = vst.msk [vmem:[#allocation4 + $0x38] sm:$0xff] %vm1250, %v2342
        %2361 = vst.msk [vmem:[#allocation4 + $0x40] sm:$0xff] %vm1250, %v2343
        %2362 = vst.msk [vmem:[#allocation4 + $0x48] sm:$0xff] %vm1250, %v2344
        %2363 = vst.msk [vmem:[#allocation4 + $0x50] sm:$0xff] %vm1250, %v2345
        %2364 = vst.msk [vmem:[#allocation4 + $0x58] sm:$0xff] %vm1250, %v2346
        %2365 = vst.msk [vmem:[#allocation4 + $0x60] sm:$0xff] %vm1250, %v2347
        %2366 = vst.msk [vmem:[#allocation4 + $0x68] sm:$0xff] %vm1250, %v2348
        %2367 = vst.msk [vmem:[#allocation4 + $0x70] sm:$0xff] %vm1250, %v2349
        %2368 = vst.msk [vmem:[#allocation4 + $0x78] sm:$0xff] %vm1250, %v2350
        %2369 = vst.msk [vmem:[#allocation4 + $0x80] sm:$0xff] %vm1250, %v2351
        %2370 = vst.msk [vmem:[#allocation4 + $0x88] sm:$0xff] %vm1250, %v2352
        %v2371 = vld [vmem:[%s714] sm:$0xff]
        %v2372 = vld [vmem:[%s714 + $0x8] sm:$0xff]
        %v2373 = vld [vmem:[%s714 + $0x10] sm:$0xff]
        %v2374 = vld [vmem:[%s714 + $0x18] sm:$0xff]
        %v2375 = vld [vmem:[%s714 + $0x20] sm:$0xff]
        %v2376 = vld [vmem:[%s714 + $0x28] sm:$0xff]
        %v2377 = vld [vmem:[%s714 + $0x30] sm:$0xff]
        %v2378 = vld [vmem:[%s714 + $0x38] sm:$0xff]
        %v2379 = vld [vmem:[%s714 + $0x40] sm:$0xff]
        %v2380 = vld [vmem:[%s714 + $0x48] sm:$0xff]
        %v2381 = vld [vmem:[%s714 + $0x50] sm:$0xff]
        %v2382 = vld [vmem:[%s714 + $0x58] sm:$0xff]
        %v2383 = vld [vmem:[%s714 + $0x60] sm:$0xff]
        %v2384 = vld [vmem:[%s714 + $0x68] sm:$0xff]
        %v2385 = vld [vmem:[%s714 + $0x70] sm:$0xff]
        %v2386 = vld [vmem:[%s714 + $0x78] sm:$0xff]
        %v2387 = vld [vmem:[%s714 + $0x80] sm:$0xff]
        %v2388 = vld [vmem:[%s714 + $0x88] sm:$0xff]
        %v2389 = vld [vmem:[%s8] sm:$0xf]
        %v2391 = vsel %vm734, %v2371, 0
        %v2394 = vsel %vm734, %v2372, 0
        %v2397 = vsel %vm734, %v2373, 0
        %v2400 = vsel %vm734, %v2374, 0
        %v2403 = vsel %vm734, %v2375, 0
        %v2406 = vsel %vm734, %v2376, 0
        %v2409 = vsel %vm734, %v2377, 0
        %v2412 = vsel %vm734, %v2378, 0
        %v2415 = vsel %vm734, %v2379, 0
        %v2418 = vsel %vm734, %v2380, 0
        %v2421 = vsel %vm734, %v2381, 0
        %v2424 = vsel %vm734, %v2382, 0
        %v2427 = vsel %vm734, %v2383, 0
        %v2430 = vsel %vm734, %v2384, 0
        %v2433 = vsel %vm734, %v2385, 0
        %v2436 = vsel %vm734, %v2386, 0
        %v2439 = vsel %vm734, %v2387, 0
        %v2442 = vsel %vm734, %v2388, 0
        %v2445 = vsel %vm789, %v2389, 0
        %2447 = vmatprep.subr.mxu0 0.0
        %2448 = vmatpush1.msra.mxu0 %v2445
        %2449 = vmatprep.subr.mxu0 0.0
        %2450 = vmatpush1.msra.mxu0 0.0
        %2451 = vmatprep.subr.mxu0 0.0
        %2452 = vmatpush1.msra.mxu0 0.0
        %2453 = vmatprep.subr.mxu0 0.0
        %2454 = vmatpush1.msra.mxu0 0.0
        %2455 = vmatprep.subr.mxu0 0.0
        %2456 = vmatpush1.msra.mxu0 0.0
        %2457 = vmatprep.subr.mxu0 0.0
        %2458 = vmatpush1.msra.mxu0 0.0
        %2459 = vmatprep.subr.mxu0 0.0
        %2460 = vmatpush1.msra.mxu0 0.0
        %2461 = vmatprep.subr.mxu0 0.0
        %2462 = vmatpush1.msra.mxu0 0.0
        %2463 = vmatprep.subr.mxu0 0.0
        %2464 = vmatpush1.msra.mxu0 0.0
        %2465 = vmatprep.subr.mxu0 0.0
        %2466 = vmatpush1.msra.mxu0 0.0
        %2467 = vmatprep.subr.mxu0 0.0
        %2468 = vmatpush1.msra.mxu0 0.0
        %2469 = vmatprep.subr.mxu0 0.0
        %2470 = vmatpush1.msra.mxu0 0.0
        %2471 = vmatprep.subr.mxu0 0.0
        %2472 = vmatpush1.msra.mxu0 0.0
        %2473 = vmatprep.subr.mxu0 0.0
        %2474 = vmatpush1.msra.mxu0 0.0
        %2475 = vmatprep.subr.mxu0 0.0
        %2476 = vmatpush1.msra.mxu0 0.0
        %2477 = vmatprep.subr.mxu0 0.0
        %2478 = vmatpush1.msra.mxu0 0.0
        %2479 = vmatprep.subr.mxu0 0.0
        %2480 = vmatpush1.msra.mxu0 0.0
        %2481 = vmatprep.subr.mxu0 0.0
        %2482 = vmatpush1.msra.mxu0 0.0
        %2483 = vmatprep.subr.mxu0 0.0
        %2484 = vmatpush1.msra.mxu0 0.0
        %2485 = vmatprep.subr.mxu0 0.0
        %2486 = vmatpush1.msra.mxu0 0.0
        %2487 = vmatprep.subr.mxu0 0.0
        %2488 = vmatpush1.msra.mxu0 0.0
        %2489 = vmatprep.subr.mxu0 0.0
        %2490 = vmatpush1.msra.mxu0 0.0
        %2491 = vmatprep.subr.mxu0 0.0
        %2492 = vmatpush1.msra.mxu0 0.0
        %2493 = vmatprep.subr.mxu0 0.0
        %2494 = vmatpush1.msra.mxu0 0.0
        %2495 = vmatprep.subr.mxu0 0.0
        %2496 = vmatpush1.msra.mxu0 0.0
        %2497 = vmatprep.subr.mxu0 0.0
        %2498 = vmatpush1.msra.mxu0 0.0
        %2499 = vmatprep.subr.mxu0 0.0
        %2500 = vmatpush1.msra.mxu0 0.0
        %2501 = vmatprep.subr.mxu0 0.0
        %2502 = vmatpush1.msra.mxu0 0.0
        %2503 = vmatprep.subr.mxu0 0.0
        %2504 = vmatpush1.msra.mxu0 0.0
        %2505 = vmatprep.subr.mxu0 0.0
        %2506 = vmatpush1.msra.mxu0 0.0
        %2507 = vmatprep.subr.mxu0 0.0
        %2508 = vmatpush1.msra.mxu0 0.0
        %2509 = vmatprep.subr.mxu0 0.0
        %2510 = vmatpush1.msra.mxu0 0.0
        %2511 = vmatprep.mubr.f32.mxu0 0.0
        %2512 = vmatmul.mubr.f32.gmra.mrb[0].mxu0 %v2391
        %v2513 = vpop.f32.mrb[0].mxu0
        %v2514 = vadd.f32 0.0, %v2513
        %v2515 = vpop.f32.mrb[0].mxu0
        %2516 = vmatprep.mubr.f32.mxu0 0.0
        %2517 = vmatmul.mubr.f32.gmra.mrb[0].mxu0 %v2394
        %v2518 = vpop.f32.mrb[0].mxu0
        %v2519 = vadd.f32 0.0, %v2518
        %v2520 = vpop.f32.mrb[0].mxu0
        %2521 = vmatprep.mubr.f32.mxu0 0.0
        %2522 = vmatmul.mubr.f32.gmra.mrb[0].mxu0 %v2397
        %v2523 = vpop.f32.mrb[0].mxu0
        %v2524 = vadd.f32 0.0, %v2523
        %v2525 = vpop.f32.mrb[0].mxu0
        %2526 = vmatprep.mubr.f32.mxu0 0.0
        %2527 = vmatmul.mubr.f32.gmra.mrb[0].mxu0 %v2400
        %v2528 = vpop.f32.mrb[0].mxu0
        %v2529 = vadd.f32 0.0, %v2528
        %v2530 = vpop.f32.mrb[0].mxu0
        %2531 = vmatprep.mubr.f32.mxu0 0.0
        %2532 = vmatmul.mubr.f32.gmra.mrb[0].mxu0 %v2403
        %v2533 = vpop.f32.mrb[0].mxu0
        %v2534 = vadd.f32 0.0, %v2533
        %v2535 = vpop.f32.mrb[0].mxu0
        %2536 = vmatprep.mubr.f32.mxu0 0.0
        %2537 = vmatmul.mubr.f32.gmra.mrb[0].mxu0 %v2406
        %v2538 = vpop.f32.mrb[0].mxu0
        %v2539 = vadd.f32 0.0, %v2538
        %v2540 = vpop.f32.mrb[0].mxu0
        %2541 = vmatprep.mubr.f32.mxu0 0.0
        %2542 = vmatmul.mubr.f32.gmra.mrb[0].mxu0 %v2409
        %v2543 = vpop.f32.mrb[0].mxu0
        %v2544 = vadd.f32 0.0, %v2543
        %v2545 = vpop.f32.mrb[0].mxu0
        %2546 = vmatprep.mubr.f32.mxu0 0.0
        %2547 = vmatmul.mubr.f32.gmra.mrb[0].mxu0 %v2412
        %v2548 = vpop.f32.mrb[0].mxu0
        %v2549 = vadd.f32 0.0, %v2548
        %v2550 = vpop.f32.mrb[0].mxu0
        %2551 = vmatprep.mubr.f32.mxu0 0.0
        %2552 = vmatmul.mubr.f32.gmra.mrb[0].mxu0 %v2415
        %v2553 = vpop.f32.mrb[0].mxu0
        %v2554 = vadd.f32 0.0, %v2553
        %v2555 = vpop.f32.mrb[0].mxu0
        %2556 = vmatprep.mubr.f32.mxu0 0.0
        %2557 = vmatmul.mubr.f32.gmra.mrb[0].mxu0 %v2418
        %v2558 = vpop.f32.mrb[0].mxu0
        %v2559 = vadd.f32 0.0, %v2558
        %v2560 = vpop.f32.mrb[0].mxu0
        %2561 = vmatprep.mubr.f32.mxu0 0.0
        %2562 = vmatmul.mubr.f32.gmra.mrb[0].mxu0 %v2421
        %v2563 = vpop.f32.mrb[0].mxu0
        %v2564 = vadd.f32 0.0, %v2563
        %v2565 = vpop.f32.mrb[0].mxu0
        %2566 = vmatprep.mubr.f32.mxu0 0.0
        %2567 = vmatmul.mubr.f32.gmra.mrb[0].mxu0 %v2424
        %v2568 = vpop.f32.mrb[0].mxu0
        %v2569 = vadd.f32 0.0, %v2568
        %v2570 = vpop.f32.mrb[0].mxu0
        %2571 = vmatprep.mubr.f32.mxu0 0.0
        %2572 = vmatmul.mubr.f32.gmra.mrb[0].mxu0 %v2427
        %v2573 = vpop.f32.mrb[0].mxu0
        %v2574 = vadd.f32 0.0, %v2573
        %v2575 = vpop.f32.mrb[0].mxu0
        %2576 = vmatprep.mubr.f32.mxu0 0.0
        %2577 = vmatmul.mubr.f32.gmra.mrb[0].mxu0 %v2430
        %v2578 = vpop.f32.mrb[0].mxu0
        %v2579 = vadd.f32 0.0, %v2578
        %v2580 = vpop.f32.mrb[0].mxu0
        %2581 = vmatprep.mubr.f32.mxu0 0.0
        %2582 = vmatmul.mubr.f32.gmra.mrb[0].mxu0 %v2433
        %v2583 = vpop.f32.mrb[0].mxu0
        %v2584 = vadd.f32 0.0, %v2583
        %v2585 = vpop.f32.mrb[0].mxu0
        %2586 = vmatprep.mubr.f32.mxu0 0.0
        %2587 = vmatmul.mubr.f32.gmra.mrb[0].mxu0 %v2436
        %v2588 = vpop.f32.mrb[0].mxu0
        %v2589 = vadd.f32 0.0, %v2588
        %v2590 = vpop.f32.mrb[0].mxu0
        %2591 = vmatprep.mubr.f32.mxu0 0.0
        %2592 = vmatmul.mubr.f32.gmra.mrb[0].mxu0 %v2439
        %v2593 = vpop.f32.mrb[0].mxu0
        %v2594 = vadd.f32 0.0, %v2593
        %v2595 = vpop.f32.mrb[0].mxu0
        %2596 = vmatprep.mubr.f32.mxu0 0.0
        %2597 = vmatmul.mubr.f32.gmra.mrb[0].mxu0 %v2442
        %v2598 = vpop.f32.mrb[0].mxu0
        %v2599 = vadd.f32 0.0, %v2598
        %v2600 = vpop.f32.mrb[0].mxu0
        %2601 = vdwg.mxu0
        %v2602 = vld [vmem:[%s9] sm:$0x1]
        %v2604 = vlaneseq
        %v2605 = vshrl.u32 %v2604, 7
        %v2606 = vsub.s32 0, %v2605
        %v2607 = vrot.slane %v2602, %v2606
        %v2609 = vmul.f32 %v2514, %v2607
        %v2610 = vmul.f32 %v2519, %v2607
        %v2611 = vmul.f32 %v2524, %v2607
        %v2612 = vmul.f32 %v2529, %v2607
        %v2613 = vmul.f32 %v2534, %v2607
        %v2614 = vmul.f32 %v2539, %v2607
        %v2615 = vmul.f32 %v2544, %v2607
        %v2616 = vmul.f32 %v2549, %v2607
        %v2617 = vmul.f32 %v2554, %v2607
        %v2618 = vmul.f32 %v2559, %v2607
        %v2619 = vmul.f32 %v2564, %v2607
        %v2620 = vmul.f32 %v2569, %v2607
        %v2621 = vmul.f32 %v2574, %v2607
        %v2622 = vmul.f32 %v2579, %v2607
        %v2623 = vmul.f32 %v2584, %v2607
        %v2624 = vmul.f32 %v2589, %v2607
        %v2625 = vmul.f32 %v2594, %v2607
        %v2626 = vmul.f32 %v2599, %v2607
        %v2627 = vld [vmem:[%s10] sm:$0x1]
        %v2629 = vlaneseq
        %v2630 = vshrl.u32 %v2629, 7
        %v2631 = vsub.s32 0, %v2630
        %v2632 = vrot.slane %v2627, %v2631
        %v2634 = vadd.f32 %v2609, %v2632
        %v2635 = vadd.f32 %v2610, %v2632
        %v2636 = vadd.f32 %v2611, %v2632
        %v2637 = vadd.f32 %v2612, %v2632
        %v2638 = vadd.f32 %v2613, %v2632
        %v2639 = vadd.f32 %v2614, %v2632
        %v2640 = vadd.f32 %v2615, %v2632
        %v2641 = vadd.f32 %v2616, %v2632
        %v2642 = vadd.f32 %v2617, %v2632
        %v2643 = vadd.f32 %v2618, %v2632
        %v2644 = vadd.f32 %v2619, %v2632
        %v2645 = vadd.f32 %v2620, %v2632
        %v2646 = vadd.f32 %v2621, %v2632
        %v2647 = vadd.f32 %v2622, %v2632
        %v2648 = vadd.f32 %v2623, %v2632
        %v2649 = vadd.f32 %v2624, %v2632
        %v2650 = vadd.f32 %v2625, %v2632
        %v2651 = vadd.f32 %v2626, %v2632
        %v2652 = vxor.u32 %v2634, 2147483648
        %v2653 = vxor.u32 %v2635, 2147483648
        %v2654 = vxor.u32 %v2636, 2147483648
        %v2655 = vxor.u32 %v2637, 2147483648
        %v2656 = vxor.u32 %v2638, 2147483648
        %v2657 = vxor.u32 %v2639, 2147483648
        %v2658 = vxor.u32 %v2640, 2147483648
        %v2659 = vxor.u32 %v2641, 2147483648
        %v2660 = vxor.u32 %v2642, 2147483648
        %v2661 = vxor.u32 %v2643, 2147483648
        %v2662 = vxor.u32 %v2644, 2147483648
        %v2663 = vxor.u32 %v2645, 2147483648
        %v2664 = vxor.u32 %v2646, 2147483648
        %v2665 = vxor.u32 %v2647, 2147483648
        %v2666 = vxor.u32 %v2648, 2147483648
        %v2667 = vxor.u32 %v2649, 2147483648
        %v2668 = vxor.u32 %v2650, 2147483648
        %v2669 = vxor.u32 %v2651, 2147483648
        %v2670 = vmul.f32 %v2652, 1.442695
        %v2671 = vpow.pop %v2670
        %v2672 = vmul.f32 %v2653, 1.442695
        %v2673 = vpow.pop %v2672
        %v2674 = vmul.f32 %v2654, 1.442695
        %v2675 = vpow.pop %v2674
        %v2676 = vmul.f32 %v2655, 1.442695
        %v2677 = vpow.pop %v2676
        %v2678 = vmul.f32 %v2656, 1.442695
        %v2679 = vpow.pop %v2678
        %v2680 = vmul.f32 %v2657, 1.442695
        %v2681 = vpow.pop %v2680
        %v2682 = vmul.f32 %v2658, 1.442695
        %v2683 = vpow.pop %v2682
        %v2684 = vmul.f32 %v2659, 1.442695
        %v2685 = vpow.pop %v2684
        %v2686 = vmul.f32 %v2660, 1.442695
        %v2687 = vpow.pop %v2686
        %v2688 = vmul.f32 %v2661, 1.442695
        %v2689 = vpow.pop %v2688
        %v2690 = vmul.f32 %v2662, 1.442695
        %v2691 = vpow.pop %v2690
        %v2692 = vmul.f32 %v2663, 1.442695
        %v2693 = vpow.pop %v2692
        %v2694 = vmul.f32 %v2664, 1.442695
        %v2695 = vpow.pop %v2694
        %v2696 = vmul.f32 %v2665, 1.442695
        %v2697 = vpow.pop %v2696
        %v2698 = vmul.f32 %v2666, 1.442695
        %v2699 = vpow.pop %v2698
        %v2700 = vmul.f32 %v2667, 1.442695
        %v2701 = vpow.pop %v2700
        %v2702 = vmul.f32 %v2668, 1.442695
        %v2703 = vpow.pop %v2702
        %v2704 = vmul.f32 %v2669, 1.442695
        %v2705 = vpow.pop %v2704
        %v2706 = vadd.f32 %v2671, 1.0
        %v2707 = vadd.f32 %v2673, 1.0
        %v2708 = vadd.f32 %v2675, 1.0
        %v2709 = vadd.f32 %v2677, 1.0
        %v2710 = vadd.f32 %v2679, 1.0
        %v2711 = vadd.f32 %v2681, 1.0
        %v2712 = vadd.f32 %v2683, 1.0
        %v2713 = vadd.f32 %v2685, 1.0
        %v2714 = vadd.f32 %v2687, 1.0
        %v2715 = vadd.f32 %v2689, 1.0
        %v2716 = vadd.f32 %v2691, 1.0
        %v2717 = vadd.f32 %v2693, 1.0
        %v2718 = vadd.f32 %v2695, 1.0
        %v2719 = vadd.f32 %v2697, 1.0
        %v2720 = vadd.f32 %v2699, 1.0
        %v2721 = vadd.f32 %v2701, 1.0
        %v2722 = vadd.f32 %v2703, 1.0
        %v2723 = vadd.f32 %v2705, 1.0
        %v2724 = vrcp.pop %v2706
        %v2725 = vmul.f32 1.0, %v2724
        %v2726 = vrcp.pop %v2707
        %v2727 = vmul.f32 1.0, %v2726
        %v2728 = vrcp.pop %v2708
        %v2729 = vmul.f32 1.0, %v2728
        %v2730 = vrcp.pop %v2709
        %v2731 = vmul.f32 1.0, %v2730
        %v2732 = vrcp.pop %v2710
        %v2733 = vmul.f32 1.0, %v2732
        %v2734 = vrcp.pop %v2711
        %v2735 = vmul.f32 1.0, %v2734
        %v2736 = vrcp.pop %v2712
        %v2737 = vmul.f32 1.0, %v2736
        %v2738 = vrcp.pop %v2713
        %v2739 = vmul.f32 1.0, %v2738
        %v2740 = vrcp.pop %v2714
        %v2741 = vmul.f32 1.0, %v2740
        %v2742 = vrcp.pop %v2715
        %v2743 = vmul.f32 1.0, %v2742
        %v2744 = vrcp.pop %v2716
        %v2745 = vmul.f32 1.0, %v2744
        %v2746 = vrcp.pop %v2717
        %v2747 = vmul.f32 1.0, %v2746
        %v2748 = vrcp.pop %v2718
        %v2749 = vmul.f32 1.0, %v2748
        %v2750 = vrcp.pop %v2719
        %v2751 = vmul.f32 1.0, %v2750
        %v2752 = vrcp.pop %v2720
        %v2753 = vmul.f32 1.0, %v2752
        %v2754 = vrcp.pop %v2721
        %v2755 = vmul.f32 1.0, %v2754
        %v2756 = vrcp.pop %v2722
        %v2757 = vmul.f32 1.0, %v2756
        %v2758 = vrcp.pop %v2723
        %v2759 = vmul.f32 1.0, %v2758
        %v2760 = vmul.f32 %v2634, %v2725
        %v2761 = vmul.f32 %v2635, %v2727
        %v2762 = vmul.f32 %v2636, %v2729
        %v2763 = vmul.f32 %v2637, %v2731
        %v2764 = vmul.f32 %v2638, %v2733
        %v2765 = vmul.f32 %v2639, %v2735
        %v2766 = vmul.f32 %v2640, %v2737
        %v2767 = vmul.f32 %v2641, %v2739
        %v2768 = vmul.f32 %v2642, %v2741
        %v2769 = vmul.f32 %v2643, %v2743
        %v2770 = vmul.f32 %v2644, %v2745
        %v2771 = vmul.f32 %v2645, %v2747
        %v2772 = vmul.f32 %v2646, %v2749
        %v2773 = vmul.f32 %v2647, %v2751
        %v2774 = vmul.f32 %v2648, %v2753
        %v2775 = vmul.f32 %v2649, %v2755
        %v2776 = vmul.f32 %v2650, %v2757
        %v2777 = vmul.f32 %v2651, %v2759
        %v2778 = vld [vmem:[%s7] sm:$0xff]
        %v2779 = vld [vmem:[%s7 + $0x8] sm:$0xff]
        %v2780 = vld [vmem:[%s7 + $0x10] sm:$0xff]
        %v2781 = vld [vmem:[%s7 + $0x18] sm:$0xff]
        %v2782 = vld [vmem:[%s7 + $0x20] sm:$0xff]
        %v2783 = vld [vmem:[%s7 + $0x28] sm:$0xff]
        %v2784 = vld [vmem:[%s7 + $0x30] sm:$0xff]
        %v2785 = vld [vmem:[%s7 + $0x38] sm:$0xff]
        %v2786 = vld [vmem:[%s7 + $0x40] sm:$0xff]
        %v2787 = vld [vmem:[%s7 + $0x48] sm:$0xff]
        %v2788 = vld [vmem:[%s7 + $0x50] sm:$0xff]
        %v2789 = vld [vmem:[%s7 + $0x58] sm:$0xff]
        %v2790 = vld [vmem:[%s7 + $0x60] sm:$0xff]
        %v2791 = vld [vmem:[%s7 + $0x68] sm:$0xff]
        %v2792 = vld [vmem:[%s7 + $0x70] sm:$0xff]
        %v2793 = vld [vmem:[%s7 + $0x78] sm:$0xff]
        %v2794 = vld [vmem:[%s7 + $0x80] sm:$0xff]
        %v2795 = vld [vmem:[%s7 + $0x88] sm:$0xff]
        %2797 = vset.pattern.permute.xlu0 0
        %2798 = vperm.xlu0 %2797, %v2778
        %v2799 = vpop.permute.xlu0 %2798
        %2802 = vset.pattern.permute.xlu0 0
        %2803 = vperm.xlu0 %2802, %v2779
        %v2804 = vpop.permute.xlu0 %2803
        %2807 = vset.pattern.permute.xlu0 0
        %2808 = vperm.xlu0 %2807, %v2780
        %v2809 = vpop.permute.xlu0 %2808
        %2812 = vset.pattern.permute.xlu0 0
        %2813 = vperm.xlu0 %2812, %v2781
        %v2814 = vpop.permute.xlu0 %2813
        %2817 = vset.pattern.permute.xlu0 0
        %2818 = vperm.xlu0 %2817, %v2782
        %v2819 = vpop.permute.xlu0 %2818
        %2822 = vset.pattern.permute.xlu0 0
        %2823 = vperm.xlu0 %2822, %v2783
        %v2824 = vpop.permute.xlu0 %2823
        %2827 = vset.pattern.permute.xlu0 0
        %2828 = vperm.xlu0 %2827, %v2784
        %v2829 = vpop.permute.xlu0 %2828
        %2832 = vset.pattern.permute.xlu0 0
        %2833 = vperm.xlu0 %2832, %v2785
        %v2834 = vpop.permute.xlu0 %2833
        %2837 = vset.pattern.permute.xlu0 0
        %2838 = vperm.xlu0 %2837, %v2786
        %v2839 = vpop.permute.xlu0 %2838
        %2842 = vset.pattern.permute.xlu0 0
        %2843 = vperm.xlu0 %2842, %v2787
        %v2844 = vpop.permute.xlu0 %2843
        %2847 = vset.pattern.permute.xlu0 0
        %2848 = vperm.xlu0 %2847, %v2788
        %v2849 = vpop.permute.xlu0 %2848
        %2852 = vset.pattern.permute.xlu0 0
        %2853 = vperm.xlu0 %2852, %v2789
        %v2854 = vpop.permute.xlu0 %2853
        %2857 = vset.pattern.permute.xlu0 0
        %2858 = vperm.xlu0 %2857, %v2790
        %v2859 = vpop.permute.xlu0 %2858
        %2862 = vset.pattern.permute.xlu0 0
        %2863 = vperm.xlu0 %2862, %v2791
        %v2864 = vpop.permute.xlu0 %2863
        %2867 = vset.pattern.permute.xlu0 0
        %2868 = vperm.xlu0 %2867, %v2792
        %v2869 = vpop.permute.xlu0 %2868
        %2872 = vset.pattern.permute.xlu0 0
        %2873 = vperm.xlu0 %2872, %v2793
        %v2874 = vpop.permute.xlu0 %2873
        %2877 = vset.pattern.permute.xlu0 0
        %2878 = vperm.xlu0 %2877, %v2794
        %v2879 = vpop.permute.xlu0 %2878
        %2882 = vset.pattern.permute.xlu0 0
        %2883 = vperm.xlu0 %2882, %v2795
        %v2884 = vpop.permute.xlu0 %2883
        %v2886 = vmul.f32 %v2760, %v2799
        %v2887 = vmul.f32 %v2761, %v2804
        %v2888 = vmul.f32 %v2762, %v2809
        %v2889 = vmul.f32 %v2763, %v2814
        %v2890 = vmul.f32 %v2764, %v2819
        %v2891 = vmul.f32 %v2765, %v2824
        %v2892 = vmul.f32 %v2766, %v2829
        %v2893 = vmul.f32 %v2767, %v2834
        %v2894 = vmul.f32 %v2768, %v2839
        %v2895 = vmul.f32 %v2769, %v2844
        %v2896 = vmul.f32 %v2770, %v2849
        %v2897 = vmul.f32 %v2771, %v2854
        %v2898 = vmul.f32 %v2772, %v2859
        %v2899 = vmul.f32 %v2773, %v2864
        %v2900 = vmul.f32 %v2774, %v2869
        %v2901 = vmul.f32 %v2775, %v2874
        %v2902 = vmul.f32 %v2776, %v2879
        %v2903 = vmul.f32 %v2777, %v2884
        %2904 = vst.msk [vmem:[#allocation5] sm:$0xff] %vm1250, %v2886
        %2905 = vst.msk [vmem:[#allocation5 + $0x8] sm:$0xff] %vm1250, %v2887
        %2906 = vst.msk [vmem:[#allocation5 + $0x10] sm:$0xff] %vm1250, %v2888
        %2907 = vst.msk [vmem:[#allocation5 + $0x18] sm:$0xff] %vm1250, %v2889
        %2908 = vst.msk [vmem:[#allocation5 + $0x20] sm:$0xff] %vm1250, %v2890
        %2909 = vst.msk [vmem:[#allocation5 + $0x28] sm:$0xff] %vm1250, %v2891
        %2910 = vst.msk [vmem:[#allocation5 + $0x30] sm:$0xff] %vm1250, %v2892
        %2911 = vst.msk [vmem:[#allocation5 + $0x38] sm:$0xff] %vm1250, %v2893
        %2912 = vst.msk [vmem:[#allocation5 + $0x40] sm:$0xff] %vm1250, %v2894
        %2913 = vst.msk [vmem:[#allocation5 + $0x48] sm:$0xff] %vm1250, %v2895
        %2914 = vst.msk [vmem:[#allocation5 + $0x50] sm:$0xff] %vm1250, %v2896
        %2915 = vst.msk [vmem:[#allocation5 + $0x58] sm:$0xff] %vm1250, %v2897
        %2916 = vst.msk [vmem:[#allocation5 + $0x60] sm:$0xff] %vm1250, %v2898
        %2917 = vst.msk [vmem:[#allocation5 + $0x68] sm:$0xff] %vm1250, %v2899
        %2918 = vst.msk [vmem:[#allocation5 + $0x70] sm:$0xff] %vm1250, %v2900
        %2919 = vst.msk [vmem:[#allocation5 + $0x78] sm:$0xff] %vm1250, %v2901
        %2920 = vst.msk [vmem:[#allocation5 + $0x80] sm:$0xff] %vm1250, %v2902
        %2921 = vst.msk [vmem:[#allocation5 + $0x88] sm:$0xff] %vm1250, %v2903
        %v2922 = vld [vmem:[%s11] sm:$0x7]
        %v2923 = vld [vmem:[%s11 + $0x4] sm:$0x7]
        %v2924 = vld [vmem:[%s11 + $0x8] sm:$0x7]
        %v2925 = vld [vmem:[#allocation2] sm:$0xff]
        %v2926 = vld [vmem:[#allocation2 + $0x10] sm:$0xff]
        %v2927 = vld [vmem:[#allocation2 + $0x20] sm:$0xff]
        %v2928 = vld [vmem:[#allocation2 + $0x30] sm:$0xff]
        %v2929 = vld [vmem:[#allocation2 + $0x40] sm:$0xff]
        %v2930 = vld [vmem:[#allocation2 + $0x50] sm:$0xff]
        %v2931 = vld [vmem:[#allocation2 + $0x60] sm:$0xff]
        %v2932 = vld [vmem:[#allocation2 + $0x70] sm:$0xff]
        %v2933 = vlaneseq
        %v2934 = vshrl.u32 %v2933, 7
        %v2935 = vsub.s32 0, %v2934
        %v2936 = vrot.slane %v2922, %v2935
        %v2937 = vmul.f32 %v2925, %v2936
        %v2938 = vmul.f32 %v2926, %v2936
        %v2939 = vmul.f32 %v2927, %v2936
        %v2940 = vmul.f32 %v2928, %v2936
        %v2941 = vmul.f32 %v2929, %v2936
        %v2942 = vmul.f32 %v2930, %v2936
        %v2943 = vmul.f32 %v2931, %v2936
        %v2944 = vmul.f32 %v2932, %v2936
        %v2945 = vadd.f32 %v2937, 0.0
        %v2946 = vadd.f32 %v2938, 0.0
        %v2947 = vadd.f32 %v2939, 0.0
        %v2948 = vadd.f32 %v2940, 0.0
        %v2949 = vadd.f32 %v2941, 0.0
        %v2950 = vadd.f32 %v2942, 0.0
        %v2951 = vadd.f32 %v2943, 0.0
        %v2952 = vadd.f32 %v2944, 0.0
        %v2953 = vld [vmem:[#allocation3] sm:$0xff]
        %v2954 = vld [vmem:[#allocation3 + $0x10] sm:$0xff]
        %v2955 = vld [vmem:[#allocation3 + $0x20] sm:$0xff]
        %v2956 = vld [vmem:[#allocation3 + $0x30] sm:$0xff]
        %v2957 = vld [vmem:[#allocation3 + $0x40] sm:$0xff]
        %v2958 = vld [vmem:[#allocation3 + $0x50] sm:$0xff]
        %v2959 = vld [vmem:[#allocation3 + $0x60] sm:$0xff]
        %v2960 = vld [vmem:[#allocation3 + $0x70] sm:$0xff]
        %v2961 = vlaneseq
        %v2962 = vshrl.u32 %v2961, 7
        %v2963 = vsub.s32 1, %v2962
        %v2964 = vrot.slane %v2922, %v2963
        %v2965 = vmul.f32 %v2953, %v2964
        %v2966 = vmul.f32 %v2954, %v2964
        %v2967 = vmul.f32 %v2955, %v2964
        %v2968 = vmul.f32 %v2956, %v2964
        %v2969 = vmul.f32 %v2957, %v2964
        %v2970 = vmul.f32 %v2958, %v2964
        %v2971 = vmul.f32 %v2959, %v2964
        %v2972 = vmul.f32 %v2960, %v2964
        %v2973 = vadd.f32 %v2945, %v2965
        %v2974 = vadd.f32 %v2946, %v2966
        %v2975 = vadd.f32 %v2947, %v2967
        %v2976 = vadd.f32 %v2948, %v2968
        %v2977 = vadd.f32 %v2949, %v2969
        %v2978 = vadd.f32 %v2950, %v2970
        %v2979 = vadd.f32 %v2951, %v2971
        %v2980 = vadd.f32 %v2952, %v2972
        %v2981 = vld [vmem:[#allocation2 + $0x1] sm:$0xff]
        %v2982 = vld [vmem:[#allocation2 + $0x11] sm:$0xff]
        %v2983 = vld [vmem:[#allocation2 + $0x21] sm:$0xff]
        %v2984 = vld [vmem:[#allocation2 + $0x31] sm:$0xff]
        %v2985 = vld [vmem:[#allocation2 + $0x41] sm:$0xff]
        %v2986 = vld [vmem:[#allocation2 + $0x51] sm:$0xff]
        %v2987 = vld [vmem:[#allocation2 + $0x61] sm:$0xff]
        %v2988 = vld [vmem:[#allocation2 + $0x71] sm:$0xff]
        %v2989 = vlaneseq
        %v2990 = vshrl.u32 %v2989, 7
        %v2991 = vsub.s32 2, %v2990
        %v2992 = vrot.slane %v2922, %v2991
        %v2993 = vmul.f32 %v2981, %v2992
        %v2994 = vmul.f32 %v2982, %v2992
        %v2995 = vmul.f32 %v2983, %v2992
        %v2996 = vmul.f32 %v2984, %v2992
        %v2997 = vmul.f32 %v2985, %v2992
        %v2998 = vmul.f32 %v2986, %v2992
        %v2999 = vmul.f32 %v2987, %v2992
        %v3000 = vmul.f32 %v2988, %v2992
        %v3001 = vadd.f32 %v2973, %v2993
        %v3002 = vadd.f32 %v2974, %v2994
        %v3003 = vadd.f32 %v2975, %v2995
        %v3004 = vadd.f32 %v2976, %v2996
        %v3005 = vadd.f32 %v2977, %v2997
        %v3006 = vadd.f32 %v2978, %v2998
        %v3007 = vadd.f32 %v2979, %v2999
        %v3008 = vadd.f32 %v2980, %v3000
        %v3009 = vld [vmem:[#allocation4] sm:$0xff]
        %v3010 = vld [vmem:[#allocation4 + $0x10] sm:$0xff]
        %v3011 = vld [vmem:[#allocation4 + $0x20] sm:$0xff]
        %v3012 = vld [vmem:[#allocation4 + $0x30] sm:$0xff]
        %v3013 = vld [vmem:[#allocation4 + $0x40] sm:$0xff]
        %v3014 = vld [vmem:[#allocation4 + $0x50] sm:$0xff]
        %v3015 = vld [vmem:[#allocation4 + $0x60] sm:$0xff]
        %v3016 = vld [vmem:[#allocation4 + $0x70] sm:$0xff]
        %v3017 = vlaneseq
        %v3018 = vshrl.u32 %v3017, 7
        %v3019 = vsub.s32 0, %v3018
        %v3020 = vrot.slane %v2923, %v3019
        %v3021 = vmul.f32 %v3009, %v3020
        %v3022 = vmul.f32 %v3010, %v3020
        %v3023 = vmul.f32 %v3011, %v3020
        %v3024 = vmul.f32 %v3012, %v3020
        %v3025 = vmul.f32 %v3013, %v3020
        %v3026 = vmul.f32 %v3014, %v3020
        %v3027 = vmul.f32 %v3015, %v3020
        %v3028 = vmul.f32 %v3016, %v3020
        %v3029 = vadd.f32 %v3001, %v3021
        %v3030 = vadd.f32 %v3002, %v3022
        %v3031 = vadd.f32 %v3003, %v3023
        %v3032 = vadd.f32 %v3004, %v3024
        %v3033 = vadd.f32 %v3005, %v3025
        %v3034 = vadd.f32 %v3006, %v3026
        %v3035 = vadd.f32 %v3007, %v3027
        %v3036 = vadd.f32 %v3008, %v3028
        %v3037 = vld [vmem:[#allocation5] sm:$0xff]
        %v3038 = vld [vmem:[#allocation5 + $0x10] sm:$0xff]
        %v3039 = vld [vmem:[#allocation5 + $0x20] sm:$0xff]
        %v3040 = vld [vmem:[#allocation5 + $0x30] sm:$0xff]
        %v3041 = vld [vmem:[#allocation5 + $0x40] sm:$0xff]
        %v3042 = vld [vmem:[#allocation5 + $0x50] sm:$0xff]
        %v3043 = vld [vmem:[#allocation5 + $0x60] sm:$0xff]
        %v3044 = vld [vmem:[#allocation5 + $0x70] sm:$0xff]
        %v3045 = vlaneseq
        %v3046 = vshrl.u32 %v3045, 7
        %v3047 = vsub.s32 1, %v3046
        %v3048 = vrot.slane %v2923, %v3047
        %v3049 = vmul.f32 %v3037, %v3048
        %v3050 = vmul.f32 %v3038, %v3048
        %v3051 = vmul.f32 %v3039, %v3048
        %v3052 = vmul.f32 %v3040, %v3048
        %v3053 = vmul.f32 %v3041, %v3048
        %v3054 = vmul.f32 %v3042, %v3048
        %v3055 = vmul.f32 %v3043, %v3048
        %v3056 = vmul.f32 %v3044, %v3048
        %v3057 = vadd.f32 %v3029, %v3049
        %v3058 = vadd.f32 %v3030, %v3050
        %v3059 = vadd.f32 %v3031, %v3051
        %v3060 = vadd.f32 %v3032, %v3052
        %v3061 = vadd.f32 %v3033, %v3053
        %v3062 = vadd.f32 %v3034, %v3054
        %v3063 = vadd.f32 %v3035, %v3055
        %v3064 = vadd.f32 %v3036, %v3056
        %v3065 = vld [vmem:[#allocation4 + $0x1] sm:$0xff]
        %v3066 = vld [vmem:[#allocation4 + $0x11] sm:$0xff]
        %v3067 = vld [vmem:[#allocation4 + $0x21] sm:$0xff]
        %v3068 = vld [vmem:[#allocation4 + $0x31] sm:$0xff]
        %v3069 = vld [vmem:[#allocation4 + $0x41] sm:$0xff]
        %v3070 = vld [vmem:[#allocation4 + $0x51] sm:$0xff]
        %v3071 = vld [vmem:[#allocation4 + $0x61] sm:$0xff]
        %v3072 = vld [vmem:[#allocation4 + $0x71] sm:$0xff]
        %v3073 = vlaneseq
        %v3074 = vshrl.u32 %v3073, 7
        %v3075 = vsub.s32 2, %v3074
        %v3076 = vrot.slane %v2923, %v3075
        %v3077 = vmul.f32 %v3065, %v3076
        %v3078 = vmul.f32 %v3066, %v3076
        %v3079 = vmul.f32 %v3067, %v3076
        %v3080 = vmul.f32 %v3068, %v3076
        %v3081 = vmul.f32 %v3069, %v3076
        %v3082 = vmul.f32 %v3070, %v3076
        %v3083 = vmul.f32 %v3071, %v3076
        %v3084 = vmul.f32 %v3072, %v3076
        %v3085 = vadd.f32 %v3057, %v3077
        %v3086 = vadd.f32 %v3058, %v3078
        %v3087 = vadd.f32 %v3059, %v3079
        %v3088 = vadd.f32 %v3060, %v3080
        %v3089 = vadd.f32 %v3061, %v3081
        %v3090 = vadd.f32 %v3062, %v3082
        %v3091 = vadd.f32 %v3063, %v3083
        %v3092 = vadd.f32 %v3064, %v3084
        %s3093 = scalar_lea.vmem [#allocation2], 16
        %v3094 = vld [vmem:[%s3093] sm:$0xff]
        %v3095 = vld [vmem:[%s3093 + $0x10] sm:$0xff]
        %v3096 = vld [vmem:[%s3093 + $0x20] sm:$0xff]
        %v3097 = vld [vmem:[%s3093 + $0x30] sm:$0xff]
        %v3098 = vld [vmem:[%s3093 + $0x40] sm:$0xff]
        %v3099 = vld [vmem:[%s3093 + $0x50] sm:$0xff]
        %v3100 = vld [vmem:[%s3093 + $0x60] sm:$0xff]
        %v3101 = vld [vmem:[%s3093 + $0x70] sm:$0xff]
        %v3102 = vlaneseq
        %v3103 = vshrl.u32 %v3102, 7
        %v3104 = vsub.s32 0, %v3103
        %v3105 = vrot.slane %v2924, %v3104
        %v3106 = vmul.f32 %v3094, %v3105
        %v3107 = vmul.f32 %v3095, %v3105
        %v3108 = vmul.f32 %v3096, %v3105
        %v3109 = vmul.f32 %v3097, %v3105
        %v3110 = vmul.f32 %v3098, %v3105
        %v3111 = vmul.f32 %v3099, %v3105
        %v3112 = vmul.f32 %v3100, %v3105
        %v3113 = vmul.f32 %v3101, %v3105
        %v3114 = vadd.f32 %v3085, %v3106
        %v3115 = vadd.f32 %v3086, %v3107
        %v3116 = vadd.f32 %v3087, %v3108
        %v3117 = vadd.f32 %v3088, %v3109
        %v3118 = vadd.f32 %v3089, %v3110
        %v3119 = vadd.f32 %v3090, %v3111
        %v3120 = vadd.f32 %v3091, %v3112
        %v3121 = vadd.f32 %v3092, %v3113
        %s3122 = scalar_lea.vmem [#allocation3], 16
        %v3123 = vld [vmem:[%s3122] sm:$0xff]
        %v3124 = vld [vmem:[%s3122 + $0x10] sm:$0xff]
        %v3125 = vld [vmem:[%s3122 + $0x20] sm:$0xff]
        %v3126 = vld [vmem:[%s3122 + $0x30] sm:$0xff]
        %v3127 = vld [vmem:[%s3122 + $0x40] sm:$0xff]
        %v3128 = vld [vmem:[%s3122 + $0x50] sm:$0xff]
        %v3129 = vld [vmem:[%s3122 + $0x60] sm:$0xff]
        %v3130 = vld [vmem:[%s3122 + $0x70] sm:$0xff]
        %v3131 = vlaneseq
        %v3132 = vshrl.u32 %v3131, 7
        %v3133 = vsub.s32 1, %v3132
        %v3134 = vrot.slane %v2924, %v3133
        %v3135 = vmul.f32 %v3123, %v3134
        %v3136 = vmul.f32 %v3124, %v3134
        %v3137 = vmul.f32 %v3125, %v3134
        %v3138 = vmul.f32 %v3126, %v3134
        %v3139 = vmul.f32 %v3127, %v3134
        %v3140 = vmul.f32 %v3128, %v3134
        %v3141 = vmul.f32 %v3129, %v3134
        %v3142 = vmul.f32 %v3130, %v3134
        %v3143 = vadd.f32 %v3114, %v3135
        %v3144 = vadd.f32 %v3115, %v3136
        %v3145 = vadd.f32 %v3116, %v3137
        %v3146 = vadd.f32 %v3117, %v3138
        %v3147 = vadd.f32 %v3118, %v3139
        %v3148 = vadd.f32 %v3119, %v3140
        %v3149 = vadd.f32 %v3120, %v3141
        %v3150 = vadd.f32 %v3121, %v3142
        %v3151 = vld [vmem:[%s3093 + $0x1] sm:$0xff]
        %v3152 = vld [vmem:[%s3093 + $0x11] sm:$0xff]
        %v3153 = vld [vmem:[%s3093 + $0x21] sm:$0xff]
        %v3154 = vld [vmem:[%s3093 + $0x31] sm:$0xff]
        %v3155 = vld [vmem:[%s3093 + $0x41] sm:$0xff]
        %v3156 = vld [vmem:[%s3093 + $0x51] sm:$0xff]
        %v3157 = vld [vmem:[%s3093 + $0x61] sm:$0xff]
        %v3158 = vld [vmem:[%s3093 + $0x71] sm:$0xff]
        %v3159 = vlaneseq
        %v3160 = vshrl.u32 %v3159, 7
        %v3161 = vsub.s32 2, %v3160
        %v3162 = vrot.slane %v2924, %v3161
        %v3163 = vmul.f32 %v3151, %v3162
        %v3164 = vmul.f32 %v3152, %v3162
        %v3165 = vmul.f32 %v3153, %v3162
        %v3166 = vmul.f32 %v3154, %v3162
        %v3167 = vmul.f32 %v3155, %v3162
        %v3168 = vmul.f32 %v3156, %v3162
        %v3169 = vmul.f32 %v3157, %v3162
        %v3170 = vmul.f32 %v3158, %v3162
        %v3171 = vadd.f32 %v3143, %v3163
        %v3172 = vadd.f32 %v3144, %v3164
        %v3173 = vadd.f32 %v3145, %v3165
        %v3174 = vadd.f32 %v3146, %v3166
        %v3175 = vadd.f32 %v3147, %v3167
        %v3176 = vadd.f32 %v3148, %v3168
        %v3177 = vadd.f32 %v3149, %v3169
        %v3178 = vadd.f32 %v3150, %v3170
        %v3179 = vld [vmem:[%s12] sm:$0x1]
        %v3181 = vlaneseq
        %v3182 = vshrl.u32 %v3181, 7
        %v3183 = vsub.s32 0, %v3182
        %v3184 = vrot.slane %v3179, %v3183
        %v3186 = vmul.f32 %v3171, %v3184
        %v3187 = vmul.f32 %v3172, %v3184
        %v3188 = vmul.f32 %v3173, %v3184
        %v3189 = vmul.f32 %v3174, %v3184
        %v3190 = vmul.f32 %v3175, %v3184
        %v3191 = vmul.f32 %v3176, %v3184
        %v3192 = vmul.f32 %v3177, %v3184
        %v3193 = vmul.f32 %v3178, %v3184
        %v3194 = vld [vmem:[%s13] sm:$0x1]
        %v3196 = vlaneseq
        %v3197 = vshrl.u32 %v3196, 7
        %v3198 = vsub.s32 0, %v3197
        %v3199 = vrot.slane %v3194, %v3198
        %v3201 = vadd.f32 %v3186, %v3199
        %v3202 = vadd.f32 %v3187, %v3199
        %v3203 = vadd.f32 %v3188, %v3199
        %v3204 = vadd.f32 %v3189, %v3199
        %v3205 = vadd.f32 %v3190, %v3199
        %v3206 = vadd.f32 %v3191, %v3199
        %v3207 = vadd.f32 %v3192, %v3199
        %v3208 = vadd.f32 %v3193, %v3199
        %v3209 = vxor.u32 %v3201, 2147483648
        %v3210 = vxor.u32 %v3202, 2147483648
        %v3211 = vxor.u32 %v3203, 2147483648
        %v3212 = vxor.u32 %v3204, 2147483648
        %v3213 = vxor.u32 %v3205, 2147483648
        %v3214 = vxor.u32 %v3206, 2147483648
        %v3215 = vxor.u32 %v3207, 2147483648
        %v3216 = vxor.u32 %v3208, 2147483648
        %v3217 = vmul.f32 %v3209, 1.442695
        %v3218 = vpow.pop %v3217
        %v3219 = vmul.f32 %v3210, 1.442695
        %v3220 = vpow.pop %v3219
        %v3221 = vmul.f32 %v3211, 1.442695
        %v3222 = vpow.pop %v3221
        %v3223 = vmul.f32 %v3212, 1.442695
        %v3224 = vpow.pop %v3223
        %v3225 = vmul.f32 %v3213, 1.442695
        %v3226 = vpow.pop %v3225
        %v3227 = vmul.f32 %v3214, 1.442695
        %v3228 = vpow.pop %v3227
        %v3229 = vmul.f32 %v3215, 1.442695
        %v3230 = vpow.pop %v3229
        %v3231 = vmul.f32 %v3216, 1.442695
        %v3232 = vpow.pop %v3231
        %v3233 = vadd.f32 %v3218, 1.0
        %v3234 = vadd.f32 %v3220, 1.0
        %v3235 = vadd.f32 %v3222, 1.0
        %v3236 = vadd.f32 %v3224, 1.0
        %v3237 = vadd.f32 %v3226, 1.0
        %v3238 = vadd.f32 %v3228, 1.0
        %v3239 = vadd.f32 %v3230, 1.0
        %v3240 = vadd.f32 %v3232, 1.0
        %v3241 = vrcp.pop %v3233
        %v3242 = vmul.f32 1.0, %v3241
        %v3243 = vrcp.pop %v3234
        %v3244 = vmul.f32 1.0, %v3243
        %v3245 = vrcp.pop %v3235
        %v3246 = vmul.f32 1.0, %v3245
        %v3247 = vrcp.pop %v3236
        %v3248 = vmul.f32 1.0, %v3247
        %v3249 = vrcp.pop %v3237
        %v3250 = vmul.f32 1.0, %v3249
        %v3251 = vrcp.pop %v3238
        %v3252 = vmul.f32 1.0, %v3251
        %v3253 = vrcp.pop %v3239
        %v3254 = vmul.f32 1.0, %v3253
        %v3255 = vrcp.pop %v3240
        %v3256 = vmul.f32 1.0, %v3255
        %v3257 = vmul.f32 %v3201, %v3242
        %v3258 = vmul.f32 %v3202, %v3244
        %v3259 = vmul.f32 %v3203, %v3246
        %v3260 = vmul.f32 %v3204, %v3248
        %v3261 = vmul.f32 %v3205, %v3250
        %v3262 = vmul.f32 %v3206, %v3252
        %v3263 = vmul.f32 %v3207, %v3254
        %v3264 = vmul.f32 %v3208, %v3256
        %v3265 = vsel %vm1250, %v3257, 0.0
        %v3266 = vsel %vm1250, %v3258, 0.0
        %v3267 = vadd.f32 %v3265, %v3266
        %v3268 = vsel %vm1250, %v3259, 0.0
        %v3269 = vadd.f32 %v3267, %v3268
        %v3270 = vsel %vm1250, %v3260, 0.0
        %v3271 = vadd.f32 %v3269, %v3270
        %v3272 = vsel %vm1250, %v3261, 0.0
        %v3273 = vadd.f32 %v3271, %v3272
        %v3274 = vsel %vm1250, %v3262, 0.0
        %v3275 = vadd.f32 %v3273, %v3274
        %v3276 = vsel %vm1250, %v3263, 0.0
        %v3277 = vadd.f32 %v3275, %v3276
        %v3278 = vsel %vm1250, %v3264, 0.0
        %v3279 = vadd.f32 %v3277, %v3278
        %v3280 = vrot.slane %v3279, 4
        %v3281 = vadd.f32 %v3279, %v3280
        %v3282 = vrot.slane %v3281, 2
        %v3283 = vadd.f32 %v3281, %v3282
        %v3284 = vrot.slane %v3283, 1
        %v3285 = vadd.f32 %v3283, %v3284
        %v3286 = vmul.f32 %v3285, 0.015625
        %v3287 = vld [vmem:[%s14] sm:$0xff]
        %v3288 = vld [vmem:[%s14 + $0x8] sm:$0xff]
        %v3289 = vld [vmem:[%s15] sm:$0x1]
        %v3291 = vsel %vm1250, %v3286, 0
        %3293 = vmatprep.subr.mxu0 0.0
        %3294 = vmatpush1.msra.mxu0 %v3287
        %3295 = vmatprep.subr.mxu0 0.0
        %3296 = vmatpush1.msra.mxu0 %v3288
        %3297 = vmatprep.subr.mxu0 0.0
        %3298 = vmatpush1.msra.mxu0 0.0
        %3299 = vmatprep.subr.mxu0 0.0
        %3300 = vmatpush1.msra.mxu0 0.0
        %3301 = vmatprep.subr.mxu0 0.0
        %3302 = vmatpush1.msra.mxu0 0.0
        %3303 = vmatprep.subr.mxu0 0.0
        %3304 = vmatpush1.msra.mxu0 0.0
        %3305 = vmatprep.subr.mxu0 0.0
        %3306 = vmatpush1.msra.mxu0 0.0
        %3307 = vmatprep.subr.mxu0 0.0
        %3308 = vmatpush1.msra.mxu0 0.0
        %3309 = vmatprep.subr.mxu0 0.0
        %3310 = vmatpush1.msra.mxu0 0.0
        %3311 = vmatprep.subr.mxu0 0.0
        %3312 = vmatpush1.msra.mxu0 0.0
        %3313 = vmatprep.subr.mxu0 0.0
        %3314 = vmatpush1.msra.mxu0 0.0
        %3315 = vmatprep.subr.mxu0 0.0
        %3316 = vmatpush1.msra.mxu0 0.0
        %3317 = vmatprep.subr.mxu0 0.0
        %3318 = vmatpush1.msra.mxu0 0.0
        %3319 = vmatprep.subr.mxu0 0.0
        %3320 = vmatpush1.msra.mxu0 0.0
        %3321 = vmatprep.subr.mxu0 0.0
        %3322 = vmatpush1.msra.mxu0 0.0
        %3323 = vmatprep.subr.mxu0 0.0
        %3324 = vmatpush1.msra.mxu0 0.0
        %3325 = vmatprep.subr.mxu0 0.0
        %3326 = vmatpush1.msra.mxu0 0.0
        %3327 = vmatprep.subr.mxu0 0.0
        %3328 = vmatpush1.msra.mxu0 0.0
        %3329 = vmatprep.subr.mxu0 0.0
        %3330 = vmatpush1.msra.mxu0 0.0
        %3331 = vmatprep.subr.mxu0 0.0
        %3332 = vmatpush1.msra.mxu0 0.0
        %3333 = vmatprep.subr.mxu0 0.0
        %3334 = vmatpush1.msra.mxu0 0.0
        %3335 = vmatprep.subr.mxu0 0.0
        %3336 = vmatpush1.msra.mxu0 0.0
        %3337 = vmatprep.subr.mxu0 0.0
        %3338 = vmatpush1.msra.mxu0 0.0
        %3339 = vmatprep.subr.mxu0 0.0
        %3340 = vmatpush1.msra.mxu0 0.0
        %3341 = vmatprep.subr.mxu0 0.0
        %3342 = vmatpush1.msra.mxu0 0.0
        %3343 = vmatprep.subr.mxu0 0.0
        %3344 = vmatpush1.msra.mxu0 0.0
        %3345 = vmatprep.subr.mxu0 0.0
        %3346 = vmatpush1.msra.mxu0 0.0
        %3347 = vmatprep.subr.mxu0 0.0
        %3348 = vmatpush1.msra.mxu0 0.0
        %3349 = vmatprep.subr.mxu0 0.0
        %3350 = vmatpush1.msra.mxu0 0.0
        %3351 = vmatprep.subr.mxu0 0.0
        %3352 = vmatpush1.msra.mxu0 0.0
        %3353 = vmatprep.subr.mxu0 0.0
        %3354 = vmatpush1.msra.mxu0 0.0
        %3355 = vmatprep.subr.mxu0 0.0
        %3356 = vmatpush1.msra.mxu0 0.0
        %3357 = vmatprep.mubr.f32.mxu0 0.0
        %3358 = vmatmul.mubr.f32.gmra.mrb[0].mxu0 %v3291
        %v3359 = vpop.f32.mrb[0].mxu0
        %v3360 = vadd.f32 %v3289, %v3359
        %v3361 = vpop.f32.mrb[0].mxu0
        %3362 = vdwg.mxu0
        %v3363 = vxor.u32 %v3360, 2147483648
        %v3364 = vmul.f32 %v3363, 1.442695
        %v3365 = vpow.pop %v3364
        %v3366 = vadd.f32 %v3365, 1.0
        %v3367 = vrcp.pop %v3366
        %v3368 = vmul.f32 1.0, %v3367
        %v3369 = vmul.f32 %v3360, %v3368
        %v3370 = vld [vmem:[%s16] sm:$0x3]
        %v3371 = vld [vmem:[%s17] sm:$0x1]
        %vm3372 = vcmask 15360
        %v3374 = vsel %vm3372, %v3369, 0
        %vm3376 = vcmask 1041408
        %v3378 = vsel %vm3376, %v3370, 0
        %3380 = vmatprep.subr.mxu0 0.0
        %3381 = vmatpush1.msra.mxu0 %v3378
        %3382 = vmatprep.subr.mxu0 0.0
        %3383 = vmatpush1.msra.mxu0 0.0
        %3384 = vmatprep.subr.mxu0 0.0
        %3385 = vmatpush1.msra.mxu0 0.0
        %3386 = vmatprep.subr.mxu0 0.0
        %3387 = vmatpush1.msra.mxu0 0.0
        %3388 = vmatprep.subr.mxu0 0.0
        %3389 = vmatpush1.msra.mxu0 0.0
        %3390 = vmatprep.subr.mxu0 0.0
        %3391 = vmatpush1.msra.mxu0 0.0
        %3392 = vmatprep.subr.mxu0 0.0
        %3393 = vmatpush1.msra.mxu0 0.0
        %3394 = vmatprep.subr.mxu0 0.0
        %3395 = vmatpush1.msra.mxu0 0.0
        %3396 = vmatprep.subr.mxu0 0.0
        %3397 = vmatpush1.msra.mxu0 0.0
        %3398 = vmatprep.subr.mxu0 0.0
        %3399 = vmatpush1.msra.mxu0 0.0
        %3400 = vmatprep.subr.mxu0 0.0
        %3401 = vmatpush1.msra.mxu0 0.0
        %3402 = vmatprep.subr.mxu0 0.0
        %3403 = vmatpush1.msra.mxu0 0.0
        %3404 = vmatprep.subr.mxu0 0.0
        %3405 = vmatpush1.msra.mxu0 0.0
        %3406 = vmatprep.subr.mxu0 0.0
        %3407 = vmatpush1.msra.mxu0 0.0
        %3408 = vmatprep.subr.mxu0 0.0
        %3409 = vmatpush1.msra.mxu0 0.0
        %3410 = vmatprep.subr.mxu0 0.0
        %3411 = vmatpush1.msra.mxu0 0.0
        %3412 = vmatprep.subr.mxu0 0.0
        %3413 = vmatpush1.msra.mxu0 0.0
        %3414 = vmatprep.subr.mxu0 0.0
        %3415 = vmatpush1.msra.mxu0 0.0
        %3416 = vmatprep.subr.mxu0 0.0
        %3417 = vmatpush1.msra.mxu0 0.0
        %3418 = vmatprep.subr.mxu0 0.0
        %3419 = vmatpush1.msra.mxu0 0.0
        %3420 = vmatprep.subr.mxu0 0.0
        %3421 = vmatpush1.msra.mxu0 0.0
        %3422 = vmatprep.subr.mxu0 0.0
        %3423 = vmatpush1.msra.mxu0 0.0
        %3424 = vmatprep.subr.mxu0 0.0
        %3425 = vmatpush1.msra.mxu0 0.0
        %3426 = vmatprep.subr.mxu0 0.0
        %3427 = vmatpush1.msra.mxu0 0.0
        %3428 = vmatprep.subr.mxu0 0.0
        %3429 = vmatpush1.msra.mxu0 0.0
        %3430 = vmatprep.subr.mxu0 0.0
        %3431 = vmatpush1.msra.mxu0 0.0
        %3432 = vmatprep.subr.mxu0 0.0
        %3433 = vmatpush1.msra.mxu0 0.0
        %3434 = vmatprep.subr.mxu0 0.0
        %3435 = vmatpush1.msra.mxu0 0.0
        %3436 = vmatprep.subr.mxu0 0.0
        %3437 = vmatpush1.msra.mxu0 0.0
        %3438 = vmatprep.subr.mxu0 0.0
        %3439 = vmatpush1.msra.mxu0 0.0
        %3440 = vmatprep.subr.mxu0 0.0
        %3441 = vmatpush1.msra.mxu0 0.0
        %3442 = vmatprep.subr.mxu0 0.0
        %3443 = vmatpush1.msra.mxu0 0.0
        %3444 = vmatprep.mubr.f32.mxu0 0.0
        %3445 = vmatmul.mubr.f32.gmra.mrb[0].mxu0 %v3374
        %v3446 = vpop.f32.mrb[0].mxu0
        %v3447 = vadd.f32 %v3371, %v3446
        %v3448 = vpop.f32.mrb[0].mxu0
        %3449 = vdwg.mxu0
        %v3450 = vxor.u32 %v3447, 2147483648
        %v3451 = vmul.f32 %v3450, 1.442695
        %v3452 = vpow.pop %v3451
        %v3453 = vadd.f32 %v3452, 1.0
        %v3454 = vrcp.pop %v3453
        %v3455 = vmul.f32 1.0, %v3454
        %v3456 = vlaneseq
        %v3457 = vshrl.u32 %v3456, 7
        %v3458 = vsub.s32 0, %v3457
        %v3459 = vrot.slane %v3455, %v3458
        %v3460 = vmul.f32 %v3257, %v3459
        %v3461 = vmul.f32 %v3258, %v3459
        %v3462 = vmul.f32 %v3259, %v3459
        %v3463 = vmul.f32 %v3260, %v3459
        %v3464 = vmul.f32 %v3261, %v3459
        %v3465 = vmul.f32 %v3262, %v3459
        %v3466 = vmul.f32 %v3263, %v3459
        %v3467 = vmul.f32 %v3264, %v3459
        %v3468 = vld [vmem:[%s18] sm:$0xff]
        %v3469 = vld [vmem:[%s18 + $0x8] sm:$0xff]
        %v3471 = vsel %vm1250, %v3460, 0
        %v3474 = vsel %vm1250, %v3461, 0
        %v3477 = vsel %vm1250, %v3462, 0
        %v3480 = vsel %vm1250, %v3463, 0
        %v3483 = vsel %vm1250, %v3464, 0
        %v3486 = vsel %vm1250, %v3465, 0
        %v3489 = vsel %vm1250, %v3466, 0
        %v3492 = vsel %vm1250, %v3467, 0
        %3494 = vmatprep.subr.mxu0 0.0
        %3495 = vmatpush1.msra.mxu0 %v3468
        %3496 = vmatprep.subr.mxu0 0.0
        %3497 = vmatpush1.msra.mxu0 %v3469
        %3498 = vmatprep.subr.mxu0 0.0
        %3499 = vmatpush1.msra.mxu0 0.0
        %3500 = vmatprep.subr.mxu0 0.0
        %3501 = vmatpush1.msra.mxu0 0.0
        %3502 = vmatprep.subr.mxu0 0.0
        %3503 = vmatpush1.msra.mxu0 0.0
        %3504 = vmatprep.subr.mxu0 0.0
        %3505 = vmatpush1.msra.mxu0 0.0
        %3506 = vmatprep.subr.mxu0 0.0
        %3507 = vmatpush1.msra.mxu0 0.0
        %3508 = vmatprep.subr.mxu0 0.0
        %3509 = vmatpush1.msra.mxu0 0.0
        %3510 = vmatprep.subr.mxu0 0.0
        %3511 = vmatpush1.msra.mxu0 0.0
        %3512 = vmatprep.subr.mxu0 0.0
        %3513 = vmatpush1.msra.mxu0 0.0
        %3514 = vmatprep.subr.mxu0 0.0
        %3515 = vmatpush1.msra.mxu0 0.0
        %3516 = vmatprep.subr.mxu0 0.0
        %3517 = vmatpush1.msra.mxu0 0.0
        %3518 = vmatprep.subr.mxu0 0.0
        %3519 = vmatpush1.msra.mxu0 0.0
        %3520 = vmatprep.subr.mxu0 0.0
        %3521 = vmatpush1.msra.mxu0 0.0
        %3522 = vmatprep.subr.mxu0 0.0
        %3523 = vmatpush1.msra.mxu0 0.0
        %3524 = vmatprep.subr.mxu0 0.0
        %3525 = vmatpush1.msra.mxu0 0.0
        %3526 = vmatprep.subr.mxu0 0.0
        %3527 = vmatpush1.msra.mxu0 0.0
        %3528 = vmatprep.subr.mxu0 0.0
        %3529 = vmatpush1.msra.mxu0 0.0
        %3530 = vmatprep.subr.mxu0 0.0
        %3531 = vmatpush1.msra.mxu0 0.0
        %3532 = vmatprep.subr.mxu0 0.0
        %3533 = vmatpush1.msra.mxu0 0.0
        %3534 = vmatprep.subr.mxu0 0.0
        %3535 = vmatpush1.msra.mxu0 0.0
        %3536 = vmatprep.subr.mxu0 0.0
        %3537 = vmatpush1.msra.mxu0 0.0
        %3538 = vmatprep.subr.mxu0 0.0
        %3539 = vmatpush1.msra.mxu0 0.0
        %3540 = vmatprep.subr.mxu0 0.0
        %3541 = vmatpush1.msra.mxu0 0.0
        %3542 = vmatprep.subr.mxu0 0.0
        %3543 = vmatpush1.msra.mxu0 0.0
        %3544 = vmatprep.subr.mxu0 0.0
        %3545 = vmatpush1.msra.mxu0 0.0
        %3546 = vmatprep.subr.mxu0 0.0
        %3547 = vmatpush1.msra.mxu0 0.0
        %3548 = vmatprep.subr.mxu0 0.0
        %3549 = vmatpush1.msra.mxu0 0.0
        %3550 = vmatprep.subr.mxu0 0.0
        %3551 = vmatpush1.msra.mxu0 0.0
        %3552 = vmatprep.subr.mxu0 0.0
        %3553 = vmatpush1.msra.mxu0 0.0
        %3554 = vmatprep.subr.mxu0 0.0
        %3555 = vmatpush1.msra.mxu0 0.0
        %3556 = vmatprep.subr.mxu0 0.0
        %3557 = vmatpush1.msra.mxu0 0.0
        %3558 = vmatprep.mubr.f32.mxu0 0.0
        %3559 = vmatmul.mubr.f32.gmra.mrb[0].mxu0 %v3471
        %v3560 = vpop.f32.mrb[0].mxu0
        %v3561 = vadd.f32 0.0, %v3560
        %v3562 = vpop.f32.mrb[0].mxu0
        %3563 = vmatprep.mubr.f32.mxu0 0.0
        %3564 = vmatmul.mubr.f32.gmra.mrb[0].mxu0 %v3474
        %v3565 = vpop.f32.mrb[0].mxu0
        %v3566 = vadd.f32 0.0, %v3565
        %v3567 = vpop.f32.mrb[0].mxu0
        %3568 = vmatprep.mubr.f32.mxu0 0.0
        %3569 = vmatmul.mubr.f32.gmra.mrb[0].mxu0 %v3477
        %v3570 = vpop.f32.mrb[0].mxu0
        %v3571 = vadd.f32 0.0, %v3570
        %v3572 = vpop.f32.mrb[0].mxu0
        %3573 = vmatprep.mubr.f32.mxu0 0.0
        %3574 = vmatmul.mubr.f32.gmra.mrb[0].mxu0 %v3480
        %v3575 = vpop.f32.mrb[0].mxu0
        %v3576 = vadd.f32 0.0, %v3575
        %v3577 = vpop.f32.mrb[0].mxu0
        %3578 = vmatprep.mubr.f32.mxu0 0.0
        %3579 = vmatmul.mubr.f32.gmra.mrb[0].mxu0 %v3483
        %v3580 = vpop.f32.mrb[0].mxu0
        %v3581 = vadd.f32 0.0, %v3580
        %v3582 = vpop.f32.mrb[0].mxu0
        %3583 = vmatprep.mubr.f32.mxu0 0.0
        %3584 = vmatmul.mubr.f32.gmra.mrb[0].mxu0 %v3486
        %v3585 = vpop.f32.mrb[0].mxu0
        %v3586 = vadd.f32 0.0, %v3585
        %v3587 = vpop.f32.mrb[0].mxu0
        %3588 = vmatprep.mubr.f32.mxu0 0.0
        %3589 = vmatmul.mubr.f32.gmra.mrb[0].mxu0 %v3489
        %v3590 = vpop.f32.mrb[0].mxu0
        %v3591 = vadd.f32 0.0, %v3590
        %v3592 = vpop.f32.mrb[0].mxu0
        %3593 = vmatprep.mubr.f32.mxu0 0.0
        %3594 = vmatmul.mubr.f32.gmra.mrb[0].mxu0 %v3492
        %v3595 = vpop.f32.mrb[0].mxu0
        %v3596 = vadd.f32 0.0, %v3595
        %v3597 = vpop.f32.mrb[0].mxu0
        %3598 = vdwg.mxu0
        %v3599 = vld [vmem:[%s19] sm:$0x1]
        %v3601 = vlaneseq
        %v3602 = vshrl.u32 %v3601, 7
        %v3603 = vsub.s32 0, %v3602
        %v3604 = vrot.slane %v3599, %v3603
        %v3606 = vmul.f32 %v3561, %v3604
        %v3607 = vmul.f32 %v3566, %v3604
        %v3608 = vmul.f32 %v3571, %v3604
        %v3609 = vmul.f32 %v3576, %v3604
        %v3610 = vmul.f32 %v3581, %v3604
        %v3611 = vmul.f32 %v3586, %v3604
        %v3612 = vmul.f32 %v3591, %v3604
        %v3613 = vmul.f32 %v3596, %v3604
        %v3614 = vld [vmem:[%s20] sm:$0x1]
        %v3616 = vlaneseq
        %v3617 = vshrl.u32 %v3616, 7
        %v3618 = vsub.s32 0, %v3617
        %v3619 = vrot.slane %v3614, %v3618
        %v3621 = vadd.f32 %v3606, %v3619
        %v3622 = vadd.f32 %v3607, %v3619
        %v3623 = vadd.f32 %v3608, %v3619
        %v3624 = vadd.f32 %v3609, %v3619
        %v3625 = vadd.f32 %v3610, %v3619
        %v3626 = vadd.f32 %v3611, %v3619
        %v3627 = vadd.f32 %v3612, %v3619
        %v3628 = vadd.f32 %v3613, %v3619
        %vm3629 = vcmask 64512
        %3630 = vst.msk [vmem:[%s694] sm:$0xff] %vm3629, %v3621
        %3631 = vst.msk [vmem:[%s694 + $0x8] sm:$0xff] %vm3629, %v3622
        %3632 = vst.msk [vmem:[%s694 + $0x10] sm:$0xff] %vm3629, %v3623
        %3633 = vst.msk [vmem:[%s694 + $0x18] sm:$0xff] %vm3629, %v3624
        %3634 = vst.msk [vmem:[%s694 + $0x20] sm:$0xff] %vm3629, %v3625
        %3635 = vst.msk [vmem:[%s694 + $0x28] sm:$0xff] %vm3629, %v3626
        %3636 = vst.msk [vmem:[%s694 + $0x30] sm:$0xff] %vm3629, %v3627
        %3637 = vst.msk [vmem:[%s694 + $0x38] sm:$0xff] %vm3629, %v3628
        %s3638 = sand.u32 %s504, 1
        %s3639 = scalar_lea.sflag [#allocation7], %s3638
        %s3640 = sand.u32 %s504, 1
        %s3641 = smul.addr %s3640, 64
        %s3642 = scalar_lea.vmem [#allocation6], %s3641
        // Predicated region
        $region105: #{tpu_custom_call.1} parent=103 // pred_check
          %p3643 = pneg %p514
        $region106: #{tpu_custom_call.1} parent=103 // pred_check_branch
          %3645 = sbr.rel (%p3643) target = $region108
        $region107: #{tpu_custom_call.1} parent=103 // pred_region
          %s3647 = ssub.s32 1024, 1024
          %3648 = vsyncadd %s3639, %s3647
          %s3649 = smul.addr %s35, 8
          %s3650 = smul.addr %s3649, 128
          %s3651 = scalar_lea.hbm %s21, %s3650
          %s3652 = sshll.u32 %s3642, 4
          %s3653 = int_to_ptr.vmem [resolvable:$true] %s3652
          %3658 = dma.vmem_to_hbm [thread:$0]  %s3653, 1024, %s3651, %s3639, 128, 128, 8
        $region108: #{tpu_custom_call.1} parent=103 // pred_fallthru
          _
      $region104: #{tpu_custom_call.1} parent=5 // pred_fallthru
        _
      %p3659 = scmp.le.s32.totalorder 2, %s30
      // Predicated region
      $region109: #{tpu_custom_call.1} parent=5 // pred_check
        %p3660 = pneg %p3659
      $region110: #{tpu_custom_call.1} parent=5 // pred_check_branch
        %3662 = sbr.rel (%p3660) target = $region112
      $region111: #{tpu_custom_call.1} parent=5 // pred_region
        %s3663 = ssub.s32 %s30, 2
        // Predicated region
        $region113: #{tpu_custom_call.1} parent=111 // pred_check
          %p3664 = pneg %p520
        $region114: #{tpu_custom_call.1} parent=111 // pred_check_branch
          %3666 = sbr.rel (%p3664) target = $region116
        $region115: #{tpu_custom_call.1} parent=111 // pred_region
          %s3667 = sand.u32 %s505, 1
          %s3668 = scalar_lea.sflag [#allocation7], %s3667
          %s3669 = sand.u32 %s505, 1
          %s3670 = smul.addr %s3669, 64
          %s3671 = scalar_lea.vmem [#allocation6], %s3670
          %3672 = dma.done %s3668, 1024
        $region116: #{tpu_custom_call.1} parent=111 // pred_fallthru
          _
      $region112: #{tpu_custom_call.1} parent=5 // pred_fallthru
        _
    $region6: #{tpu_custom_call.1} parent=1 // loop_footer
      %s34 = sadd.s32 1, %s30
    $region7: #{tpu_custom_call.1} parent=1 // loop_footer_branch
      %29 = sbr.rel target = $region3
    $region8: #{tpu_custom_call.1} parent=1 // loop_exit
      _
    %3673 = vsyncpa [#allocation7], 1
    %s3674 = scalar_lea.sflag [#allocation7], 1
    %3675 = vsyncpa %s3674, 1

</llo_original>
